<compile_context>
chip_gen: v7x
topology: tpu7x:2x2x1
jax: 0.10.0
libtpu: 0.0.40
codegen_flags: <defaults>
</compile_context>

<pallas_src>
import functools
import math

import jax
import jax.numpy as jnp
from jax.experimental import pallas as pl
from jax.experimental.pallas import tpu as pltpu

# ----------------------------- configuration --------------------------------
B = 2            # batch
T = 8            # frames per sequence
IN_SIZE = 24     # input feature dim
N_UNITS = 32     # transformer / attractor hidden dim
E_UNITS = 64     # positionwise FF inner dim
N_HEADS = 4
N_LAYERS = 2
N_SPEAKERS = [2, 3]
S_PAD = 128      # lane-dense padding of the ys speaker axis (sliced outside)


# ------------------------- fused forward kernel ------------------------------
def fused_forward_kernel(
    xs_ref,        # (1, T, F)      per-batch block
    w_in_ref,      # (F, D)
    wqkv_ref,      # (L, D, 3D)     scale folded into Q columns
    wo_ref,        # (L, D, D)
    w1_ref,        # (L, D, E)
    w2_ref,        # (L, E, D)
    vecl_ref,      # (L, 8, 128)    per-layer LN params / biases (packed rows)
    enc_wih_ref,   # (D, 4D)
    enc_whh_ref,   # (D, 4D)
    dec_whh_ref,   # (D, 4D)
    vecg_ref,      # (8, 128)       global vectors (packed rows)
    labels_ref,    # (1, S1, 1)     per-batch block
    ys_ref,        # OUT (1, T, S_PAD)
    loss_ref,      # OUT (1, 1, 1)  per-batch mean BCE
    *, n_heads, n_layers, seq_len, d_model, e_units, max_n, s_pad):
  Tx, D, E, H = seq_len, d_model, e_units, n_heads
  dk = D // H
  s1 = max_n + 1
  f32 = jnp.float32

  def ln(x, g, b):
    mu = jnp.mean(x, axis=-1, keepdims=True)
    var = jnp.mean(jnp.square(x - mu), axis=-1, keepdims=True)
    return (x - mu) * jax.lax.rsqrt(var + 1e-5) * g + b

  # ---- unpack the global vector slab -------------------------------------
  vg = vecg_ref[...]                           # (8, 128)
  b_in = vg[0:1, 0:D]
  g_out = vg[1:2, 0:D]
  b_out = vg[2:3, 0:D]
  enc_b = vg[3:4, 0:4 * D]
  dec_b = vg[4:5, 0:4 * D]
  wcnt = vg[5:6, 0:D]
  bcnt = vg[6:7, 0:1]

  # ---------------- TransformerEncoder (one batch element) -----------------
  x = xs_ref[0]                                # (T, F)
  e = jnp.dot(x, w_in_ref[...], preferred_element_type=f32) + b_in   # (T, D)

  for i in range(n_layers):
    vl = vecl_ref[i]                           # (8, 128)
    ln1g, ln1b = vl[0:1, 0:D], vl[1:2, 0:D]
    bqkv = vl[2:3, 0:3 * D]
    bo = vl[3:4, 0:D]
    ln2g, ln2b = vl[4:5, 0:D], vl[5:6, 0:D]
    b1 = vl[6:7, 0:E]
    b2 = vl[7:8, 0:D]

    e1 = ln(e, ln1g, ln1b)
    # fused Q/K/V projection (1/sqrt(dk) already folded into Q weight/bias)
    qkv = jnp.dot(e1, wqkv_ref[i], preferred_element_type=f32) + bqkv  # (T,3D)
    q = qkv[:, 0:D].reshape(Tx, H, dk)
    k = qkv[:, D:2 * D].reshape(Tx, H, dk)
    v = qkv[:, 2 * D:3 * D].reshape(Tx, H, dk)

    # batched over heads: one dot_general pair, no per-head slicing/concat
    sc = jnp.einsum("qhd,khd->hqk", q, k, preferred_element_type=f32)
    sc = sc - jnp.max(sc, axis=-1, keepdims=True)
    p = jnp.exp(sc)
    p = p * pl.reciprocal(jnp.sum(p, axis=-1, keepdims=True), approx=True)
    ctx = jnp.einsum("hqk,khd->qhd", p, v,
                     preferred_element_type=f32).reshape(Tx, D)

    s = jnp.dot(ctx, wo_ref[i], preferred_element_type=f32) + bo
    e2 = e1 + s                                # dropout = identity
    e3 = ln(e2, ln2g, ln2b)
    hff = jnp.maximum(
        jnp.dot(e3, w1_ref[i], preferred_element_type=f32) + b1, 0.0)
    e = e3 + jnp.dot(hff, w2_ref[i], preferred_element_type=f32) + b2

  emb = ln(e, g_out, b_out)                    # (T, D)

  def lstm_cell(gates, c_prev):
    i_g = jax.nn.sigmoid(gates[:, 0:D])
    f_g = jax.nn.sigmoid(gates[:, D:2 * D])
    g_g = jnp.tanh(gates[:, 2 * D:3 * D])
    o_g = jax.nn.sigmoid(gates[:, 3 * D:4 * D])
    c_new = f_g * c_prev + i_g * g_g
    return o_g * jnp.tanh(c_new), c_new

  # ---------------- EDA encoder LSTM (only final h, c needed) --------------
  # hoisted input projection, kept as a register value (no VMEM scratch).
  xw = jnp.dot(emb, enc_wih_ref[...], preferred_element_type=f32) + enc_b
  whh_e = enc_whh_ref[...]
  h = jnp.zeros((1, D), f32)
  c = jnp.zeros((1, D), f32)
  for t in range(Tx):
    gates = xw[t:t + 1, :] + jnp.dot(h, whh_e, preferred_element_type=f32)
    h, c = lstm_cell(gates, c)

  # ---------------- EDA decoder LSTM (zero input => no x@wih work) ---------
  whh_d = dec_whh_ref[...]
  hs = []
  for _ in range(s1):
    gates = jnp.dot(h, whh_d, preferred_element_type=f32) + dec_b
    h, c = lstm_cell(gates, c)
    hs.append(h)

  # ---------------- attractor existence BCE-with-logits --------------------
  # counter logits batched AFTER the recurrence: VPU multiply + lane reduce.
  hs_all = jnp.concatenate(hs, axis=0)                       # (S1, D)
  logit = jnp.sum(hs_all * wcnt, axis=-1, keepdims=True) + bcnt   # (S1, 1)
  y = labels_ref[0]                                          # (S1, 1)
  per = (jnp.maximum(logit, 0.0) - logit * y
         + jnp.log(1.0 + jnp.exp(-jnp.abs(logit))))
  loss_ref[...] = jnp.mean(per).reshape(1, 1, 1)

  # ---------------- ys = emb @ attractors^T (lane-dense slab) --------------
  # speaker axis zero-padded to 128 BEFORE the contraction: one unmasked vst.
  att_pad = jnp.concatenate(
      hs[:max_n] + [jnp.zeros((s_pad - max_n, D), f32)], axis=0)  # (S_PAD, D)
  ys = jax.lax.dot_general(emb, att_pad, (((1,), (1,)), ((), ())),
                           preferred_element_type=f32)            # (T, S_PAD)
  ys_ref[...] = ys.reshape(1, Tx, s_pad)


# ------------------------------ parameters ------------------------------------
def init_params(key):
  keys = jax.random.split(key, 64)
  kit = iter(keys)

  def w(shape, scale=0.1):
    return scale * jax.random.normal(next(kit), shape, jnp.float32)

  z = lambda *s: jnp.zeros(s, jnp.float32)
  o = lambda *s: jnp.ones(s, jnp.float32)

  layers = []
  for _ in range(N_LAYERS):
    layers.append(dict(
        ln1_g=o(N_UNITS), ln1_b=z(N_UNITS),
        wq=w((N_UNITS, N_UNITS)), bq=z(N_UNITS),
        wk=w((N_UNITS, N_UNITS)), bk=z(N_UNITS),
        wv=w((N_UNITS, N_UNITS)), bv=z(N_UNITS),
        wo=w((N_UNITS, N_UNITS)), bo=z(N_UNITS),
        ln2_g=o(N_UNITS), ln2_b=z(N_UNITS),
        w1=w((N_UNITS, E_UNITS)), b1=z(E_UNITS),
        w2=w((E_UNITS, N_UNITS)), b2=z(N_UNITS)))

  return dict(
      layers=layers,
      w_in=w((IN_SIZE, N_UNITS)), b_in=z(N_UNITS),
      g_out=o(N_UNITS), b_out=z(N_UNITS),
      # LSTMs: (in, 4*hidden), gate order [i, f, g, o], combined bias.
      enc_wih=w((N_UNITS, 4 * N_UNITS)), enc_whh=w((N_UNITS, 4 * N_UNITS)),
      enc_b=z(4 * N_UNITS),
      dec_wih=w((N_UNITS, 4 * N_UNITS)),   # unused: decoder input is all zeros
      dec_whh=w((N_UNITS, 4 * N_UNITS)), dec_b=z(4 * N_UNITS),
      w_counter=w((N_UNITS, 1)), b_counter=z(1))


def pack_params(p):
  """Stack per-layer weights, fuse QKV (with Q scale folded in), and pack all
  tiny bias/LN vectors into two (., 8, 128) slabs."""
  scale = 1.0 / math.sqrt(N_UNITS // N_HEADS)

  def row(v):
    v = jnp.reshape(v, (-1,))
    return jnp.pad(v, (0, 128 - v.shape[0]))[None, :]

  wqkv, vec_l = [], []
  for l in p["layers"]:
    wqkv.append(jnp.concatenate([l["wq"] * scale, l["wk"], l["wv"]], axis=1))
    bqkv = jnp.concatenate([l["bq"] * scale, l["bk"], l["bv"]])
    vec_l.append(jnp.concatenate([
        row(l["ln1_g"]), row(l["ln1_b"]), row(bqkv), row(l["bo"]),
        row(l["ln2_g"]), row(l["ln2_b"]), row(l["b1"]), row(l["b2"])], axis=0))

  vec_g = jnp.concatenate([
      row(p["b_in"]), row(p["g_out"]), row(p["b_out"]),
      row(p["enc_b"]), row(p["dec_b"]),
      row(p["w_counter"]), row(p["b_counter"]),
      row(jnp.zeros((128,), jnp.float32))], axis=0)

  return dict(
      w_in=p["w_in"],
      wqkv=jnp.stack(wqkv),
      wo=jnp.stack([l["wo"] for l in p["layers"]]),
      w1=jnp.stack([l["w1"] for l in p["layers"]]),
      w2=jnp.stack([l["w2"] for l in p["layers"]]),
      vec_l=jnp.stack(vec_l),
      enc_wih=p["enc_wih"], enc_whh=p["enc_whh"],
      dec_whh=p["dec_whh"],
      vec_g=vec_g)


# -------------------------------- forward -------------------------------------
def transformer_eda_forward(xs, packed, n_speakers):
  Bx, Tx, F = xs.shape
  D, E, L, H = N_UNITS, E_UNITS, N_LAYERS, N_HEADS
  max_n = max(n_speakers)
  s1 = max_n + 1
  assert s1 <= S_PAD

  # same label construction as the reference EDA (max_n+1 per sample)
  labels = jnp.asarray([[1.0] * n + [0.0] * (s1 - n) for n in n_speakers],
                       jnp.float32).reshape(Bx, s1, 1)

  inputs = (xs, packed["w_in"], packed["wqkv"], packed["wo"], packed["w1"],
            packed["w2"], packed["vec_l"], packed["enc_wih"],
            packed["enc_whh"], packed["dec_whh"], packed["vec_g"], labels)

  def resident(arr):
    nd = arr.ndim
    return pl.BlockSpec(arr.shape, lambda b, _nd=nd: (0,) * _nd)

  in_specs = [
      pl.BlockSpec((1, Tx, F), lambda b: (b, 0, 0)),        # xs, per batch
      resident(packed["w_in"]),
      resident(packed["wqkv"]),
      resident(packed["wo"]),
      resident(packed["w1"]),
      resident(packed["w2"]),
      resident(packed["vec_l"]),
      resident(packed["enc_wih"]),
      resident(packed["enc_whh"]),
      resident(packed["dec_whh"]),
      resident(packed["vec_g"]),
      pl.BlockSpec((1, s1, 1), lambda b: (b, 0, 0)),        # labels, per batch
  ]

  kernel = functools.partial(
      fused_forward_kernel,
      n_heads=H, n_layers=L, seq_len=Tx, d_model=D, e_units=E,
      max_n=max_n, s_pad=S_PAD)

  # rough cost estimate so XLA schedules around the custom call
  dk = D // H
  per_layer = (2 * Tx * D * 3 * D + 4 * H * Tx * Tx * dk
               + 2 * Tx * D * D + 4 * Tx * D * E)
  flops = Bx * (2 * Tx * F * D + L * per_layer
                + 4 * Tx * D * 4 * D + 2 * s1 * D * 4 * D
                + 2 * Tx * D * S_PAD)
  bytes_accessed = (sum(int(a.size) * 4 for a in inputs)
                    + Bx * Tx * S_PAD * 4 + Bx * 4)
  cost = pl.CostEstimate(flops=int(flops),
                         transcendentals=int(Bx * (L * H * Tx * Tx
                                                   + 8 * (Tx + s1) * D)),
                         bytes_accessed=int(bytes_accessed))

  ys_pad, loss_b = pl.pallas_call(
      kernel,
      grid=(Bx,),
      out_shape=(jax.ShapeDtypeStruct((Bx, Tx, S_PAD), jnp.float32),
                 jax.ShapeDtypeStruct((Bx, 1, 1), jnp.float32)),
      in_specs=in_specs,
      out_specs=(pl.BlockSpec((1, Tx, S_PAD), lambda b: (b, 0, 0)),
                 pl.BlockSpec((1, 1, 1), lambda b: (b, 0, 0))),
      compiler_params=pltpu.CompilerParams(
          dimension_semantics=("parallel",)),
      cost_estimate=cost,
  )(*inputs)

  ys = ys_pad[:, :, :max_n]        # slice lane-dense slab to (B, T, max_n)
  # per-batch means over equal counts (s1) -> global mean == reference BCE mean
  loss = jnp.mean(loss_b)
  return ys, loss


# --------------------------------- main ----------------------------------------
if __name__ == "__main__":
  key = jax.random.PRNGKey(0)
  pkey, xkey = jax.random.split(key)
  params = init_params(pkey)
  packed = pack_params(params)
  xs = jax.random.normal(xkey, (B, T, IN_SIZE), jnp.float32)

  ys, attractor_loss = transformer_eda_forward(xs, packed, N_SPEAKERS)
  jax.block_until_ready((ys, attractor_loss))

  assert ys.shape == (B, T, max(N_SPEAKERS)), ys.shape
  assert ys.dtype == jnp.float32
  assert attractor_loss.shape == ()
  assert bool(jnp.isfinite(attractor_loss)) and bool(jnp.all(jnp.isfinite(ys)))
  print("KERNEL_OK")
</pallas_src>

<mosaic_0001>
module attributes {stable_mosaic.version = 11 : i64} {
  func.func @fused_forward_kernel(%arg0: i32, %arg1: memref<1x8x24xf32, #tpu.memory_space<vmem>>, %arg2: memref<24x32xf32, #tpu.memory_space<vmem>>, %arg3: memref<2x32x96xf32, #tpu.memory_space<vmem>>, %arg4: memref<2x32x32xf32, #tpu.memory_space<vmem>>, %arg5: memref<2x32x64xf32, #tpu.memory_space<vmem>>, %arg6: memref<2x64x32xf32, #tpu.memory_space<vmem>>, %arg7: memref<2x8x128xf32, #tpu.memory_space<vmem>>, %arg8: memref<32x128xf32, #tpu.memory_space<vmem>>, %arg9: memref<32x128xf32, #tpu.memory_space<vmem>>, %arg10: memref<32x128xf32, #tpu.memory_space<vmem>>, %arg11: memref<8x128xf32, #tpu.memory_space<vmem>>, %arg12: memref<1x4x1xf32, #tpu.memory_space<vmem>>, %arg13: memref<1x8x128xf32, #tpu.memory_space<vmem>>, %arg14: memref<1x1x1xf32, #tpu.memory_space<vmem>>) attributes {dimension_semantics = [#tpu.dimension_semantics<parallel>], iteration_bounds = array<i64: 2>, scalar_prefetch = 0 : i64, scratch_operands = 0 : i64, tpu.core_type = #tpu.core_type<tc>, window_params = [{transform_indices = @transform_0, window_bounds = array<i64: 1, 8, 24>}, {pipeline_mode = #tpu.pipeline_mode<synchronous>, transform_indices = @transform_1, window_bounds = array<i64: 24, 32>}, {pipeline_mode = #tpu.pipeline_mode<synchronous>, transform_indices = @transform_2, window_bounds = array<i64: 2, 32, 96>}, {pipeline_mode = #tpu.pipeline_mode<synchronous>, transform_indices = @transform_3, window_bounds = array<i64: 2, 32, 32>}, {pipeline_mode = #tpu.pipeline_mode<synchronous>, transform_indices = @transform_4, window_bounds = array<i64: 2, 32, 64>}, {pipeline_mode = #tpu.pipeline_mode<synchronous>, transform_indices = @transform_5, window_bounds = array<i64: 2, 64, 32>}, {pipeline_mode = #tpu.pipeline_mode<synchronous>, transform_indices = @transform_6, window_bounds = array<i64: 2, 8, 128>}, {pipeline_mode = #tpu.pipeline_mode<synchronous>, transform_indices = @transform_7, window_bounds = array<i64: 32, 128>}, {pipeline_mode = #tpu.pipeline_mode<synchronous>, transform_indices = @transform_8, window_bounds = array<i64: 32, 128>}, {pipeline_mode = #tpu.pipeline_mode<synchronous>, transform_indices = @transform_9, window_bounds = array<i64: 32, 128>}, {pipeline_mode = #tpu.pipeline_mode<synchronous>, transform_indices = @transform_10, window_bounds = array<i64: 8, 128>}, {transform_indices = @transform_11, window_bounds = array<i64: 1, 4, 1>}, {transform_indices = @transform_12, window_bounds = array<i64: 1, 8, 128>}, {transform_indices = @transform_13, window_bounds = array<i64: 1, 1, 1>}]} {
    %c0 = arith.constant 0 : index
    %c0_0 = arith.constant 0 : index
    %0 = vector.load %arg11[%c0, %c0_0] : memref<8x128xf32, #tpu.memory_space<vmem>>, vector<8x128xf32>
    %1 = vector.extract_strided_slice %0 {offsets = [0, 0], sizes = [1, 32], strides = [1, 1]} : vector<8x128xf32> to vector<1x32xf32>
    %2 = vector.extract_strided_slice %0 {offsets = [1, 0], sizes = [1, 32], strides = [1, 1]} : vector<8x128xf32> to vector<1x32xf32>
    %3 = vector.extract_strided_slice %0 {offsets = [2, 0], sizes = [1, 32], strides = [1, 1]} : vector<8x128xf32> to vector<1x32xf32>
    %4 = vector.extract_strided_slice %0 {offsets = [3, 0], sizes = [1, 128], strides = [1, 1]} : vector<8x128xf32> to vector<1x128xf32>
    %5 = vector.extract_strided_slice %0 {offsets = [4, 0], sizes = [1, 128], strides = [1, 1]} : vector<8x128xf32> to vector<1x128xf32>
    %6 = vector.extract_strided_slice %0 {offsets = [5, 0], sizes = [1, 32], strides = [1, 1]} : vector<8x128xf32> to vector<1x32xf32>
    %7 = vector.extract_strided_slice %0 {offsets = [6, 0], sizes = [1, 1], strides = [1, 1]} : vector<8x128xf32> to vector<1x1xf32>
    %c0_1 = arith.constant 0 : index
    %c0_2 = arith.constant 0 : index
    %c0_3 = arith.constant 0 : index
    %8 = vector.load %arg1[%c0_1, %c0_2, %c0_3] : memref<1x8x24xf32, #tpu.memory_space<vmem>>, vector<1x8x24xf32>
    %9 = vector.shape_cast %8 : vector<1x8x24xf32> to vector<8x24xf32>
    %c0_4 = arith.constant 0 : index
    %c0_5 = arith.constant 0 : index
    %10 = vector.load %arg2[%c0_4, %c0_5] : memref<24x32xf32, #tpu.memory_space<vmem>>, vector<24x32xf32>
    %cst = arith.constant dense<0.000000e+00> : vector<8x32xf32>
    %11 = tpu.matmul %9, %10, %cst {dimension_numbers = #tpu.dot_dimension_numbers<[1], [0], [0], [1], [0, 0, 1, 1], [], []>} : vector<8x24xf32>, vector<24x32xf32>, vector<8x32xf32> -> vector<8x32xf32>
    %12 = vector.broadcast %1 : vector<1x32xf32> to vector<8x32xf32>
    %13 = arith.addf %11, %12 : vector<8x32xf32>
    %c0_6 = arith.constant 0 : index
    %c0_7 = arith.constant 0 : index
    %c0_8 = arith.constant 0 : index
    %14 = vector.load %arg7[%c0_6, %c0_7, %c0_8] : memref<2x8x128xf32, #tpu.memory_space<vmem>>, vector<1x8x128xf32>
    %15 = vector.shape_cast %14 : vector<1x8x128xf32> to vector<8x128xf32>
    %16 = vector.extract_strided_slice %15 {offsets = [0, 0], sizes = [1, 32], strides = [1, 1]} : vector<8x128xf32> to vector<1x32xf32>
    %17 = vector.extract_strided_slice %15 {offsets = [1, 0], sizes = [1, 32], strides = [1, 1]} : vector<8x128xf32> to vector<1x32xf32>
    %18 = vector.extract_strided_slice %15 {offsets = [2, 0], sizes = [1, 96], strides = [1, 1]} : vector<8x128xf32> to vector<1x96xf32>
    %19 = vector.extract_strided_slice %15 {offsets = [3, 0], sizes = [1, 32], strides = [1, 1]} : vector<8x128xf32> to vector<1x32xf32>
    %20 = vector.extract_strided_slice %15 {offsets = [4, 0], sizes = [1, 32], strides = [1, 1]} : vector<8x128xf32> to vector<1x32xf32>
    %21 = vector.extract_strided_slice %15 {offsets = [5, 0], sizes = [1, 32], strides = [1, 1]} : vector<8x128xf32> to vector<1x32xf32>
    %22 = vector.extract_strided_slice %15 {offsets = [6, 0], sizes = [1, 64], strides = [1, 1]} : vector<8x128xf32> to vector<1x64xf32>
    %23 = vector.extract_strided_slice %15 {offsets = [7, 0], sizes = [1, 32], strides = [1, 1]} : vector<8x128xf32> to vector<1x32xf32>
    %cst_9 = arith.constant dense<0.000000e+00> : vector<8xf32>
    %24 = vector.multi_reduction <add>, %13, %cst_9 [1] : vector<8x32xf32> to vector<8xf32>
    %25 = vector.shape_cast %24 : vector<8xf32> to vector<8x1xf32>
    %cst_10 = arith.constant 3.200000e+01 : f32
    %26 = vector.broadcast %cst_10 : f32 to vector<8x1xf32>
    %27 = arith.divf %25, %26 : vector<8x1xf32>
    %28 = vector.broadcast %27 : vector<8x1xf32> to vector<8x32xf32>
    %29 = arith.subf %13, %28 : vector<8x32xf32>
    %30 = arith.mulf %29, %29 : vector<8x32xf32>
    %cst_11 = arith.constant dense<0.000000e+00> : vector<8xf32>
    %31 = vector.multi_reduction <add>, %30, %cst_11 [1] : vector<8x32xf32> to vector<8xf32>
    %32 = vector.shape_cast %31 : vector<8xf32> to vector<8x1xf32>
    %cst_12 = arith.constant 3.200000e+01 : f32
    %33 = vector.broadcast %cst_12 : f32 to vector<8x1xf32>
    %34 = arith.divf %32, %33 : vector<8x1xf32>
    %35 = vector.broadcast %27 : vector<8x1xf32> to vector<8x32xf32>
    %36 = arith.subf %13, %35 : vector<8x32xf32>
    %cst_13 = arith.constant 9.99999974E-6 : f32
    %37 = vector.broadcast %cst_13 : f32 to vector<8x1xf32>
    %38 = arith.addf %34, %37 : vector<8x1xf32>
    %39 = math.rsqrt %38 : vector<8x1xf32>
    %40 = vector.broadcast %39 : vector<8x1xf32> to vector<8x32xf32>
    %41 = arith.mulf %36, %40 : vector<8x32xf32>
    %42 = vector.broadcast %16 : vector<1x32xf32> to vector<8x32xf32>
    %43 = arith.mulf %41, %42 : vector<8x32xf32>
    %44 = vector.broadcast %17 : vector<1x32xf32> to vector<8x32xf32>
    %45 = arith.addf %43, %44 : vector<8x32xf32>
    %c0_14 = arith.constant 0 : index
    %c0_15 = arith.constant 0 : index
    %c0_16 = arith.constant 0 : index
    %46 = vector.load %arg3[%c0_14, %c0_15, %c0_16] : memref<2x32x96xf32, #tpu.memory_space<vmem>>, vector<1x32x96xf32>
    %47 = vector.shape_cast %46 : vector<1x32x96xf32> to vector<32x96xf32>
    %cst_17 = arith.constant dense<0.000000e+00> : vector<8x96xf32>
    %48 = tpu.matmul %45, %47, %cst_17 {dimension_numbers = #tpu.dot_dimension_numbers<[1], [0], [0], [1], [0, 0, 1, 1], [], []>} : vector<8x32xf32>, vector<32x96xf32>, vector<8x96xf32> -> vector<8x96xf32>
    %49 = vector.broadcast %18 : vector<1x96xf32> to vector<8x96xf32>
    %50 = arith.addf %48, %49 : vector<8x96xf32>
    %51 = vector.extract_strided_slice %50 {offsets = [0, 0], sizes = [8, 32], strides = [1, 1]} : vector<8x96xf32> to vector<8x32xf32>
    %52 = vector.shape_cast %51 : vector<8x32xf32> to vector<8x4x8xf32>
    %53 = vector.extract_strided_slice %50 {offsets = [0, 32], sizes = [8, 32], strides = [1, 1]} : vector<8x96xf32> to vector<8x32xf32>
    %54 = vector.shape_cast %53 : vector<8x32xf32> to vector<8x4x8xf32>
    %55 = vector.extract_strided_slice %50 {offsets = [0, 64], sizes = [8, 32], strides = [1, 1]} : vector<8x96xf32> to vector<8x32xf32>
    %56 = vector.shape_cast %55 : vector<8x32xf32> to vector<8x4x8xf32>
    "tpu.trace_start"() <{level = 10 : i32, message = "qhd,khd->hqk"}> : () -> ()
    %cst_18 = arith.constant dense<0.000000e+00> : vector<4x8x8xf32>
    %57 = tpu.matmul %52, %54, %cst_18 {dimension_numbers = #tpu.dot_dimension_numbers<[2], [2], [0], [0], [0, 1, 0, 0, 1, 0], [1], [1]>} : vector<8x4x8xf32>, vector<8x4x8xf32>, vector<4x8x8xf32> -> vector<4x8x8xf32>
    "tpu.trace_stop"() : () -> ()
    %cst_19 = arith.constant dense<0xFF800000> : vector<4x8xf32>
    %58 = vector.multi_reduction <maximumf>, %57, %cst_19 [2] : vector<4x8x8xf32> to vector<4x8xf32>
    %59 = vector.shape_cast %58 : vector<4x8xf32> to vector<4x8x1xf32>
    %60 = vector.broadcast %59 : vector<4x8x1xf32> to vector<4x8x8xf32>
    %61 = arith.subf %57, %60 : vector<4x8x8xf32>
    %62 = math.exp %61 : vector<4x8x8xf32>
    %cst_20 = arith.constant dense<0.000000e+00> : vector<4x8xf32>
    %63 = vector.multi_reduction <add>, %62, %cst_20 [2] : vector<4x8x8xf32> to vector<4x8xf32>
    %64 = vector.shape_cast %63 : vector<4x8xf32> to vector<4x8x1xf32>
    %65 = tpu.reciprocal %64 {approx = true} : vector<4x8x1xf32> -> vector<4x8x1xf32>
    %66 = vector.broadcast %65 : vector<4x8x1xf32> to vector<4x8x8xf32>
    %67 = arith.mulf %62, %66 : vector<4x8x8xf32>
    "tpu.trace_start"() <{level = 10 : i32, message = "hqk,khd->qhd"}> : () -> ()
    %cst_21 = arith.constant dense<0.000000e+00> : vector<4x8x8xf32>
    %68 = tpu.matmul %56, %67, %cst_21 {dimension_numbers = #tpu.dot_dimension_numbers<[0], [2], [2], [1], [0, 1, 0, 2, 1, 1], [1], [0]>} : vector<8x4x8xf32>, vector<4x8x8xf32>, vector<4x8x8xf32> -> vector<4x8x8xf32>
    %69 = tpu.transpose %68, [2, 0, 1] : vector<4x8x8xf32> -> vector<8x4x8xf32>
    "tpu.trace_stop"() : () -> ()
    %70 = vector.shape_cast %69 : vector<8x4x8xf32> to vector<8x32xf32>
    %c0_22 = arith.constant 0 : index
    %c0_23 = arith.constant 0 : index
    %c0_24 = arith.constant 0 : index
    %71 = vector.load %arg4[%c0_22, %c0_23, %c0_24] : memref<2x32x32xf32, #tpu.memory_space<vmem>>, vector<1x32x32xf32>
    %72 = vector.shape_cast %71 : vector<1x32x32xf32> to vector<32x32xf32>
    %cst_25 = arith.constant dense<0.000000e+00> : vector<8x32xf32>
    %73 = tpu.matmul %70, %72, %cst_25 {dimension_numbers = #tpu.dot_dimension_numbers<[1], [0], [0], [1], [0, 0, 1, 1], [], []>} : vector<8x32xf32>, vector<32x32xf32>, vector<8x32xf32> -> vector<8x32xf32>
    %74 = vector.broadcast %19 : vector<1x32xf32> to vector<8x32xf32>
    %75 = arith.addf %73, %74 : vector<8x32xf32>
    %76 = arith.addf %45, %75 : vector<8x32xf32>
    %cst_26 = arith.constant dense<0.000000e+00> : vector<8xf32>
    %77 = vector.multi_reduction <add>, %76, %cst_26 [1] : vector<8x32xf32> to vector<8xf32>
    %78 = vector.shape_cast %77 : vector<8xf32> to vector<8x1xf32>
    %cst_27 = arith.constant 3.200000e+01 : f32
    %79 = vector.broadcast %cst_27 : f32 to vector<8x1xf32>
    %80 = arith.divf %78, %79 : vector<8x1xf32>
    %81 = vector.broadcast %80 : vector<8x1xf32> to vector<8x32xf32>
    %82 = arith.subf %76, %81 : vector<8x32xf32>
    %83 = arith.mulf %82, %82 : vector<8x32xf32>
    %cst_28 = arith.constant dense<0.000000e+00> : vector<8xf32>
    %84 = vector.multi_reduction <add>, %83, %cst_28 [1] : vector<8x32xf32> to vector<8xf32>
    %85 = vector.shape_cast %84 : vector<8xf32> to vector<8x1xf32>
    %cst_29 = arith.constant 3.200000e+01 : f32
    %86 = vector.broadcast %cst_29 : f32 to vector<8x1xf32>
    %87 = arith.divf %85, %86 : vector<8x1xf32>
    %88 = vector.broadcast %80 : vector<8x1xf32> to vector<8x32xf32>
    %89 = arith.subf %76, %88 : vector<8x32xf32>
    %cst_30 = arith.constant 9.99999974E-6 : f32
    %90 = vector.broadcast %cst_30 : f32 to vector<8x1xf32>
    %91 = arith.addf %87, %90 : vector<8x1xf32>
    %92 = math.rsqrt %91 : vector<8x1xf32>
    %93 = vector.broadcast %92 : vector<8x1xf32> to vector<8x32xf32>
    %94 = arith.mulf %89, %93 : vector<8x32xf32>
    %95 = vector.broadcast %20 : vector<1x32xf32> to vector<8x32xf32>
    %96 = arith.mulf %94, %95 : vector<8x32xf32>
    %97 = vector.broadcast %21 : vector<1x32xf32> to vector<8x32xf32>
    %98 = arith.addf %96, %97 : vector<8x32xf32>
    %c0_31 = arith.constant 0 : index
    %c0_32 = arith.constant 0 : index
    %c0_33 = arith.constant 0 : index
    %99 = vector.load %arg5[%c0_31, %c0_32, %c0_33] : memref<2x32x64xf32, #tpu.memory_space<vmem>>, vector<1x32x64xf32>
    %100 = vector.shape_cast %99 : vector<1x32x64xf32> to vector<32x64xf32>
    %cst_34 = arith.constant dense<0.000000e+00> : vector<8x64xf32>
    %101 = tpu.matmul %98, %100, %cst_34 {dimension_numbers = #tpu.dot_dimension_numbers<[1], [0], [0], [1], [0, 0, 1, 1], [], []>} : vector<8x32xf32>, vector<32x64xf32>, vector<8x64xf32> -> vector<8x64xf32>
    %102 = vector.broadcast %22 : vector<1x64xf32> to vector<8x64xf32>
    %103 = arith.addf %101, %102 : vector<8x64xf32>
    %cst_35 = arith.constant 0.000000e+00 : f32
    %104 = vector.broadcast %cst_35 : f32 to vector<8x64xf32>
    %105 = arith.maximumf %103, %104 : vector<8x64xf32>
    %c0_36 = arith.constant 0 : index
    %c0_37 = arith.constant 0 : index
    %c0_38 = arith.constant 0 : index
    %106 = vector.load %arg6[%c0_36, %c0_37, %c0_38] : memref<2x64x32xf32, #tpu.memory_space<vmem>>, vector<1x64x32xf32>
    %107 = vector.shape_cast %106 : vector<1x64x32xf32> to vector<64x32xf32>
    %cst_39 = arith.constant dense<0.000000e+00> : vector<8x32xf32>
    %108 = tpu.matmul %105, %107, %cst_39 {dimension_numbers = #tpu.dot_dimension_numbers<[1], [0], [0], [1], [0, 0, 1, 1], [], []>} : vector<8x64xf32>, vector<64x32xf32>, vector<8x32xf32> -> vector<8x32xf32>
    %109 = arith.addf %98, %108 : vector<8x32xf32>
    %110 = vector.broadcast %23 : vector<1x32xf32> to vector<8x32xf32>
    %111 = arith.addf %109, %110 : vector<8x32xf32>
    %c1 = arith.constant 1 : index
    %c0_40 = arith.constant 0 : index
    %c0_41 = arith.constant 0 : index
    %112 = vector.load %arg7[%c1, %c0_40, %c0_41] : memref<2x8x128xf32, #tpu.memory_space<vmem>>, vector<1x8x128xf32>
    %113 = vector.shape_cast %112 : vector<1x8x128xf32> to vector<8x128xf32>
    %114 = vector.extract_strided_slice %113 {offsets = [0, 0], sizes = [1, 32], strides = [1, 1]} : vector<8x128xf32> to vector<1x32xf32>
    %115 = vector.extract_strided_slice %113 {offsets = [1, 0], sizes = [1, 32], strides = [1, 1]} : vector<8x128xf32> to vector<1x32xf32>
    %116 = vector.extract_strided_slice %113 {offsets = [2, 0], sizes = [1, 96], strides = [1, 1]} : vector<8x128xf32> to vector<1x96xf32>
    %117 = vector.extract_strided_slice %113 {offsets = [3, 0], sizes = [1, 32], strides = [1, 1]} : vector<8x128xf32> to vector<1x32xf32>
    %118 = vector.extract_strided_slice %113 {offsets = [4, 0], sizes = [1, 32], strides = [1, 1]} : vector<8x128xf32> to vector<1x32xf32>
    %119 = vector.extract_strided_slice %113 {offsets = [5, 0], sizes = [1, 32], strides = [1, 1]} : vector<8x128xf32> to vector<1x32xf32>
    %120 = vector.extract_strided_slice %113 {offsets = [6, 0], sizes = [1, 64], strides = [1, 1]} : vector<8x128xf32> to vector<1x64xf32>
    %121 = vector.extract_strided_slice %113 {offsets = [7, 0], sizes = [1, 32], strides = [1, 1]} : vector<8x128xf32> to vector<1x32xf32>
    %cst_42 = arith.constant dense<0.000000e+00> : vector<8xf32>
    %122 = vector.multi_reduction <add>, %111, %cst_42 [1] : vector<8x32xf32> to vector<8xf32>
    %123 = vector.shape_cast %122 : vector<8xf32> to vector<8x1xf32>
    %cst_43 = arith.constant 3.200000e+01 : f32
    %124 = vector.broadcast %cst_43 : f32 to vector<8x1xf32>
    %125 = arith.divf %123, %124 : vector<8x1xf32>
    %126 = vector.broadcast %125 : vector<8x1xf32> to vector<8x32xf32>
    %127 = arith.subf %111, %126 : vector<8x32xf32>
    %128 = arith.mulf %127, %127 : vector<8x32xf32>
    %cst_44 = arith.constant dense<0.000000e+00> : vector<8xf32>
    %129 = vector.multi_reduction <add>, %128, %cst_44 [1] : vector<8x32xf32> to vector<8xf32>
    %130 = vector.shape_cast %129 : vector<8xf32> to vector<8x1xf32>
    %cst_45 = arith.constant 3.200000e+01 : f32
    %131 = vector.broadcast %cst_45 : f32 to vector<8x1xf32>
    %132 = arith.divf %130, %131 : vector<8x1xf32>
    %133 = vector.broadcast %125 : vector<8x1xf32> to vector<8x32xf32>
    %134 = arith.subf %111, %133 : vector<8x32xf32>
    %cst_46 = arith.constant 9.99999974E-6 : f32
    %135 = vector.broadcast %cst_46 : f32 to vector<8x1xf32>
    %136 = arith.addf %132, %135 : vector<8x1xf32>
    %137 = math.rsqrt %136 : vector<8x1xf32>
    %138 = vector.broadcast %137 : vector<8x1xf32> to vector<8x32xf32>
    %139 = arith.mulf %134, %138 : vector<8x32xf32>
    %140 = vector.broadcast %114 : vector<1x32xf32> to vector<8x32xf32>
    %141 = arith.mulf %139, %140 : vector<8x32xf32>
    %142 = vector.broadcast %115 : vector<1x32xf32> to vector<8x32xf32>
    %143 = arith.addf %141, %142 : vector<8x32xf32>
    %c1_47 = arith.constant 1 : index
    %c0_48 = arith.constant 0 : index
    %c0_49 = arith.constant 0 : index
    %144 = vector.load %arg3[%c1_47, %c0_48, %c0_49] : memref<2x32x96xf32, #tpu.memory_space<vmem>>, vector<1x32x96xf32>
    %145 = vector.shape_cast %144 : vector<1x32x96xf32> to vector<32x96xf32>
    %cst_50 = arith.constant dense<0.000000e+00> : vector<8x96xf32>
    %146 = tpu.matmul %143, %145, %cst_50 {dimension_numbers = #tpu.dot_dimension_numbers<[1], [0], [0], [1], [0, 0, 1, 1], [], []>} : vector<8x32xf32>, vector<32x96xf32>, vector<8x96xf32> -> vector<8x96xf32>
    %147 = vector.broadcast %116 : vector<1x96xf32> to vector<8x96xf32>
    %148 = arith.addf %146, %147 : vector<8x96xf32>
    %149 = vector.extract_strided_slice %148 {offsets = [0, 0], sizes = [8, 32], strides = [1, 1]} : vector<8x96xf32> to vector<8x32xf32>
    %150 = vector.shape_cast %149 : vector<8x32xf32> to vector<8x4x8xf32>
    %151 = vector.extract_strided_slice %148 {offsets = [0, 32], sizes = [8, 32], strides = [1, 1]} : vector<8x96xf32> to vector<8x32xf32>
    %152 = vector.shape_cast %151 : vector<8x32xf32> to vector<8x4x8xf32>
    %153 = vector.extract_strided_slice %148 {offsets = [0, 64], sizes = [8, 32], strides = [1, 1]} : vector<8x96xf32> to vector<8x32xf32>
    %154 = vector.shape_cast %153 : vector<8x32xf32> to vector<8x4x8xf32>
    "tpu.trace_start"() <{level = 10 : i32, message = "qhd,khd->hqk"}> : () -> ()
    %cst_51 = arith.constant dense<0.000000e+00> : vector<4x8x8xf32>
    %155 = tpu.matmul %150, %152, %cst_51 {dimension_numbers = #tpu.dot_dimension_numbers<[2], [2], [0], [0], [0, 1, 0, 0, 1, 0], [1], [1]>} : vector<8x4x8xf32>, vector<8x4x8xf32>, vector<4x8x8xf32> -> vector<4x8x8xf32>
    "tpu.trace_stop"() : () -> ()
    %cst_52 = arith.constant dense<0xFF800000> : vector<4x8xf32>
    %156 = vector.multi_reduction <maximumf>, %155, %cst_52 [2] : vector<4x8x8xf32> to vector<4x8xf32>
    %157 = vector.shape_cast %156 : vector<4x8xf32> to vector<4x8x1xf32>
    %158 = vector.broadcast %157 : vector<4x8x1xf32> to vector<4x8x8xf32>
    %159 = arith.subf %155, %158 : vector<4x8x8xf32>
    %160 = math.exp %159 : vector<4x8x8xf32>
    %cst_53 = arith.constant dense<0.000000e+00> : vector<4x8xf32>
    %161 = vector.multi_reduction <add>, %160, %cst_53 [2] : vector<4x8x8xf32> to vector<4x8xf32>
    %162 = vector.shape_cast %161 : vector<4x8xf32> to vector<4x8x1xf32>
    %163 = tpu.reciprocal %162 {approx = true} : vector<4x8x1xf32> -> vector<4x8x1xf32>
    %164 = vector.broadcast %163 : vector<4x8x1xf32> to vector<4x8x8xf32>
    %165 = arith.mulf %160, %164 : vector<4x8x8xf32>
    "tpu.trace_start"() <{level = 10 : i32, message = "hqk,khd->qhd"}> : () -> ()
    %cst_54 = arith.constant dense<0.000000e+00> : vector<4x8x8xf32>
    %166 = tpu.matmul %154, %165, %cst_54 {dimension_numbers = #tpu.dot_dimension_numbers<[0], [2], [2], [1], [0, 1, 0, 2, 1, 1], [1], [0]>} : vector<8x4x8xf32>, vector<4x8x8xf32>, vector<4x8x8xf32> -> vector<4x8x8xf32>
    %167 = tpu.transpose %166, [2, 0, 1] : vector<4x8x8xf32> -> vector<8x4x8xf32>
    "tpu.trace_stop"() : () -> ()
    %168 = vector.shape_cast %167 : vector<8x4x8xf32> to vector<8x32xf32>
    %c1_55 = arith.constant 1 : index
    %c0_56 = arith.constant 0 : index
    %c0_57 = arith.constant 0 : index
    %169 = vector.load %arg4[%c1_55, %c0_56, %c0_57] : memref<2x32x32xf32, #tpu.memory_space<vmem>>, vector<1x32x32xf32>
    %170 = vector.shape_cast %169 : vector<1x32x32xf32> to vector<32x32xf32>
    %cst_58 = arith.constant dense<0.000000e+00> : vector<8x32xf32>
    %171 = tpu.matmul %168, %170, %cst_58 {dimension_numbers = #tpu.dot_dimension_numbers<[1], [0], [0], [1], [0, 0, 1, 1], [], []>} : vector<8x32xf32>, vector<32x32xf32>, vector<8x32xf32> -> vector<8x32xf32>
    %172 = vector.broadcast %117 : vector<1x32xf32> to vector<8x32xf32>
    %173 = arith.addf %171, %172 : vector<8x32xf32>
    %174 = arith.addf %143, %173 : vector<8x32xf32>
    %cst_59 = arith.constant dense<0.000000e+00> : vector<8xf32>
    %175 = vector.multi_reduction <add>, %174, %cst_59 [1] : vector<8x32xf32> to vector<8xf32>
    %176 = vector.shape_cast %175 : vector<8xf32> to vector<8x1xf32>
    %cst_60 = arith.constant 3.200000e+01 : f32
    %177 = vector.broadcast %cst_60 : f32 to vector<8x1xf32>
    %178 = arith.divf %176, %177 : vector<8x1xf32>
    %179 = vector.broadcast %178 : vector<8x1xf32> to vector<8x32xf32>
    %180 = arith.subf %174, %179 : vector<8x32xf32>
    %181 = arith.mulf %180, %180 : vector<8x32xf32>
    %cst_61 = arith.constant dense<0.000000e+00> : vector<8xf32>
    %182 = vector.multi_reduction <add>, %181, %cst_61 [1] : vector<8x32xf32> to vector<8xf32>
    %183 = vector.shape_cast %182 : vector<8xf32> to vector<8x1xf32>
    %cst_62 = arith.constant 3.200000e+01 : f32
    %184 = vector.broadcast %cst_62 : f32 to vector<8x1xf32>
    %185 = arith.divf %183, %184 : vector<8x1xf32>
    %186 = vector.broadcast %178 : vector<8x1xf32> to vector<8x32xf32>
    %187 = arith.subf %174, %186 : vector<8x32xf32>
    %cst_63 = arith.constant 9.99999974E-6 : f32
    %188 = vector.broadcast %cst_63 : f32 to vector<8x1xf32>
    %189 = arith.addf %185, %188 : vector<8x1xf32>
    %190 = math.rsqrt %189 : vector<8x1xf32>
    %191 = vector.broadcast %190 : vector<8x1xf32> to vector<8x32xf32>
    %192 = arith.mulf %187, %191 : vector<8x32xf32>
    %193 = vector.broadcast %118 : vector<1x32xf32> to vector<8x32xf32>
    %194 = arith.mulf %192, %193 : vector<8x32xf32>
    %195 = vector.broadcast %119 : vector<1x32xf32> to vector<8x32xf32>
    %196 = arith.addf %194, %195 : vector<8x32xf32>
    %c1_64 = arith.constant 1 : index
    %c0_65 = arith.constant 0 : index
    %c0_66 = arith.constant 0 : index
    %197 = vector.load %arg5[%c1_64, %c0_65, %c0_66] : memref<2x32x64xf32, #tpu.memory_space<vmem>>, vector<1x32x64xf32>
    %198 = vector.shape_cast %197 : vector<1x32x64xf32> to vector<32x64xf32>
    %cst_67 = arith.constant dense<0.000000e+00> : vector<8x64xf32>
    %199 = tpu.matmul %196, %198, %cst_67 {dimension_numbers = #tpu.dot_dimension_numbers<[1], [0], [0], [1], [0, 0, 1, 1], [], []>} : vector<8x32xf32>, vector<32x64xf32>, vector<8x64xf32> -> vector<8x64xf32>
    %200 = vector.broadcast %120 : vector<1x64xf32> to vector<8x64xf32>
    %201 = arith.addf %199, %200 : vector<8x64xf32>
    %cst_68 = arith.constant 0.000000e+00 : f32
    %202 = vector.broadcast %cst_68 : f32 to vector<8x64xf32>
    %203 = arith.maximumf %201, %202 : vector<8x64xf32>
    %c1_69 = arith.constant 1 : index
    %c0_70 = arith.constant 0 : index
    %c0_71 = arith.constant 0 : index
    %204 = vector.load %arg6[%c1_69, %c0_70, %c0_71] : memref<2x64x32xf32, #tpu.memory_space<vmem>>, vector<1x64x32xf32>
    %205 = vector.shape_cast %204 : vector<1x64x32xf32> to vector<64x32xf32>
    %cst_72 = arith.constant dense<0.000000e+00> : vector<8x32xf32>
    %206 = tpu.matmul %203, %205, %cst_72 {dimension_numbers = #tpu.dot_dimension_numbers<[1], [0], [0], [1], [0, 0, 1, 1], [], []>} : vector<8x64xf32>, vector<64x32xf32>, vector<8x32xf32> -> vector<8x32xf32>
    %207 = arith.addf %196, %206 : vector<8x32xf32>
    %208 = vector.broadcast %121 : vector<1x32xf32> to vector<8x32xf32>
    %209 = arith.addf %207, %208 : vector<8x32xf32>
    %cst_73 = arith.constant dense<0.000000e+00> : vector<8xf32>
    %210 = vector.multi_reduction <add>, %209, %cst_73 [1] : vector<8x32xf32> to vector<8xf32>
    %211 = vector.shape_cast %210 : vector<8xf32> to vector<8x1xf32>
    %cst_74 = arith.constant 3.200000e+01 : f32
    %212 = vector.broadcast %cst_74 : f32 to vector<8x1xf32>
    %213 = arith.divf %211, %212 : vector<8x1xf32>
    %214 = vector.broadcast %213 : vector<8x1xf32> to vector<8x32xf32>
    %215 = arith.subf %209, %214 : vector<8x32xf32>
    %216 = arith.mulf %215, %215 : vector<8x32xf32>
    %cst_75 = arith.constant dense<0.000000e+00> : vector<8xf32>
    %217 = vector.multi_reduction <add>, %216, %cst_75 [1] : vector<8x32xf32> to vector<8xf32>
    %218 = vector.shape_cast %217 : vector<8xf32> to vector<8x1xf32>
    %cst_76 = arith.constant 3.200000e+01 : f32
    %219 = vector.broadcast %cst_76 : f32 to vector<8x1xf32>
    %220 = arith.divf %218, %219 : vector<8x1xf32>
    %221 = vector.broadcast %213 : vector<8x1xf32> to vector<8x32xf32>
    %222 = arith.subf %209, %221 : vector<8x32xf32>
    %cst_77 = arith.constant 9.99999974E-6 : f32
    %223 = vector.broadcast %cst_77 : f32 to vector<8x1xf32>
    %224 = arith.addf %220, %223 : vector<8x1xf32>
    %225 = math.rsqrt %224 : vector<8x1xf32>
    %226 = vector.broadcast %225 : vector<8x1xf32> to vector<8x32xf32>
    %227 = arith.mulf %222, %226 : vector<8x32xf32>
    %228 = vector.broadcast %2 : vector<1x32xf32> to vector<8x32xf32>
    %229 = arith.mulf %227, %228 : vector<8x32xf32>
    %230 = vector.broadcast %3 : vector<1x32xf32> to vector<8x32xf32>
    %231 = arith.addf %229, %230 : vector<8x32xf32>
    %c0_78 = arith.constant 0 : index
    %c0_79 = arith.constant 0 : index
    %232 = vector.load %arg8[%c0_78, %c0_79] : memref<32x128xf32, #tpu.memory_space<vmem>>, vector<32x128xf32>
    %cst_80 = arith.constant dense<0.000000e+00> : vector<8x128xf32>
    %233 = tpu.matmul %231, %232, %cst_80 {dimension_numbers = #tpu.dot_dimension_numbers<[1], [0], [0], [1], [0, 0, 1, 1], [], []>} : vector<8x32xf32>, vector<32x128xf32>, vector<8x128xf32> -> vector<8x128xf32>
    %234 = vector.broadcast %4 : vector<1x128xf32> to vector<8x128xf32>
    %235 = arith.addf %233, %234 : vector<8x128xf32>
    %c0_81 = arith.constant 0 : index
    %c0_82 = arith.constant 0 : index
    %236 = vector.load %arg9[%c0_81, %c0_82] : memref<32x128xf32, #tpu.memory_space<vmem>>, vector<32x128xf32>
    %cst_83 = arith.constant 0.000000e+00 : f32
    %237 = vector.broadcast %cst_83 : f32 to vector<1x32xf32>
    %cst_84 = arith.constant 0.000000e+00 : f32
    %238 = vector.broadcast %cst_84 : f32 to vector<1x32xf32>
    %239 = vector.extract_strided_slice %235 {offsets = [0, 0], sizes = [1, 128], strides = [1, 1]} : vector<8x128xf32> to vector<1x128xf32>
    %cst_85 = arith.constant dense<0.000000e+00> : vector<1x128xf32>
    %240 = tpu.matmul %237, %236, %cst_85 {dimension_numbers = #tpu.dot_dimension_numbers<[1], [0], [0], [1], [0, 0, 1, 1], [], []>} : vector<1x32xf32>, vector<32x128xf32>, vector<1x128xf32> -> vector<1x128xf32>
    %241 = arith.addf %239, %240 : vector<1x128xf32>
    %242 = vector.extract_strided_slice %241 {offsets = [0, 0], sizes = [1, 32], strides = [1, 1]} : vector<1x128xf32> to vector<1x32xf32>
    %243 = arith.negf %242 : vector<1x32xf32>
    %244 = math.exp %243 : vector<1x32xf32>
    %cst_86 = arith.constant 1.000000e+00 : f32
    %245 = vector.broadcast %cst_86 : f32 to vector<1x32xf32>
    %246 = arith.addf %245, %244 : vector<1x32xf32>
    %247 = arith.divf %245, %246 : vector<1x32xf32>
    %248 = vector.extract_strided_slice %241 {offsets = [0, 32], sizes = [1, 32], strides = [1, 1]} : vector<1x128xf32> to vector<1x32xf32>
    %249 = arith.negf %248 : vector<1x32xf32>
    %250 = math.exp %249 : vector<1x32xf32>
    %cst_87 = arith.constant 1.000000e+00 : f32
    %251 = vector.broadcast %cst_87 : f32 to vector<1x32xf32>
    %252 = arith.addf %251, %250 : vector<1x32xf32>
    %253 = arith.divf %251, %252 : vector<1x32xf32>
    %254 = vector.extract_strided_slice %241 {offsets = [0, 64], sizes = [1, 32], strides = [1, 1]} : vector<1x128xf32> to vector<1x32xf32>
    %255 = math.tanh %254 : vector<1x32xf32>
    %256 = vector.extract_strided_slice %241 {offsets = [0, 96], sizes = [1, 32], strides = [1, 1]} : vector<1x128xf32> to vector<1x32xf32>
    %257 = arith.negf %256 : vector<1x32xf32>
    %258 = math.exp %257 : vector<1x32xf32>
    %cst_88 = arith.constant 1.000000e+00 : f32
    %259 = vector.broadcast %cst_88 : f32 to vector<1x32xf32>
    %260 = arith.addf %259, %258 : vector<1x32xf32>
    %261 = arith.divf %259, %260 : vector<1x32xf32>
    %262 = arith.mulf %253, %238 : vector<1x32xf32>
    %263 = arith.mulf %247, %255 : vector<1x32xf32>
    %264 = arith.addf %262, %263 : vector<1x32xf32>
    %265 = math.tanh %264 : vector<1x32xf32>
    %266 = arith.mulf %261, %265 : vector<1x32xf32>
    %267 = vector.extract_strided_slice %235 {offsets = [1, 0], sizes = [1, 128], strides = [1, 1]} : vector<8x128xf32> to vector<1x128xf32>
    %cst_89 = arith.constant dense<0.000000e+00> : vector<1x128xf32>
    %268 = tpu.matmul %266, %236, %cst_89 {dimension_numbers = #tpu.dot_dimension_numbers<[1], [0], [0], [1], [0, 0, 1, 1], [], []>} : vector<1x32xf32>, vector<32x128xf32>, vector<1x128xf32> -> vector<1x128xf32>
    %269 = arith.addf %267, %268 : vector<1x128xf32>
    %270 = vector.extract_strided_slice %269 {offsets = [0, 0], sizes = [1, 32], strides = [1, 1]} : vector<1x128xf32> to vector<1x32xf32>
    %271 = arith.negf %270 : vector<1x32xf32>
    %272 = math.exp %271 : vector<1x32xf32>
    %cst_90 = arith.constant 1.000000e+00 : f32
    %273 = vector.broadcast %cst_90 : f32 to vector<1x32xf32>
    %274 = arith.addf %273, %272 : vector<1x32xf32>
    %275 = arith.divf %273, %274 : vector<1x32xf32>
    %276 = vector.extract_strided_slice %269 {offsets = [0, 32], sizes = [1, 32], strides = [1, 1]} : vector<1x128xf32> to vector<1x32xf32>
    %277 = arith.negf %276 : vector<1x32xf32>
    %278 = math.exp %277 : vector<1x32xf32>
    %cst_91 = arith.constant 1.000000e+00 : f32
    %279 = vector.broadcast %cst_91 : f32 to vector<1x32xf32>
    %280 = arith.addf %279, %278 : vector<1x32xf32>
    %281 = arith.divf %279, %280 : vector<1x32xf32>
    %282 = vector.extract_strided_slice %269 {offsets = [0, 64], sizes = [1, 32], strides = [1, 1]} : vector<1x128xf32> to vector<1x32xf32>
    %283 = math.tanh %282 : vector<1x32xf32>
    %284 = vector.extract_strided_slice %269 {offsets = [0, 96], sizes = [1, 32], strides = [1, 1]} : vector<1x128xf32> to vector<1x32xf32>
    %285 = arith.negf %284 : vector<1x32xf32>
    %286 = math.exp %285 : vector<1x32xf32>
    %cst_92 = arith.constant 1.000000e+00 : f32
    %287 = vector.broadcast %cst_92 : f32 to vector<1x32xf32>
    %288 = arith.addf %287, %286 : vector<1x32xf32>
    %289 = arith.divf %287, %288 : vector<1x32xf32>
    %290 = arith.mulf %281, %264 : vector<1x32xf32>
    %291 = arith.mulf %275, %283 : vector<1x32xf32>
    %292 = arith.addf %290, %291 : vector<1x32xf32>
    %293 = math.tanh %292 : vector<1x32xf32>
    %294 = arith.mulf %289, %293 : vector<1x32xf32>
    %295 = vector.extract_strided_slice %235 {offsets = [2, 0], sizes = [1, 128], strides = [1, 1]} : vector<8x128xf32> to vector<1x128xf32>
    %cst_93 = arith.constant dense<0.000000e+00> : vector<1x128xf32>
    %296 = tpu.matmul %294, %236, %cst_93 {dimension_numbers = #tpu.dot_dimension_numbers<[1], [0], [0], [1], [0, 0, 1, 1], [], []>} : vector<1x32xf32>, vector<32x128xf32>, vector<1x128xf32> -> vector<1x128xf32>
    %297 = arith.addf %295, %296 : vector<1x128xf32>
    %298 = vector.extract_strided_slice %297 {offsets = [0, 0], sizes = [1, 32], strides = [1, 1]} : vector<1x128xf32> to vector<1x32xf32>
    %299 = arith.negf %298 : vector<1x32xf32>
    %300 = math.exp %299 : vector<1x32xf32>
    %cst_94 = arith.constant 1.000000e+00 : f32
    %301 = vector.broadcast %cst_94 : f32 to vector<1x32xf32>
    %302 = arith.addf %301, %300 : vector<1x32xf32>
    %303 = arith.divf %301, %302 : vector<1x32xf32>
    %304 = vector.extract_strided_slice %297 {offsets = [0, 32], sizes = [1, 32], strides = [1, 1]} : vector<1x128xf32> to vector<1x32xf32>
    %305 = arith.negf %304 : vector<1x32xf32>
    %306 = math.exp %305 : vector<1x32xf32>
    %cst_95 = arith.constant 1.000000e+00 : f32
    %307 = vector.broadcast %cst_95 : f32 to vector<1x32xf32>
    %308 = arith.addf %307, %306 : vector<1x32xf32>
    %309 = arith.divf %307, %308 : vector<1x32xf32>
    %310 = vector.extract_strided_slice %297 {offsets = [0, 64], sizes = [1, 32], strides = [1, 1]} : vector<1x128xf32> to vector<1x32xf32>
    %311 = math.tanh %310 : vector<1x32xf32>
    %312 = vector.extract_strided_slice %297 {offsets = [0, 96], sizes = [1, 32], strides = [1, 1]} : vector<1x128xf32> to vector<1x32xf32>
    %313 = arith.negf %312 : vector<1x32xf32>
    %314 = math.exp %313 : vector<1x32xf32>
    %cst_96 = arith.constant 1.000000e+00 : f32
    %315 = vector.broadcast %cst_96 : f32 to vector<1x32xf32>
    %316 = arith.addf %315, %314 : vector<1x32xf32>
    %317 = arith.divf %315, %316 : vector<1x32xf32>
    %318 = arith.mulf %309, %292 : vector<1x32xf32>
    %319 = arith.mulf %303, %311 : vector<1x32xf32>
    %320 = arith.addf %318, %319 : vector<1x32xf32>
    %321 = math.tanh %320 : vector<1x32xf32>
    %322 = arith.mulf %317, %321 : vector<1x32xf32>
    %323 = vector.extract_strided_slice %235 {offsets = [3, 0], sizes = [1, 128], strides = [1, 1]} : vector<8x128xf32> to vector<1x128xf32>
    %cst_97 = arith.constant dense<0.000000e+00> : vector<1x128xf32>
    %324 = tpu.matmul %322, %236, %cst_97 {dimension_numbers = #tpu.dot_dimension_numbers<[1], [0], [0], [1], [0, 0, 1, 1], [], []>} : vector<1x32xf32>, vector<32x128xf32>, vector<1x128xf32> -> vector<1x128xf32>
    %325 = arith.addf %323, %324 : vector<1x128xf32>
    %326 = vector.extract_strided_slice %325 {offsets = [0, 0], sizes = [1, 32], strides = [1, 1]} : vector<1x128xf32> to vector<1x32xf32>
    %327 = arith.negf %326 : vector<1x32xf32>
    %328 = math.exp %327 : vector<1x32xf32>
    %cst_98 = arith.constant 1.000000e+00 : f32
    %329 = vector.broadcast %cst_98 : f32 to vector<1x32xf32>
    %330 = arith.addf %329, %328 : vector<1x32xf32>
    %331 = arith.divf %329, %330 : vector<1x32xf32>
    %332 = vector.extract_strided_slice %325 {offsets = [0, 32], sizes = [1, 32], strides = [1, 1]} : vector<1x128xf32> to vector<1x32xf32>
    %333 = arith.negf %332 : vector<1x32xf32>
    %334 = math.exp %333 : vector<1x32xf32>
    %cst_99 = arith.constant 1.000000e+00 : f32
    %335 = vector.broadcast %cst_99 : f32 to vector<1x32xf32>
    %336 = arith.addf %335, %334 : vector<1x32xf32>
    %337 = arith.divf %335, %336 : vector<1x32xf32>
    %338 = vector.extract_strided_slice %325 {offsets = [0, 64], sizes = [1, 32], strides = [1, 1]} : vector<1x128xf32> to vector<1x32xf32>
    %339 = math.tanh %338 : vector<1x32xf32>
    %340 = vector.extract_strided_slice %325 {offsets = [0, 96], sizes = [1, 32], strides = [1, 1]} : vector<1x128xf32> to vector<1x32xf32>
    %341 = arith.negf %340 : vector<1x32xf32>
    %342 = math.exp %341 : vector<1x32xf32>
    %cst_100 = arith.constant 1.000000e+00 : f32
    %343 = vector.broadcast %cst_100 : f32 to vector<1x32xf32>
    %344 = arith.addf %343, %342 : vector<1x32xf32>
    %345 = arith.divf %343, %344 : vector<1x32xf32>
    %346 = arith.mulf %337, %320 : vector<1x32xf32>
    %347 = arith.mulf %331, %339 : vector<1x32xf32>
    %348 = arith.addf %346, %347 : vector<1x32xf32>
    %349 = math.tanh %348 : vector<1x32xf32>
    %350 = arith.mulf %345, %349 : vector<1x32xf32>
    %351 = vector.extract_strided_slice %235 {offsets = [4, 0], sizes = [1, 128], strides = [1, 1]} : vector<8x128xf32> to vector<1x128xf32>
    %cst_101 = arith.constant dense<0.000000e+00> : vector<1x128xf32>
    %352 = tpu.matmul %350, %236, %cst_101 {dimension_numbers = #tpu.dot_dimension_numbers<[1], [0], [0], [1], [0, 0, 1, 1], [], []>} : vector<1x32xf32>, vector<32x128xf32>, vector<1x128xf32> -> vector<1x128xf32>
    %353 = arith.addf %351, %352 : vector<1x128xf32>
    %354 = vector.extract_strided_slice %353 {offsets = [0, 0], sizes = [1, 32], strides = [1, 1]} : vector<1x128xf32> to vector<1x32xf32>
    %355 = arith.negf %354 : vector<1x32xf32>
    %356 = math.exp %355 : vector<1x32xf32>
    %cst_102 = arith.constant 1.000000e+00 : f32
    %357 = vector.broadcast %cst_102 : f32 to vector<1x32xf32>
    %358 = arith.addf %357, %356 : vector<1x32xf32>
    %359 = arith.divf %357, %358 : vector<1x32xf32>
    %360 = vector.extract_strided_slice %353 {offsets = [0, 32], sizes = [1, 32], strides = [1, 1]} : vector<1x128xf32> to vector<1x32xf32>
    %361 = arith.negf %360 : vector<1x32xf32>
    %362 = math.exp %361 : vector<1x32xf32>
    %cst_103 = arith.constant 1.000000e+00 : f32
    %363 = vector.broadcast %cst_103 : f32 to vector<1x32xf32>
    %364 = arith.addf %363, %362 : vector<1x32xf32>
    %365 = arith.divf %363, %364 : vector<1x32xf32>
    %366 = vector.extract_strided_slice %353 {offsets = [0, 64], sizes = [1, 32], strides = [1, 1]} : vector<1x128xf32> to vector<1x32xf32>
    %367 = math.tanh %366 : vector<1x32xf32>
    %368 = vector.extract_strided_slice %353 {offsets = [0, 96], sizes = [1, 32], strides = [1, 1]} : vector<1x128xf32> to vector<1x32xf32>
    %369 = arith.negf %368 : vector<1x32xf32>
    %370 = math.exp %369 : vector<1x32xf32>
    %cst_104 = arith.constant 1.000000e+00 : f32
    %371 = vector.broadcast %cst_104 : f32 to vector<1x32xf32>
    %372 = arith.addf %371, %370 : vector<1x32xf32>
    %373 = arith.divf %371, %372 : vector<1x32xf32>
    %374 = arith.mulf %365, %348 : vector<1x32xf32>
    %375 = arith.mulf %359, %367 : vector<1x32xf32>
    %376 = arith.addf %374, %375 : vector<1x32xf32>
    %377 = math.tanh %376 : vector<1x32xf32>
    %378 = arith.mulf %373, %377 : vector<1x32xf32>
    %379 = vector.extract_strided_slice %235 {offsets = [5, 0], sizes = [1, 128], strides = [1, 1]} : vector<8x128xf32> to vector<1x128xf32>
    %cst_105 = arith.constant dense<0.000000e+00> : vector<1x128xf32>
    %380 = tpu.matmul %378, %236, %cst_105 {dimension_numbers = #tpu.dot_dimension_numbers<[1], [0], [0], [1], [0, 0, 1, 1], [], []>} : vector<1x32xf32>, vector<32x128xf32>, vector<1x128xf32> -> vector<1x128xf32>
    %381 = arith.addf %379, %380 : vector<1x128xf32>
    %382 = vector.extract_strided_slice %381 {offsets = [0, 0], sizes = [1, 32], strides = [1, 1]} : vector<1x128xf32> to vector<1x32xf32>
    %383 = arith.negf %382 : vector<1x32xf32>
    %384 = math.exp %383 : vector<1x32xf32>
    %cst_106 = arith.constant 1.000000e+00 : f32
    %385 = vector.broadcast %cst_106 : f32 to vector<1x32xf32>
    %386 = arith.addf %385, %384 : vector<1x32xf32>
    %387 = arith.divf %385, %386 : vector<1x32xf32>
    %388 = vector.extract_strided_slice %381 {offsets = [0, 32], sizes = [1, 32], strides = [1, 1]} : vector<1x128xf32> to vector<1x32xf32>
    %389 = arith.negf %388 : vector<1x32xf32>
    %390 = math.exp %389 : vector<1x32xf32>
    %cst_107 = arith.constant 1.000000e+00 : f32
    %391 = vector.broadcast %cst_107 : f32 to vector<1x32xf32>
    %392 = arith.addf %391, %390 : vector<1x32xf32>
    %393 = arith.divf %391, %392 : vector<1x32xf32>
    %394 = vector.extract_strided_slice %381 {offsets = [0, 64], sizes = [1, 32], strides = [1, 1]} : vector<1x128xf32> to vector<1x32xf32>
    %395 = math.tanh %394 : vector<1x32xf32>
    %396 = vector.extract_strided_slice %381 {offsets = [0, 96], sizes = [1, 32], strides = [1, 1]} : vector<1x128xf32> to vector<1x32xf32>
    %397 = arith.negf %396 : vector<1x32xf32>
    %398 = math.exp %397 : vector<1x32xf32>
    %cst_108 = arith.constant 1.000000e+00 : f32
    %399 = vector.broadcast %cst_108 : f32 to vector<1x32xf32>
    %400 = arith.addf %399, %398 : vector<1x32xf32>
    %401 = arith.divf %399, %400 : vector<1x32xf32>
    %402 = arith.mulf %393, %376 : vector<1x32xf32>
    %403 = arith.mulf %387, %395 : vector<1x32xf32>
    %404 = arith.addf %402, %403 : vector<1x32xf32>
    %405 = math.tanh %404 : vector<1x32xf32>
    %406 = arith.mulf %401, %405 : vector<1x32xf32>
    %407 = vector.extract_strided_slice %235 {offsets = [6, 0], sizes = [1, 128], strides = [1, 1]} : vector<8x128xf32> to vector<1x128xf32>
    %cst_109 = arith.constant dense<0.000000e+00> : vector<1x128xf32>
    %408 = tpu.matmul %406, %236, %cst_109 {dimension_numbers = #tpu.dot_dimension_numbers<[1], [0], [0], [1], [0, 0, 1, 1], [], []>} : vector<1x32xf32>, vector<32x128xf32>, vector<1x128xf32> -> vector<1x128xf32>
    %409 = arith.addf %407, %408 : vector<1x128xf32>
    %410 = vector.extract_strided_slice %409 {offsets = [0, 0], sizes = [1, 32], strides = [1, 1]} : vector<1x128xf32> to vector<1x32xf32>
    %411 = arith.negf %410 : vector<1x32xf32>
    %412 = math.exp %411 : vector<1x32xf32>
    %cst_110 = arith.constant 1.000000e+00 : f32
    %413 = vector.broadcast %cst_110 : f32 to vector<1x32xf32>
    %414 = arith.addf %413, %412 : vector<1x32xf32>
    %415 = arith.divf %413, %414 : vector<1x32xf32>
    %416 = vector.extract_strided_slice %409 {offsets = [0, 32], sizes = [1, 32], strides = [1, 1]} : vector<1x128xf32> to vector<1x32xf32>
    %417 = arith.negf %416 : vector<1x32xf32>
    %418 = math.exp %417 : vector<1x32xf32>
    %cst_111 = arith.constant 1.000000e+00 : f32
    %419 = vector.broadcast %cst_111 : f32 to vector<1x32xf32>
    %420 = arith.addf %419, %418 : vector<1x32xf32>
    %421 = arith.divf %419, %420 : vector<1x32xf32>
    %422 = vector.extract_strided_slice %409 {offsets = [0, 64], sizes = [1, 32], strides = [1, 1]} : vector<1x128xf32> to vector<1x32xf32>
    %423 = math.tanh %422 : vector<1x32xf32>
    %424 = vector.extract_strided_slice %409 {offsets = [0, 96], sizes = [1, 32], strides = [1, 1]} : vector<1x128xf32> to vector<1x32xf32>
    %425 = arith.negf %424 : vector<1x32xf32>
    %426 = math.exp %425 : vector<1x32xf32>
    %cst_112 = arith.constant 1.000000e+00 : f32
    %427 = vector.broadcast %cst_112 : f32 to vector<1x32xf32>
    %428 = arith.addf %427, %426 : vector<1x32xf32>
    %429 = arith.divf %427, %428 : vector<1x32xf32>
    %430 = arith.mulf %421, %404 : vector<1x32xf32>
    %431 = arith.mulf %415, %423 : vector<1x32xf32>
    %432 = arith.addf %430, %431 : vector<1x32xf32>
    %433 = math.tanh %432 : vector<1x32xf32>
    %434 = arith.mulf %429, %433 : vector<1x32xf32>
    %435 = vector.extract_strided_slice %235 {offsets = [7, 0], sizes = [1, 128], strides = [1, 1]} : vector<8x128xf32> to vector<1x128xf32>
    %cst_113 = arith.constant dense<0.000000e+00> : vector<1x128xf32>
    %436 = tpu.matmul %434, %236, %cst_113 {dimension_numbers = #tpu.dot_dimension_numbers<[1], [0], [0], [1], [0, 0, 1, 1], [], []>} : vector<1x32xf32>, vector<32x128xf32>, vector<1x128xf32> -> vector<1x128xf32>
    %437 = arith.addf %435, %436 : vector<1x128xf32>
    %438 = vector.extract_strided_slice %437 {offsets = [0, 0], sizes = [1, 32], strides = [1, 1]} : vector<1x128xf32> to vector<1x32xf32>
    %439 = arith.negf %438 : vector<1x32xf32>
    %440 = math.exp %439 : vector<1x32xf32>
    %cst_114 = arith.constant 1.000000e+00 : f32
    %441 = vector.broadcast %cst_114 : f32 to vector<1x32xf32>
    %442 = arith.addf %441, %440 : vector<1x32xf32>
    %443 = arith.divf %441, %442 : vector<1x32xf32>
    %444 = vector.extract_strided_slice %437 {offsets = [0, 32], sizes = [1, 32], strides = [1, 1]} : vector<1x128xf32> to vector<1x32xf32>
    %445 = arith.negf %444 : vector<1x32xf32>
    %446 = math.exp %445 : vector<1x32xf32>
    %cst_115 = arith.constant 1.000000e+00 : f32
    %447 = vector.broadcast %cst_115 : f32 to vector<1x32xf32>
    %448 = arith.addf %447, %446 : vector<1x32xf32>
    %449 = arith.divf %447, %448 : vector<1x32xf32>
    %450 = vector.extract_strided_slice %437 {offsets = [0, 64], sizes = [1, 32], strides = [1, 1]} : vector<1x128xf32> to vector<1x32xf32>
    %451 = math.tanh %450 : vector<1x32xf32>
    %452 = vector.extract_strided_slice %437 {offsets = [0, 96], sizes = [1, 32], strides = [1, 1]} : vector<1x128xf32> to vector<1x32xf32>
    %453 = arith.negf %452 : vector<1x32xf32>
    %454 = math.exp %453 : vector<1x32xf32>
    %cst_116 = arith.constant 1.000000e+00 : f32
    %455 = vector.broadcast %cst_116 : f32 to vector<1x32xf32>
    %456 = arith.addf %455, %454 : vector<1x32xf32>
    %457 = arith.divf %455, %456 : vector<1x32xf32>
    %458 = arith.mulf %449, %432 : vector<1x32xf32>
    %459 = arith.mulf %443, %451 : vector<1x32xf32>
    %460 = arith.addf %458, %459 : vector<1x32xf32>
    %461 = math.tanh %460 : vector<1x32xf32>
    %462 = arith.mulf %457, %461 : vector<1x32xf32>
    %c0_117 = arith.constant 0 : index
    %c0_118 = arith.constant 0 : index
    %463 = vector.load %arg10[%c0_117, %c0_118] : memref<32x128xf32, #tpu.memory_space<vmem>>, vector<32x128xf32>
    %cst_119 = arith.constant dense<0.000000e+00> : vector<1x128xf32>
    %464 = tpu.matmul %462, %463, %cst_119 {dimension_numbers = #tpu.dot_dimension_numbers<[1], [0], [0], [1], [0, 0, 1, 1], [], []>} : vector<1x32xf32>, vector<32x128xf32>, vector<1x128xf32> -> vector<1x128xf32>
    %465 = arith.addf %464, %5 : vector<1x128xf32>
    %466 = vector.extract_strided_slice %465 {offsets = [0, 0], sizes = [1, 32], strides = [1, 1]} : vector<1x128xf32> to vector<1x32xf32>
    %467 = arith.negf %466 : vector<1x32xf32>
    %468 = math.exp %467 : vector<1x32xf32>
    %cst_120 = arith.constant 1.000000e+00 : f32
    %469 = vector.broadcast %cst_120 : f32 to vector<1x32xf32>
    %470 = arith.addf %469, %468 : vector<1x32xf32>
    %471 = arith.divf %469, %470 : vector<1x32xf32>
    %472 = vector.extract_strided_slice %465 {offsets = [0, 32], sizes = [1, 32], strides = [1, 1]} : vector<1x128xf32> to vector<1x32xf32>
    %473 = arith.negf %472 : vector<1x32xf32>
    %474 = math.exp %473 : vector<1x32xf32>
    %cst_121 = arith.constant 1.000000e+00 : f32
    %475 = vector.broadcast %cst_121 : f32 to vector<1x32xf32>
    %476 = arith.addf %475, %474 : vector<1x32xf32>
    %477 = arith.divf %475, %476 : vector<1x32xf32>
    %478 = vector.extract_strided_slice %465 {offsets = [0, 64], sizes = [1, 32], strides = [1, 1]} : vector<1x128xf32> to vector<1x32xf32>
    %479 = math.tanh %478 : vector<1x32xf32>
    %480 = vector.extract_strided_slice %465 {offsets = [0, 96], sizes = [1, 32], strides = [1, 1]} : vector<1x128xf32> to vector<1x32xf32>
    %481 = arith.negf %480 : vector<1x32xf32>
    %482 = math.exp %481 : vector<1x32xf32>
    %cst_122 = arith.constant 1.000000e+00 : f32
    %483 = vector.broadcast %cst_122 : f32 to vector<1x32xf32>
    %484 = arith.addf %483, %482 : vector<1x32xf32>
    %485 = arith.divf %483, %484 : vector<1x32xf32>
    %486 = arith.mulf %477, %460 : vector<1x32xf32>
    %487 = arith.mulf %471, %479 : vector<1x32xf32>
    %488 = arith.addf %486, %487 : vector<1x32xf32>
    %489 = math.tanh %488 : vector<1x32xf32>
    %490 = arith.mulf %485, %489 : vector<1x32xf32>
    %cst_123 = arith.constant dense<0.000000e+00> : vector<1x128xf32>
    %491 = tpu.matmul %490, %463, %cst_123 {dimension_numbers = #tpu.dot_dimension_numbers<[1], [0], [0], [1], [0, 0, 1, 1], [], []>} : vector<1x32xf32>, vector<32x128xf32>, vector<1x128xf32> -> vector<1x128xf32>
    %492 = arith.addf %491, %5 : vector<1x128xf32>
    %493 = vector.extract_strided_slice %492 {offsets = [0, 0], sizes = [1, 32], strides = [1, 1]} : vector<1x128xf32> to vector<1x32xf32>
    %494 = arith.negf %493 : vector<1x32xf32>
    %495 = math.exp %494 : vector<1x32xf32>
    %cst_124 = arith.constant 1.000000e+00 : f32
    %496 = vector.broadcast %cst_124 : f32 to vector<1x32xf32>
    %497 = arith.addf %496, %495 : vector<1x32xf32>
    %498 = arith.divf %496, %497 : vector<1x32xf32>
    %499 = vector.extract_strided_slice %492 {offsets = [0, 32], sizes = [1, 32], strides = [1, 1]} : vector<1x128xf32> to vector<1x32xf32>
    %500 = arith.negf %499 : vector<1x32xf32>
    %501 = math.exp %500 : vector<1x32xf32>
    %cst_125 = arith.constant 1.000000e+00 : f32
    %502 = vector.broadcast %cst_125 : f32 to vector<1x32xf32>
    %503 = arith.addf %502, %501 : vector<1x32xf32>
    %504 = arith.divf %502, %503 : vector<1x32xf32>
    %505 = vector.extract_strided_slice %492 {offsets = [0, 64], sizes = [1, 32], strides = [1, 1]} : vector<1x128xf32> to vector<1x32xf32>
    %506 = math.tanh %505 : vector<1x32xf32>
    %507 = vector.extract_strided_slice %492 {offsets = [0, 96], sizes = [1, 32], strides = [1, 1]} : vector<1x128xf32> to vector<1x32xf32>
    %508 = arith.negf %507 : vector<1x32xf32>
    %509 = math.exp %508 : vector<1x32xf32>
    %cst_126 = arith.constant 1.000000e+00 : f32
    %510 = vector.broadcast %cst_126 : f32 to vector<1x32xf32>
    %511 = arith.addf %510, %509 : vector<1x32xf32>
    %512 = arith.divf %510, %511 : vector<1x32xf32>
    %513 = arith.mulf %504, %488 : vector<1x32xf32>
    %514 = arith.mulf %498, %506 : vector<1x32xf32>
    %515 = arith.addf %513, %514 : vector<1x32xf32>
    %516 = math.tanh %515 : vector<1x32xf32>
    %517 = arith.mulf %512, %516 : vector<1x32xf32>
    %cst_127 = arith.constant dense<0.000000e+00> : vector<1x128xf32>
    %518 = tpu.matmul %517, %463, %cst_127 {dimension_numbers = #tpu.dot_dimension_numbers<[1], [0], [0], [1], [0, 0, 1, 1], [], []>} : vector<1x32xf32>, vector<32x128xf32>, vector<1x128xf32> -> vector<1x128xf32>
    %519 = arith.addf %518, %5 : vector<1x128xf32>
    %520 = vector.extract_strided_slice %519 {offsets = [0, 0], sizes = [1, 32], strides = [1, 1]} : vector<1x128xf32> to vector<1x32xf32>
    %521 = arith.negf %520 : vector<1x32xf32>
    %522 = math.exp %521 : vector<1x32xf32>
    %cst_128 = arith.constant 1.000000e+00 : f32
    %523 = vector.broadcast %cst_128 : f32 to vector<1x32xf32>
    %524 = arith.addf %523, %522 : vector<1x32xf32>
    %525 = arith.divf %523, %524 : vector<1x32xf32>
    %526 = vector.extract_strided_slice %519 {offsets = [0, 32], sizes = [1, 32], strides = [1, 1]} : vector<1x128xf32> to vector<1x32xf32>
    %527 = arith.negf %526 : vector<1x32xf32>
    %528 = math.exp %527 : vector<1x32xf32>
    %cst_129 = arith.constant 1.000000e+00 : f32
    %529 = vector.broadcast %cst_129 : f32 to vector<1x32xf32>
    %530 = arith.addf %529, %528 : vector<1x32xf32>
    %531 = arith.divf %529, %530 : vector<1x32xf32>
    %532 = vector.extract_strided_slice %519 {offsets = [0, 64], sizes = [1, 32], strides = [1, 1]} : vector<1x128xf32> to vector<1x32xf32>
    %533 = math.tanh %532 : vector<1x32xf32>
    %534 = vector.extract_strided_slice %519 {offsets = [0, 96], sizes = [1, 32], strides = [1, 1]} : vector<1x128xf32> to vector<1x32xf32>
    %535 = arith.negf %534 : vector<1x32xf32>
    %536 = math.exp %535 : vector<1x32xf32>
    %cst_130 = arith.constant 1.000000e+00 : f32
    %537 = vector.broadcast %cst_130 : f32 to vector<1x32xf32>
    %538 = arith.addf %537, %536 : vector<1x32xf32>
    %539 = arith.divf %537, %538 : vector<1x32xf32>
    %540 = arith.mulf %531, %515 : vector<1x32xf32>
    %541 = arith.mulf %525, %533 : vector<1x32xf32>
    %542 = arith.addf %540, %541 : vector<1x32xf32>
    %543 = math.tanh %542 : vector<1x32xf32>
    %544 = arith.mulf %539, %543 : vector<1x32xf32>
    %cst_131 = arith.constant dense<0.000000e+00> : vector<1x128xf32>
    %545 = tpu.matmul %544, %463, %cst_131 {dimension_numbers = #tpu.dot_dimension_numbers<[1], [0], [0], [1], [0, 0, 1, 1], [], []>} : vector<1x32xf32>, vector<32x128xf32>, vector<1x128xf32> -> vector<1x128xf32>
    %546 = arith.addf %545, %5 : vector<1x128xf32>
    %547 = vector.extract_strided_slice %546 {offsets = [0, 0], sizes = [1, 32], strides = [1, 1]} : vector<1x128xf32> to vector<1x32xf32>
    %548 = arith.negf %547 : vector<1x32xf32>
    %549 = math.exp %548 : vector<1x32xf32>
    %cst_132 = arith.constant 1.000000e+00 : f32
    %550 = vector.broadcast %cst_132 : f32 to vector<1x32xf32>
    %551 = arith.addf %550, %549 : vector<1x32xf32>
    %552 = arith.divf %550, %551 : vector<1x32xf32>
    %553 = vector.extract_strided_slice %546 {offsets = [0, 32], sizes = [1, 32], strides = [1, 1]} : vector<1x128xf32> to vector<1x32xf32>
    %554 = arith.negf %553 : vector<1x32xf32>
    %555 = math.exp %554 : vector<1x32xf32>
    %cst_133 = arith.constant 1.000000e+00 : f32
    %556 = vector.broadcast %cst_133 : f32 to vector<1x32xf32>
    %557 = arith.addf %556, %555 : vector<1x32xf32>
    %558 = arith.divf %556, %557 : vector<1x32xf32>
    %559 = vector.extract_strided_slice %546 {offsets = [0, 64], sizes = [1, 32], strides = [1, 1]} : vector<1x128xf32> to vector<1x32xf32>
    %560 = math.tanh %559 : vector<1x32xf32>
    %561 = vector.extract_strided_slice %546 {offsets = [0, 96], sizes = [1, 32], strides = [1, 1]} : vector<1x128xf32> to vector<1x32xf32>
    %562 = arith.negf %561 : vector<1x32xf32>
    %563 = math.exp %562 : vector<1x32xf32>
    %cst_134 = arith.constant 1.000000e+00 : f32
    %564 = vector.broadcast %cst_134 : f32 to vector<1x32xf32>
    %565 = arith.addf %564, %563 : vector<1x32xf32>
    %566 = arith.divf %564, %565 : vector<1x32xf32>
    %567 = arith.mulf %558, %542 : vector<1x32xf32>
    %568 = arith.mulf %552, %560 : vector<1x32xf32>
    %569 = arith.addf %567, %568 : vector<1x32xf32>
    %570 = math.tanh %569 : vector<1x32xf32>
    %571 = arith.mulf %566, %570 : vector<1x32xf32>
    %572 = tpu.concatenate %490, %517, %544, %571 in 0 : vector<1x32xf32>, vector<1x32xf32>, vector<1x32xf32>, vector<1x32xf32> -> vector<4x32xf32>
    %573 = vector.broadcast %6 : vector<1x32xf32> to vector<4x32xf32>
    %574 = arith.mulf %572, %573 : vector<4x32xf32>
    %cst_135 = arith.constant dense<0.000000e+00> : vector<4xf32>
    %575 = vector.multi_reduction <add>, %574, %cst_135 [1] : vector<4x32xf32> to vector<4xf32>
    %576 = vector.shape_cast %575 : vector<4xf32> to vector<4x1xf32>
    %577 = vector.broadcast %7 : vector<1x1xf32> to vector<4x1xf32>
    %578 = arith.addf %576, %577 : vector<4x1xf32>
    %c0_136 = arith.constant 0 : index
    %c0_137 = arith.constant 0 : index
    %c0_138 = arith.constant 0 : index
    %579 = vector.load %arg12[%c0_136, %c0_137, %c0_138] : memref<1x4x1xf32, #tpu.memory_space<vmem>>, vector<1x4x1xf32>
    %580 = vector.shape_cast %579 : vector<1x4x1xf32> to vector<4x1xf32>
    %cst_139 = arith.constant 0.000000e+00 : f32
    %581 = vector.broadcast %cst_139 : f32 to vector<4x1xf32>
    %582 = arith.maximumf %578, %581 : vector<4x1xf32>
    %583 = arith.mulf %578, %580 : vector<4x1xf32>
    %584 = arith.subf %582, %583 : vector<4x1xf32>
    %585 = math.absf %578 : vector<4x1xf32>
    %cst_140 = arith.constant 0.000000e+00 : f32
    %586 = vector.broadcast %cst_140 : f32 to vector<4x1xf32>
    %587 = arith.subf %586, %585 : vector<4x1xf32>
    %588 = math.exp %587 : vector<4x1xf32>
    %cst_141 = arith.constant 1.000000e+00 : f32
    %589 = vector.broadcast %cst_141 : f32 to vector<4x1xf32>
    %590 = arith.addf %589, %588 : vector<4x1xf32>
    %591 = math.log %590 : vector<4x1xf32>
    %592 = arith.addf %584, %591 : vector<4x1xf32>
    %593 = vector.shape_cast %592 : vector<4x1xf32> to vector<1x4x1xf32>
    %cst_142 = arith.constant dense<0.000000e+00> : vector<1xf32>
    %594 = vector.multi_reduction <add>, %593, %cst_142 [1, 2] : vector<1x4x1xf32> to vector<1xf32>
    %595 = vector.shape_cast %594 : vector<1xf32> to vector<1x1x1xf32>
    %596 = vector.extract %595[0, 0, 0] : f32 from vector<1x1x1xf32>
    %cst_143 = arith.constant 4.000000e+00 : f32
    %597 = arith.divf %596, %cst_143 : f32
    %598 = vector.broadcast %597 : f32 to vector<1x1x1xf32>
    %c0_144 = arith.constant 0 : index
    %c0_145 = arith.constant 0 : index
    %c0_146 = arith.constant 0 : index
    %599 = vector.load %arg14[%c0_144, %c0_145, %c0_146] : memref<1x1x1xf32, #tpu.memory_space<vmem>>, vector<1x1x1xf32>
    tpu.vector_store %arg14[%c0_144, %c0_145, %c0_146], %598 {strides = array<i32>} : memref<1x1x1xf32, #tpu.memory_space<vmem>>, vector<1x1x1xf32>,
    %cst_147 = arith.constant 0.000000e+00 : f32
    %600 = vector.broadcast %cst_147 : f32 to vector<125x32xf32>
    %601 = tpu.concatenate %490, %517, %544, %600 in 0 : vector<1x32xf32>, vector<1x32xf32>, vector<1x32xf32>, vector<125x32xf32> -> vector<128x32xf32>
    %cst_148 = arith.constant dense<0.000000e+00> : vector<8x128xf32>
    %602 = tpu.matmul %231, %601, %cst_148 {dimension_numbers = #tpu.dot_dimension_numbers<[1], [1], [0], [0], [0, 0, 1, 0], [], []>} : vector<8x32xf32>, vector<128x32xf32>, vector<8x128xf32> -> vector<8x128xf32>
    %603 = vector.shape_cast %602 : vector<8x128xf32> to vector<1x8x128xf32>
    %c0_149 = arith.constant 0 : index
    %c0_150 = arith.constant 0 : index
    %c0_151 = arith.constant 0 : index
    %604 = vector.load %arg13[%c0_149, %c0_150, %c0_151] : memref<1x8x128xf32, #tpu.memory_space<vmem>>, vector<1x8x128xf32>
    tpu.vector_store %arg13[%c0_149, %c0_150, %c0_151], %603 {strides = array<i32>} : memref<1x8x128xf32, #tpu.memory_space<vmem>>, vector<1x8x128xf32>,
    return
  }
  func.func @transform_0(%arg0: i32) -> (i32, i32, i32) {
    %c0_i32 = arith.constant 0 : i32
    %c0_i32_0 = arith.constant 0 : i32
    %c0_i32_1 = arith.constant 0 : i32
    return %arg0, %c0_i32, %c0_i32_0 : i32, i32, i32
  }
  func.func @transform_1(%arg0: i32) -> (i32, i32) {
    %c0_i32 = arith.constant 0 : i32
    %c0_i32_0 = arith.constant 0 : i32
    %c0_i32_1 = arith.constant 0 : i32
    return %c0_i32, %c0_i32_0 : i32, i32
  }
  func.func @transform_2(%arg0: i32) -> (i32, i32, i32) {
    %c0_i32 = arith.constant 0 : i32
    %c0_i32_0 = arith.constant 0 : i32
    %c0_i32_1 = arith.constant 0 : i32
    %c0_i32_2 = arith.constant 0 : i32
    return %c0_i32, %c0_i32_0, %c0_i32_1 : i32, i32, i32
  }
  func.func @transform_3(%arg0: i32) -> (i32, i32, i32) {
    %c0_i32 = arith.constant 0 : i32
    %c0_i32_0 = arith.constant 0 : i32
    %c0_i32_1 = arith.constant 0 : i32
    %c0_i32_2 = arith.constant 0 : i32
    return %c0_i32, %c0_i32_0, %c0_i32_1 : i32, i32, i32
  }
  func.func @transform_4(%arg0: i32) -> (i32, i32, i32) {
    %c0_i32 = arith.constant 0 : i32
    %c0_i32_0 = arith.constant 0 : i32
    %c0_i32_1 = arith.constant 0 : i32
    %c0_i32_2 = arith.constant 0 : i32
    return %c0_i32, %c0_i32_0, %c0_i32_1 : i32, i32, i32
  }
  func.func @transform_5(%arg0: i32) -> (i32, i32, i32) {
    %c0_i32 = arith.constant 0 : i32
    %c0_i32_0 = arith.constant 0 : i32
    %c0_i32_1 = arith.constant 0 : i32
    %c0_i32_2 = arith.constant 0 : i32
    return %c0_i32, %c0_i32_0, %c0_i32_1 : i32, i32, i32
  }
  func.func @transform_6(%arg0: i32) -> (i32, i32, i32) {
    %c0_i32 = arith.constant 0 : i32
    %c0_i32_0 = arith.constant 0 : i32
    %c0_i32_1 = arith.constant 0 : i32
    %c0_i32_2 = arith.constant 0 : i32
    return %c0_i32, %c0_i32_0, %c0_i32_1 : i32, i32, i32
  }
  func.func @transform_7(%arg0: i32) -> (i32, i32) {
    %c0_i32 = arith.constant 0 : i32
    %c0_i32_0 = arith.constant 0 : i32
    %c0_i32_1 = arith.constant 0 : i32
    return %c0_i32, %c0_i32_0 : i32, i32
  }
  func.func @transform_8(%arg0: i32) -> (i32, i32) {
    %c0_i32 = arith.constant 0 : i32
    %c0_i32_0 = arith.constant 0 : i32
    %c0_i32_1 = arith.constant 0 : i32
    return %c0_i32, %c0_i32_0 : i32, i32
  }
  func.func @transform_9(%arg0: i32) -> (i32, i32) {
    %c0_i32 = arith.constant 0 : i32
    %c0_i32_0 = arith.constant 0 : i32
    %c0_i32_1 = arith.constant 0 : i32
    return %c0_i32, %c0_i32_0 : i32, i32
  }
  func.func @transform_10(%arg0: i32) -> (i32, i32) {
    %c0_i32 = arith.constant 0 : i32
    %c0_i32_0 = arith.constant 0 : i32
    %c0_i32_1 = arith.constant 0 : i32
    return %c0_i32, %c0_i32_0 : i32, i32
  }
  func.func @transform_11(%arg0: i32) -> (i32, i32, i32) {
    %c0_i32 = arith.constant 0 : i32
    %c0_i32_0 = arith.constant 0 : i32
    %c0_i32_1 = arith.constant 0 : i32
    return %arg0, %c0_i32, %c0_i32_0 : i32, i32, i32
  }
  func.func @transform_12(%arg0: i32) -> (i32, i32, i32) {
    %c0_i32 = arith.constant 0 : i32
    %c0_i32_0 = arith.constant 0 : i32
    %c0_i32_1 = arith.constant 0 : i32
    return %arg0, %c0_i32, %c0_i32_0 : i32, i32, i32
  }
  func.func @transform_13(%arg0: i32) -> (i32, i32, i32) {
    %c0_i32 = arith.constant 0 : i32
    %c0_i32_0 = arith.constant 0 : i32
    %c0_i32_1 = arith.constant 0 : i32
    return %arg0, %c0_i32, %c0_i32_0 : i32, i32, i32
  }
}

</mosaic_0001>

<llo_original>
// kernel: tpu_custom_call.1
$region0: #{tpu_custom_call.1}
  #allocation0 [shape = 'u32[]', space=smem, size = 0x4, offset = 0x4, fixed_abs, tag = 'smem constant byte address 0x4 - core index']
  #allocation1 [shape = 'u32[144,128]{1,0:T(1,128)}', space=vmem, size = 0x12000, scoped, tag = 'internal scratch']
  %s0 = inlined_call_operand.hbm [shape: f32[2,8,24], index: 0, kind: input, shape index: {}]
  %s1 = inlined_call_operand.hbm [shape: f32[24,32], index: 1, kind: input, shape index: {}]
  %s2 = inlined_call_operand.vmem [shape: f32[2,32,96], index: 2, kind: input, shape index: {}]
  %s3 = inlined_call_operand.vmem [shape: f32[2,32,32], index: 3, kind: input, shape index: {}]
  %s4 = inlined_call_operand.vmem [shape: f32[2,32,64], index: 4, kind: input, shape index: {}]
  %s5 = inlined_call_operand.vmem [shape: f32[2,64,32], index: 5, kind: input, shape index: {}]
  %s6 = inlined_call_operand.hbm [shape: f32[2,8,128], index: 6, kind: input, shape index: {}]
  %s7 = inlined_call_operand.vmem [shape: f32[32,128], index: 7, kind: input, shape index: {}]
  %s8 = inlined_call_operand.hbm [shape: f32[32,128], index: 8, kind: input, shape index: {}]
  %s9 = inlined_call_operand.hbm [shape: f32[32,128], index: 9, kind: input, shape index: {}]
  %s10 = inlined_call_operand.vmem [shape: f32[8,128], index: 10, kind: input, shape index: {}]
  %s11 = inlined_call_operand.vmem [shape: f32[2,4,1], index: 11, kind: input, shape index: {}]
  %s12 = inlined_call_operand.hbm [shape: f32[2,8,128], index: 12, kind: output, shape index: {0}]
  %s13 = inlined_call_operand.vmem [shape: f32[2,1,1], index: 13, kind: output, shape index: {1}]
  %14 = xla_tuple %s12, %s13
  %s15 = sld [smem:[#allocation0]]
  $region109: #{tpu_custom_call.1} parent=0
    _
  %s17 = ssub.s32 1, %s15
  %s18 = scalar_select 0, %s17, %s15
  $region1: #{tpu_custom_call.1} parent=0
    #allocation2 [shape = 'u8[8192]{0}', space=vmem, size = 0x2000, scoped, tag = 'input window, operand 0']
    #allocation3 [shape = 's32[2]{0}', space=sflag, size = 0x8, scoped, tag = 'scoped memory for tpu_custom_call.1']
    #allocation4 [shape = 's32[2]{0}', space=sflag, size = 0x8, scoped, tag = 'scoped memory for tpu_custom_call.1']
    #allocation5 [shape = 'u8[12288]{0}', space=vmem, size = 0x3000, scoped, tag = 'input window, operand 1, single buffered']
    #allocation6 [shape = 's32[1]{0}', space=sflag, size = 0x4, scoped, tag = 'scoped memory for tpu_custom_call.1']
    #allocation7 [shape = 'u8[8192]{0}', space=vmem, size = 0x2000, scoped, tag = 'input window, operand 6, single buffered']
    #allocation8 [shape = 'u8[16384]{0}', space=vmem, size = 0x4000, scoped, tag = 'input window, operand 8, single buffered']
    #allocation9 [shape = 's32[1]{0}', space=sflag, size = 0x4, scoped, tag = 'scoped memory for tpu_custom_call.1']
    #allocation10 [shape = 'u8[16384]{0}', space=vmem, size = 0x4000, scoped, tag = 'input window, operand 9, single buffered']
    #allocation11 [shape = 'u8[8192]{0}', space=vmem, size = 0x2000, scoped, tag = 'output window, operand 0']
    %19 = vsyncpa [#allocation3], 0
    %s20 = scalar_lea.sflag [#allocation3], 1
    %21 = vsyncpa %s20, 0
    %22 = vsyncpa [#allocation6], 0
    %23 = vsyncpa [#allocation9], 0
    %24 = vsyncpa [#allocation4], 0
    %s25 = scalar_lea.sflag [#allocation4], 1
    %26 = vsyncpa %s25, 0
    loop: start=0, step=1, limit=4
    $region2: #{tpu_custom_call.1} parent=1 // loop_pre_header
      _
    $region3: #{tpu_custom_call.1} parent=1 // loop_header
      %s28 = sphi 0, %s32
      %p29 = scmp.ge.s32.totalorder %s28, 4
      %s38 = sphi 0, %s40
      %s41 = sphi 0, %s38
      %s42 = sphi 0, %s41
      %s58 = sphi 0, %s42
      %s62 = sphi 0, %s62
      %s64 = sphi 0, %s62
      %s65 = sphi 0, %s64
      %s79 = sphi 0, %s65
      %s83 = sphi 0, %s83
      %s85 = sphi 0, %s83
      %s86 = sphi 0, %s85
      %s100 = sphi 0, %s86
      %s104 = sphi 0, %s104
      %s106 = sphi 0, %s104
      %s107 = sphi 0, %s106
      %s121 = sphi 0, %s107
      %s125 = sphi 0, %s125
      %s127 = sphi 0, %s125
      %s128 = sphi 0, %s127
      %s142 = sphi 0, %s128
      %s146 = sphi 0, %s146
      %s148 = sphi 0, %s146
      %s149 = sphi 0, %s148
      %s163 = sphi 0, %s149
      %s167 = sphi 0, %s167
      %s169 = sphi 0, %s167
      %s170 = sphi 0, %s169
      %s184 = sphi 0, %s170
      %s188 = sphi 0, %s188
      %s190 = sphi 0, %s188
      %s191 = sphi 0, %s190
      %s205 = sphi 0, %s191
      %s209 = sphi 0, %s209
      %s211 = sphi 0, %s209
      %s212 = sphi 0, %s211
      %s226 = sphi 0, %s212
      %s230 = sphi 0, %s230
      %s232 = sphi 0, %s230
      %s233 = sphi 0, %s232
      %s247 = sphi 0, %s233
      %s251 = sphi 0, %s251
      %s253 = sphi 0, %s251
      %s254 = sphi 0, %s253
      %s268 = sphi 0, %s254
      %s274 = sphi 0, %s276
      %s277 = sphi 0, %s274
      %s278 = sphi 0, %s277
      %s294 = sphi 0, %s278
      %s300 = sphi 0, %s302
      %s303 = sphi 0, %s300
      %s304 = sphi 0, %s303
      %s320 = sphi 0, %s304
      %s326 = sphi 0, %s328
      %s329 = sphi 0, %s326
      %s330 = sphi 0, %s329
      %s346 = sphi 0, %s330
    $region4: #{tpu_custom_call.1} parent=1 // loop_header_branch
      %31 = sbr.rel (%p29) target = $region8
    $region5: #{tpu_custom_call.1} parent=1 // loop_body
      %s33 = ssub.s32 %s28, 1
      %s34 = ssub.s32 %s28, 2
      %s35 = sadd.s32 %s28, 1
      %s36 = ssub.s32 %s28, %s35
      %p37 = scmp.eq.s32.totalorder %s36, 0
      %s39 = sadd.s32 %s38, 1
      %s40 = scalar_select %p37, %s38, %s39
      %p43 = pneg %p37
      %p44 = scmp.eq.s32.totalorder %s28, 1
      %p45 = por %p43, %p44
      %p46 = scmp.ne.s32.totalorder %s38, %s41
      %p47 = scmp.eq.s32.totalorder %s28, 0
      %p48 = por %p46, %p47
      %p49 = scmp.ne.s32.totalorder %s38, %s41
      %p50 = scmp.eq.s32.totalorder %s33, 1
      %p51 = por %p49, %p50
      %p52 = scmp.ne.s32.totalorder %s41, %s42
      %p53 = scmp.eq.s32.totalorder %s33, 0
      %p54 = por %p52, %p53
      %p55 = scmp.ne.s32.totalorder %s41, %s42
      %p56 = scmp.eq.s32.totalorder %s34, 1
      %p57 = por %p55, %p56
      %p59 = scmp.ne.s32.totalorder %s42, %s58
      %p60 = scmp.eq.s32.totalorder %s34, 0
      %p61 = por %p59, %p60
      %s63 = sadd.s32 %s62, 1
      %p66 = scmp.eq.s32.totalorder %s28, 1
      %p67 = scmp.ne.s32.totalorder %s62, %s64
      %p68 = scmp.eq.s32.totalorder %s28, 0
      %p69 = por %p67, %p68
      %p70 = scmp.ne.s32.totalorder %s62, %s64
      %p71 = scmp.eq.s32.totalorder %s33, 1
      %p72 = por %p70, %p71
      %p73 = scmp.ne.s32.totalorder %s64, %s65
      %p74 = scmp.eq.s32.totalorder %s33, 0
      %p75 = por %p73, %p74
      %p76 = scmp.ne.s32.totalorder %s64, %s65
      %p77 = scmp.eq.s32.totalorder %s34, 1
      %p78 = por %p76, %p77
      %p80 = scmp.ne.s32.totalorder %s65, %s79
      %p81 = scmp.eq.s32.totalorder %s34, 0
      %p82 = por %p80, %p81
      %s84 = sadd.s32 %s83, 1
      %p87 = scmp.eq.s32.totalorder %s28, 1
      %p88 = scmp.ne.s32.totalorder %s83, %s85
      %p89 = scmp.eq.s32.totalorder %s28, 0
      %p90 = por %p88, %p89
      %p91 = scmp.ne.s32.totalorder %s83, %s85
      %p92 = scmp.eq.s32.totalorder %s33, 1
      %p93 = por %p91, %p92
      %p94 = scmp.ne.s32.totalorder %s85, %s86
      %p95 = scmp.eq.s32.totalorder %s33, 0
      %p96 = por %p94, %p95
      %p97 = scmp.ne.s32.totalorder %s85, %s86
      %p98 = scmp.eq.s32.totalorder %s34, 1
      %p99 = por %p97, %p98
      %p101 = scmp.ne.s32.totalorder %s86, %s100
      %p102 = scmp.eq.s32.totalorder %s34, 0
      %p103 = por %p101, %p102
      %s105 = sadd.s32 %s104, 1
      %p108 = scmp.eq.s32.totalorder %s28, 1
      %p109 = scmp.ne.s32.totalorder %s104, %s106
      %p110 = scmp.eq.s32.totalorder %s28, 0
      %p111 = por %p109, %p110
      %p112 = scmp.ne.s32.totalorder %s104, %s106
      %p113 = scmp.eq.s32.totalorder %s33, 1
      %p114 = por %p112, %p113
      %p115 = scmp.ne.s32.totalorder %s106, %s107
      %p116 = scmp.eq.s32.totalorder %s33, 0
      %p117 = por %p115, %p116
      %p118 = scmp.ne.s32.totalorder %s106, %s107
      %p119 = scmp.eq.s32.totalorder %s34, 1
      %p120 = por %p118, %p119
      %p122 = scmp.ne.s32.totalorder %s107, %s121
      %p123 = scmp.eq.s32.totalorder %s34, 0
      %p124 = por %p122, %p123
      %s126 = sadd.s32 %s125, 1
      %p129 = scmp.eq.s32.totalorder %s28, 1
      %p130 = scmp.ne.s32.totalorder %s125, %s127
      %p131 = scmp.eq.s32.totalorder %s28, 0
      %p132 = por %p130, %p131
      %p133 = scmp.ne.s32.totalorder %s125, %s127
      %p134 = scmp.eq.s32.totalorder %s33, 1
      %p135 = por %p133, %p134
      %p136 = scmp.ne.s32.totalorder %s127, %s128
      %p137 = scmp.eq.s32.totalorder %s33, 0
      %p138 = por %p136, %p137
      %p139 = scmp.ne.s32.totalorder %s127, %s128
      %p140 = scmp.eq.s32.totalorder %s34, 1
      %p141 = por %p139, %p140
      %p143 = scmp.ne.s32.totalorder %s128, %s142
      %p144 = scmp.eq.s32.totalorder %s34, 0
      %p145 = por %p143, %p144
      %s147 = sadd.s32 %s146, 1
      %p150 = scmp.eq.s32.totalorder %s28, 1
      %p151 = scmp.ne.s32.totalorder %s146, %s148
      %p152 = scmp.eq.s32.totalorder %s28, 0
      %p153 = por %p151, %p152
      %p154 = scmp.ne.s32.totalorder %s146, %s148
      %p155 = scmp.eq.s32.totalorder %s33, 1
      %p156 = por %p154, %p155
      %p157 = scmp.ne.s32.totalorder %s148, %s149
      %p158 = scmp.eq.s32.totalorder %s33, 0
      %p159 = por %p157, %p158
      %p160 = scmp.ne.s32.totalorder %s148, %s149
      %p161 = scmp.eq.s32.totalorder %s34, 1
      %p162 = por %p160, %p161
      %p164 = scmp.ne.s32.totalorder %s149, %s163
      %p165 = scmp.eq.s32.totalorder %s34, 0
      %p166 = por %p164, %p165
      %s168 = sadd.s32 %s167, 1
      %p171 = scmp.eq.s32.totalorder %s28, 1
      %p172 = scmp.ne.s32.totalorder %s167, %s169
      %p173 = scmp.eq.s32.totalorder %s28, 0
      %p174 = por %p172, %p173
      %p175 = scmp.ne.s32.totalorder %s167, %s169
      %p176 = scmp.eq.s32.totalorder %s33, 1
      %p177 = por %p175, %p176
      %p178 = scmp.ne.s32.totalorder %s169, %s170
      %p179 = scmp.eq.s32.totalorder %s33, 0
      %p180 = por %p178, %p179
      %p181 = scmp.ne.s32.totalorder %s169, %s170
      %p182 = scmp.eq.s32.totalorder %s34, 1
      %p183 = por %p181, %p182
      %p185 = scmp.ne.s32.totalorder %s170, %s184
      %p186 = scmp.eq.s32.totalorder %s34, 0
      %p187 = por %p185, %p186
      %s189 = sadd.s32 %s188, 1
      %p192 = scmp.eq.s32.totalorder %s28, 1
      %p193 = scmp.ne.s32.totalorder %s188, %s190
      %p194 = scmp.eq.s32.totalorder %s28, 0
      %p195 = por %p193, %p194
      %p196 = scmp.ne.s32.totalorder %s188, %s190
      %p197 = scmp.eq.s32.totalorder %s33, 1
      %p198 = por %p196, %p197
      %p199 = scmp.ne.s32.totalorder %s190, %s191
      %p200 = scmp.eq.s32.totalorder %s33, 0
      %p201 = por %p199, %p200
      %p202 = scmp.ne.s32.totalorder %s190, %s191
      %p203 = scmp.eq.s32.totalorder %s34, 1
      %p204 = por %p202, %p203
      %p206 = scmp.ne.s32.totalorder %s191, %s205
      %p207 = scmp.eq.s32.totalorder %s34, 0
      %p208 = por %p206, %p207
      %s210 = sadd.s32 %s209, 1
      %p213 = scmp.eq.s32.totalorder %s28, 1
      %p214 = scmp.ne.s32.totalorder %s209, %s211
      %p215 = scmp.eq.s32.totalorder %s28, 0
      %p216 = por %p214, %p215
      %p217 = scmp.ne.s32.totalorder %s209, %s211
      %p218 = scmp.eq.s32.totalorder %s33, 1
      %p219 = por %p217, %p218
      %p220 = scmp.ne.s32.totalorder %s211, %s212
      %p221 = scmp.eq.s32.totalorder %s33, 0
      %p222 = por %p220, %p221
      %p223 = scmp.ne.s32.totalorder %s211, %s212
      %p224 = scmp.eq.s32.totalorder %s34, 1
      %p225 = por %p223, %p224
      %p227 = scmp.ne.s32.totalorder %s212, %s226
      %p228 = scmp.eq.s32.totalorder %s34, 0
      %p229 = por %p227, %p228
      %s231 = sadd.s32 %s230, 1
      %p234 = scmp.eq.s32.totalorder %s28, 1
      %p235 = scmp.ne.s32.totalorder %s230, %s232
      %p236 = scmp.eq.s32.totalorder %s28, 0
      %p237 = por %p235, %p236
      %p238 = scmp.ne.s32.totalorder %s230, %s232
      %p239 = scmp.eq.s32.totalorder %s33, 1
      %p240 = por %p238, %p239
      %p241 = scmp.ne.s32.totalorder %s232, %s233
      %p242 = scmp.eq.s32.totalorder %s33, 0
      %p243 = por %p241, %p242
      %p244 = scmp.ne.s32.totalorder %s232, %s233
      %p245 = scmp.eq.s32.totalorder %s34, 1
      %p246 = por %p244, %p245
      %p248 = scmp.ne.s32.totalorder %s233, %s247
      %p249 = scmp.eq.s32.totalorder %s34, 0
      %p250 = por %p248, %p249
      %s252 = sadd.s32 %s251, 1
      %p255 = scmp.eq.s32.totalorder %s28, 1
      %p256 = scmp.ne.s32.totalorder %s251, %s253
      %p257 = scmp.eq.s32.totalorder %s28, 0
      %p258 = por %p256, %p257
      %p259 = scmp.ne.s32.totalorder %s251, %s253
      %p260 = scmp.eq.s32.totalorder %s33, 1
      %p261 = por %p259, %p260
      %p262 = scmp.ne.s32.totalorder %s253, %s254
      %p263 = scmp.eq.s32.totalorder %s33, 0
      %p264 = por %p262, %p263
      %p265 = scmp.ne.s32.totalorder %s253, %s254
      %p266 = scmp.eq.s32.totalorder %s34, 1
      %p267 = por %p265, %p266
      %p269 = scmp.ne.s32.totalorder %s254, %s268
      %p270 = scmp.eq.s32.totalorder %s34, 0
      %p271 = por %p269, %p270
      %s272 = ssub.s32 %s28, %s35
      %p273 = scmp.eq.s32.totalorder %s272, 0
      %s275 = sadd.s32 %s274, 1
      %s276 = scalar_select %p273, %s274, %s275
      %p279 = pneg %p273
      %p280 = scmp.eq.s32.totalorder %s28, 1
      %p281 = por %p279, %p280
      %p282 = scmp.ne.s32.totalorder %s274, %s277
      %p283 = scmp.eq.s32.totalorder %s28, 0
      %p284 = por %p282, %p283
      %p285 = scmp.ne.s32.totalorder %s274, %s277
      %p286 = scmp.eq.s32.totalorder %s33, 1
      %p287 = por %p285, %p286
      %p288 = scmp.ne.s32.totalorder %s277, %s278
      %p289 = scmp.eq.s32.totalorder %s33, 0
      %p290 = por %p288, %p289
      %p291 = scmp.ne.s32.totalorder %s277, %s278
      %p292 = scmp.eq.s32.totalorder %s34, 1
      %p293 = por %p291, %p292
      %p295 = scmp.ne.s32.totalorder %s278, %s294
      %p296 = scmp.eq.s32.totalorder %s34, 0
      %p297 = por %p295, %p296
      %s298 = ssub.s32 %s28, %s35
      %p299 = scmp.eq.s32.totalorder %s298, 0
      %s301 = sadd.s32 %s300, 1
      %s302 = scalar_select %p299, %s300, %s301
      %p305 = pneg %p299
      %p306 = scmp.eq.s32.totalorder %s28, 1
      %p307 = por %p305, %p306
      %p308 = scmp.ne.s32.totalorder %s300, %s303
      %p309 = scmp.eq.s32.totalorder %s28, 0
      %p310 = por %p308, %p309
      %p311 = scmp.ne.s32.totalorder %s300, %s303
      %p312 = scmp.eq.s32.totalorder %s33, 1
      %p313 = por %p311, %p312
      %p314 = scmp.ne.s32.totalorder %s303, %s304
      %p315 = scmp.eq.s32.totalorder %s33, 0
      %p316 = por %p314, %p315
      %p317 = scmp.ne.s32.totalorder %s303, %s304
      %p318 = scmp.eq.s32.totalorder %s34, 1
      %p319 = por %p317, %p318
      %p321 = scmp.ne.s32.totalorder %s304, %s320
      %p322 = scmp.eq.s32.totalorder %s34, 0
      %p323 = por %p321, %p322
      %s324 = ssub.s32 %s28, %s35
      %p325 = scmp.eq.s32.totalorder %s324, 0
      %s327 = sadd.s32 %s326, 1
      %s328 = scalar_select %p325, %s326, %s327
      %p331 = pneg %p325
      %p332 = scmp.eq.s32.totalorder %s28, 1
      %p333 = por %p331, %p332
      %p334 = scmp.ne.s32.totalorder %s326, %s329
      %p335 = scmp.eq.s32.totalorder %s28, 0
      %p336 = por %p334, %p335
      %p337 = scmp.ne.s32.totalorder %s326, %s329
      %p338 = scmp.eq.s32.totalorder %s33, 1
      %p339 = por %p337, %p338
      %p340 = scmp.ne.s32.totalorder %s329, %s330
      %p341 = scmp.eq.s32.totalorder %s33, 0
      %p342 = por %p340, %p341
      %p343 = scmp.ne.s32.totalorder %s329, %s330
      %p344 = scmp.eq.s32.totalorder %s34, 1
      %p345 = por %p343, %p344
      %p347 = scmp.ne.s32.totalorder %s330, %s346
      %p348 = scmp.eq.s32.totalorder %s34, 0
      %p349 = por %p347, %p348
      %p350 = scmp.le.s32.totalorder 1, %s28
      %p351 = scmp.lt.s32.totalorder %s28, 3
      %p352 = pnand %p350, %p351
      %p353 = pneg %p352
      // Predicated region
      $region9: #{tpu_custom_call.1} parent=5 // pred_check
        _
      $region10: #{tpu_custom_call.1} parent=5 // pred_check_branch
        %355 = sbr.rel (%p352) target = $region12
      $region11: #{tpu_custom_call.1} parent=5 // pred_region
        %s356 = ssub.s32 %s28, 1
        // Predicated region
        $region13: #{tpu_custom_call.1} parent=11 // pred_check
          %p357 = pneg %p75
        $region14: #{tpu_custom_call.1} parent=11 // pred_check_branch
          %359 = sbr.rel (%p357) target = $region16
        $region15: #{tpu_custom_call.1} parent=11 // pred_region
          %s361 = ssub.s32 384, 384
          %362 = vsyncadd [#allocation6], %s361
          %s363 = sshll.u32 [#allocation5], 4
          %s364 = int_to_ptr.vmem [resolvable:$true] %s363
          %369 = dma.hbm_to_vmem [thread:$0]  %s1, 384, %s364, [#allocation6], 128, 128, 8
        $region16: #{tpu_custom_call.1} parent=11 // pred_fallthru
          _
        // Predicated region
        $region17: #{tpu_custom_call.1} parent=11 // pred_check
          %p370 = pneg %p96
        $region18: #{tpu_custom_call.1} parent=11 // pred_check_branch
          %372 = sbr.rel (%p370) target = $region20
        $region19: #{tpu_custom_call.1} parent=11 // pred_region
          _
        $region20: #{tpu_custom_call.1} parent=11 // pred_fallthru
          _
        // Predicated region
        $region21: #{tpu_custom_call.1} parent=11 // pred_check
          %p373 = pneg %p117
        $region22: #{tpu_custom_call.1} parent=11 // pred_check_branch
          %375 = sbr.rel (%p373) target = $region24
        $region23: #{tpu_custom_call.1} parent=11 // pred_region
          _
        $region24: #{tpu_custom_call.1} parent=11 // pred_fallthru
          _
        // Predicated region
        $region25: #{tpu_custom_call.1} parent=11 // pred_check
          %p376 = pneg %p138
        $region26: #{tpu_custom_call.1} parent=11 // pred_check_branch
          %378 = sbr.rel (%p376) target = $region28
        $region27: #{tpu_custom_call.1} parent=11 // pred_region
          _
        $region28: #{tpu_custom_call.1} parent=11 // pred_fallthru
          _
        // Predicated region
        $region29: #{tpu_custom_call.1} parent=11 // pred_check
          %p379 = pneg %p159
        $region30: #{tpu_custom_call.1} parent=11 // pred_check_branch
          %381 = sbr.rel (%p379) target = $region32
        $region31: #{tpu_custom_call.1} parent=11 // pred_region
          _
        $region32: #{tpu_custom_call.1} parent=11 // pred_fallthru
          _
        // Predicated region
        $region33: #{tpu_custom_call.1} parent=11 // pred_check
          %p382 = pneg %p180
        $region34: #{tpu_custom_call.1} parent=11 // pred_check_branch
          %384 = sbr.rel (%p382) target = $region36
        $region35: #{tpu_custom_call.1} parent=11 // pred_region
          %s386 = ssub.s32 256, 256
          %387 = vsyncadd [#allocation6], %s386
          %s388 = sshll.u32 [#allocation7], 4
          %s389 = int_to_ptr.vmem [resolvable:$true] %s388
          %394 = dma.hbm_to_vmem [thread:$0]  %s6, 256, %s389, [#allocation6], 128, 128, 8
        $region36: #{tpu_custom_call.1} parent=11 // pred_fallthru
          _
        // Predicated region
        $region37: #{tpu_custom_call.1} parent=11 // pred_check
          %p395 = pneg %p201
        $region38: #{tpu_custom_call.1} parent=11 // pred_check_branch
          %397 = sbr.rel (%p395) target = $region40
        $region39: #{tpu_custom_call.1} parent=11 // pred_region
          _
        $region40: #{tpu_custom_call.1} parent=11 // pred_fallthru
          _
        // Predicated region
        $region41: #{tpu_custom_call.1} parent=11 // pred_check
          %p398 = pneg %p222
        $region42: #{tpu_custom_call.1} parent=11 // pred_check_branch
          %400 = sbr.rel (%p398) target = $region44
        $region43: #{tpu_custom_call.1} parent=11 // pred_region
          %s402 = ssub.s32 512, 512
          %403 = vsyncadd [#allocation9], %s402
          %s404 = sshll.u32 [#allocation8], 4
          %s405 = int_to_ptr.vmem [resolvable:$true] %s404
          %410 = dma.hbm_to_vmem [thread:$0]  %s8, 512, %s405, [#allocation9], 128, 128, 8
        $region44: #{tpu_custom_call.1} parent=11 // pred_fallthru
          _
        // Predicated region
        $region45: #{tpu_custom_call.1} parent=11 // pred_check
          %p411 = pneg %p243
        $region46: #{tpu_custom_call.1} parent=11 // pred_check_branch
          %413 = sbr.rel (%p411) target = $region48
        $region47: #{tpu_custom_call.1} parent=11 // pred_region
          %s415 = ssub.s32 512, 512
          %416 = vsyncadd [#allocation9], %s415
          %s417 = sshll.u32 [#allocation10], 4
          %s418 = int_to_ptr.vmem [resolvable:$true] %s417
          %423 = dma.hbm_to_vmem [thread:$0]  %s9, 512, %s418, [#allocation9], 128, 128, 8
        $region48: #{tpu_custom_call.1} parent=11 // pred_fallthru
          _
        // Predicated region
        $region49: #{tpu_custom_call.1} parent=11 // pred_check
          %p424 = pneg %p264
        $region50: #{tpu_custom_call.1} parent=11 // pred_check_branch
          %426 = sbr.rel (%p424) target = $region52
        $region51: #{tpu_custom_call.1} parent=11 // pred_region
          _
        $region52: #{tpu_custom_call.1} parent=11 // pred_fallthru
          _
      $region12: #{tpu_custom_call.1} parent=5 // pred_fallthru
        _
      %p427 = scmp.lt.s32.totalorder %s28, 2
      // Predicated region
      $region53: #{tpu_custom_call.1} parent=5 // pred_check
        %p428 = pneg %p427
      $region54: #{tpu_custom_call.1} parent=5 // pred_check_branch
        %430 = sbr.rel (%p428) target = $region56
      $region55: #{tpu_custom_call.1} parent=5 // pred_region
        // Predicated region
        $region57: #{tpu_custom_call.1} parent=55 // pred_check
          %p431 = pneg %p48
        $region58: #{tpu_custom_call.1} parent=55 // pred_check_branch
          %433 = sbr.rel (%p431) target = $region60
        $region59: #{tpu_custom_call.1} parent=55 // pred_region
          %s434 = sand.u32 %s38, 1
          %s435 = scalar_lea.sflag [#allocation3], %s434
          %s436 = sand.u32 %s38, 1
          %s437 = smul.addr %s436, 8
          %s438 = scalar_lea.vmem [#allocation2], %s437
          %s440 = ssub.s32 128, 128
          %441 = vsyncadd %s435, %s440
          %s442 = smul.addr %s28, 128
          %s443 = scalar_lea.hbm %s0, %s442
          %s445 = sshll.u32 %s438, 4
          %s446 = int_to_ptr.vmem [resolvable:$true] %s445
          %448 = dma.hbm_to_vmem [thread:$0]  %s443, 128, %s446, %s435
        $region60: #{tpu_custom_call.1} parent=55 // pred_fallthru
          _
        // Predicated region
        $region61: #{tpu_custom_call.1} parent=55 // pred_check
          %p449 = pneg %p284
        $region62: #{tpu_custom_call.1} parent=55 // pred_check_branch
          %451 = sbr.rel (%p449) target = $region64
        $region63: #{tpu_custom_call.1} parent=55 // pred_region
          %p452 = scmp.lt.s32.totalorder %s28, 1
          %s453 = scalar_select %p452, %s28, 1
          %s454 = smul.addr %s453, 4
          %s455 = scalar_lea.vmem %s11, %s454
        $region64: #{tpu_custom_call.1} parent=55 // pred_fallthru
          _
      $region56: #{tpu_custom_call.1} parent=5 // pred_fallthru
        _
      %p456 = scmp.le.s32.totalorder 1, %s28
      %p457 = scmp.lt.s32.totalorder %s28, 3
      %p458 = pnand %p456, %p457
      %p459 = pneg %p458
      // Predicated region
      $region65: #{tpu_custom_call.1} parent=5 // pred_check
        _
      $region66: #{tpu_custom_call.1} parent=5 // pred_check_branch
        %461 = sbr.rel (%p458) target = $region68
      $region67: #{tpu_custom_call.1} parent=5 // pred_region
        %s462 = ssub.s32 %s28, 1
        %s463 = sand.u32 %s41, 1
        %s464 = scalar_lea.sflag [#allocation3], %s463
        %s465 = sand.u32 %s41, 1
        %s466 = smul.addr %s465, 8
        %s467 = scalar_lea.vmem [#allocation2], %s466
        // Predicated region
        $region69: #{tpu_custom_call.1} parent=67 // pred_check
          %p468 = pneg %p54
        $region70: #{tpu_custom_call.1} parent=67 // pred_check_branch
          %470 = sbr.rel (%p468) target = $region72
        $region71: #{tpu_custom_call.1} parent=67 // pred_region
          %471 = dma.done %s464, 128
        $region72: #{tpu_custom_call.1} parent=67 // pred_fallthru
          _
        // Predicated region
        $region73: #{tpu_custom_call.1} parent=67 // pred_check
          %p472 = pneg %p75
        $region74: #{tpu_custom_call.1} parent=67 // pred_check_branch
          %474 = sbr.rel (%p472) target = $region76
        $region75: #{tpu_custom_call.1} parent=67 // pred_region
          %475 = dma.done [#allocation6], 384
        $region76: #{tpu_custom_call.1} parent=67 // pred_fallthru
          _
        // Predicated region
        $region77: #{tpu_custom_call.1} parent=67 // pred_check
          %p476 = pneg %p180
        $region78: #{tpu_custom_call.1} parent=67 // pred_check_branch
          %478 = sbr.rel (%p476) target = $region80
        $region79: #{tpu_custom_call.1} parent=67 // pred_region
          %479 = dma.done [#allocation6], 256
        $region80: #{tpu_custom_call.1} parent=67 // pred_fallthru
          _
        // Predicated region
        $region81: #{tpu_custom_call.1} parent=67 // pred_check
          %p480 = pneg %p222
        $region82: #{tpu_custom_call.1} parent=67 // pred_check_branch
          %482 = sbr.rel (%p480) target = $region84
        $region83: #{tpu_custom_call.1} parent=67 // pred_region
          %483 = dma.done [#allocation9], 512
        $region84: #{tpu_custom_call.1} parent=67 // pred_fallthru
          _
        // Predicated region
        $region85: #{tpu_custom_call.1} parent=67 // pred_check
          %p484 = pneg %p243
        $region86: #{tpu_custom_call.1} parent=67 // pred_check_branch
          %486 = sbr.rel (%p484) target = $region88
        $region87: #{tpu_custom_call.1} parent=67 // pred_region
          %487 = dma.done [#allocation9], 512
        $region88: #{tpu_custom_call.1} parent=67 // pred_fallthru
          _
        %s488 = sand.u32 %s41, 1
        %s489 = scalar_lea.sflag [#allocation3], %s488
        %s490 = sand.u32 %s41, 1
        %s491 = smul.addr %s490, 8
        %s492 = scalar_lea.vmem [#allocation2], %s491
        %p493 = pneg %p54
        %p494 = pneg %p51
        %p495 = pneg %p75
        %p496 = pneg %p72
        %p497 = pneg %p96
        %p498 = pneg %p93
        %p499 = pneg %p117
        %p500 = pneg %p114
        %p501 = pneg %p138
        %p502 = pneg %p135
        %p503 = pneg %p159
        %p504 = pneg %p156
        %p505 = pneg %p180
        %p506 = pneg %p177
        %p507 = pneg %p201
        %p508 = pneg %p198
        %p509 = pneg %p222
        %p510 = pneg %p219
        %p511 = pneg %p243
        %p512 = pneg %p240
        %p513 = pneg %p264
        %p514 = pneg %p261
        %p515 = scmp.lt.s32.totalorder %s33, 1
        %s516 = scalar_select %p515, %s33, 1
        %s517 = smul.addr %s516, 4
        %s518 = scalar_lea.vmem %s11, %s517
        %p519 = pneg %p290
        %p520 = pneg %p287
        %p521 = pneg %p316
        %p522 = pneg %p313
        %s523 = sand.u32 %s303, 1
        %s524 = scalar_lea.sflag [#allocation4], %s523
        %s525 = sand.u32 %s303, 1
        %s526 = smul.addr %s525, 8
        %s527 = scalar_lea.vmem [#allocation11], %s526
        %p528 = pneg %p342
        %p529 = pneg %p339
        %p530 = scmp.lt.s32.totalorder %s33, 1
        %s531 = scalar_select %p530, %s33, 1
        %s532 = scalar_lea.vmem %s13, %s531
        %p533 = scmp.lt.s32.totalorder %s33, 1
        %s534 = scalar_select %p533, %s33, 1
        %s535 = smul.addr %s534, 4
        %s536 = scalar_lea.vmem %s11, %s535
        %p537 = scmp.lt.s32.totalorder %s33, 1
        %s538 = scalar_select %p537, %s33, 1
        %s539 = scalar_lea.vmem %s13, %s538
        %v540 = vld [vmem:[%s10] sm:$0xff]
        %v541 = vld [vmem:[%s467] sm:$0xff]
        %v542 = vld [vmem:[#allocation5] sm:$0xff]
        %v543 = vld [vmem:[#allocation5 + $0x8] sm:$0xff]
        %v544 = vld [vmem:[#allocation5 + $0x10] sm:$0xff]
        %v545 = vlaneseq
        %v546 = vshrl.u32 %v545, 7
        %v547 = vsub.s32 0, %v546
        %v548 = vrot.slane %v540, %v547
        %vm549 = vcmask 195584
        %v551 = vsel %vm549, %v541, 0
        %553 = vmatprep.subr.mxu0 0.0
        %554 = vmatpush1.msra.mxu0 %v542
        %555 = vmatprep.subr.mxu0 0.0
        %556 = vmatpush1.msra.mxu0 %v543
        %557 = vmatprep.subr.mxu0 0.0
        %558 = vmatpush1.msra.mxu0 %v544
        %559 = vmatprep.subr.mxu0 0.0
        %560 = vmatpush1.msra.mxu0 0.0
        %561 = vmatprep.subr.mxu0 0.0
        %562 = vmatpush1.msra.mxu0 0.0
        %563 = vmatprep.subr.mxu0 0.0
        %564 = vmatpush1.msra.mxu0 0.0
        %565 = vmatprep.subr.mxu0 0.0
        %566 = vmatpush1.msra.mxu0 0.0
        %567 = vmatprep.subr.mxu0 0.0
        %568 = vmatpush1.msra.mxu0 0.0
        %569 = vmatprep.subr.mxu0 0.0
        %570 = vmatpush1.msra.mxu0 0.0
        %571 = vmatprep.subr.mxu0 0.0
        %572 = vmatpush1.msra.mxu0 0.0
        %573 = vmatprep.subr.mxu0 0.0
        %574 = vmatpush1.msra.mxu0 0.0
        %575 = vmatprep.subr.mxu0 0.0
        %576 = vmatpush1.msra.mxu0 0.0
        %577 = vmatprep.subr.mxu0 0.0
        %578 = vmatpush1.msra.mxu0 0.0
        %579 = vmatprep.subr.mxu0 0.0
        %580 = vmatpush1.msra.mxu0 0.0
        %581 = vmatprep.subr.mxu0 0.0
        %582 = vmatpush1.msra.mxu0 0.0
        %583 = vmatprep.subr.mxu0 0.0
        %584 = vmatpush1.msra.mxu0 0.0
        %585 = vmatprep.subr.mxu0 0.0
        %586 = vmatpush1.msra.mxu0 0.0
        %587 = vmatprep.subr.mxu0 0.0
        %588 = vmatpush1.msra.mxu0 0.0
        %589 = vmatprep.subr.mxu0 0.0
        %590 = vmatpush1.msra.mxu0 0.0
        %591 = vmatprep.subr.mxu0 0.0
        %592 = vmatpush1.msra.mxu0 0.0
        %593 = vmatprep.subr.mxu0 0.0
        %594 = vmatpush1.msra.mxu0 0.0
        %595 = vmatprep.subr.mxu0 0.0
        %596 = vmatpush1.msra.mxu0 0.0
        %597 = vmatprep.subr.mxu0 0.0
        %598 = vmatpush1.msra.mxu0 0.0
        %599 = vmatprep.subr.mxu0 0.0
        %600 = vmatpush1.msra.mxu0 0.0
        %601 = vmatprep.subr.mxu0 0.0
        %602 = vmatpush1.msra.mxu0 0.0
        %603 = vmatprep.subr.mxu0 0.0
        %604 = vmatpush1.msra.mxu0 0.0
        %605 = vmatprep.subr.mxu0 0.0
        %606 = vmatpush1.msra.mxu0 0.0
        %607 = vmatprep.subr.mxu0 0.0
        %608 = vmatpush1.msra.mxu0 0.0
        %609 = vmatprep.subr.mxu0 0.0
        %610 = vmatpush1.msra.mxu0 0.0
        %611 = vmatprep.subr.mxu0 0.0
        %612 = vmatpush1.msra.mxu0 0.0
        %613 = vmatprep.subr.mxu0 0.0
        %614 = vmatpush1.msra.mxu0 0.0
        %615 = vmatprep.subr.mxu0 0.0
        %616 = vmatpush1.msra.mxu0 0.0
        %617 = vmatprep.mubr.f32.mxu0 0.0
        %618 = vmatmul.mubr.f32.gmra.mrb[0].mxu0 %v551
        %v619 = vpop.f32.mrb[0].mxu0
        %v620 = vadd.f32 %v548, %v619
        %v621 = vpop.f32.mrb[0].mxu0
        %622 = vdwg.mxu0
        %v623 = vld [vmem:[#allocation7] sm:$0xff]
        %vm624 = vcmask 261120
        %v625 = vsel %vm624, %v620, 0.0
        %626 = vadd.xlane.f32.xlu0 %v625
        %v627 = vpop.xlane.xlu0 %626
        %v628 = vrcp.pop 32.0
        %v629 = vmul.f32 %v627, %v628
        %v630 = vsub.f32 %v620, %v629
        %v631 = vmul.f32 %v630, %v630
        %v632 = vsel %vm624, %v631, 0.0
        %633 = vadd.xlane.f32.xlu0 %v632
        %v634 = vpop.xlane.xlu0 %633
        %v635 = vmul.f32 %v634, %v628
        %v636 = vadd.f32 %v635, 1e-05
        %v637 = vrsqrt.pop %v636
        %v638 = vmul.f32 %v630, %v637
        %v639 = vlaneseq
        %v640 = vshrl.u32 %v639, 7
        %v641 = vsub.s32 0, %v640
        %v642 = vrot.slane %v623, %v641
        %v643 = vmul.f32 %v638, %v642
        %v644 = vlaneseq
        %v645 = vshrl.u32 %v644, 7
        %v646 = vsub.s32 1, %v645
        %v647 = vrot.slane %v623, %v646
        %v648 = vadd.f32 %v643, %v647
        %v649 = vld [vmem:[%s2] sm:$0xff]
        %v650 = vld [vmem:[%s2 + $0x8] sm:$0xff]
        %v651 = vld [vmem:[%s2 + $0x10] sm:$0xff]
        %v652 = vld [vmem:[%s2 + $0x18] sm:$0xff]
        %v653 = vlaneseq
        %v654 = vshrl.u32 %v653, 7
        %v655 = vsub.s32 2, %v654
        %v656 = vrot.slane %v623, %v655
        %v658 = vsel %vm624, %v648, 0
        %660 = vmatprep.subr.mxu0 0.0
        %661 = vmatpush1.msra.mxu0 %v649
        %662 = vmatprep.subr.mxu0 0.0
        %663 = vmatpush1.msra.mxu0 %v650
        %664 = vmatprep.subr.mxu0 0.0
        %665 = vmatpush1.msra.mxu0 %v651
        %666 = vmatprep.subr.mxu0 0.0
        %667 = vmatpush1.msra.mxu0 %v652
        %668 = vmatprep.subr.mxu0 0.0
        %669 = vmatpush1.msra.mxu0 0.0
        %670 = vmatprep.subr.mxu0 0.0
        %671 = vmatpush1.msra.mxu0 0.0
        %672 = vmatprep.subr.mxu0 0.0
        %673 = vmatpush1.msra.mxu0 0.0
        %674 = vmatprep.subr.mxu0 0.0
        %675 = vmatpush1.msra.mxu0 0.0
        %676 = vmatprep.subr.mxu0 0.0
        %677 = vmatpush1.msra.mxu0 0.0
        %678 = vmatprep.subr.mxu0 0.0
        %679 = vmatpush1.msra.mxu0 0.0
        %680 = vmatprep.subr.mxu0 0.0
        %681 = vmatpush1.msra.mxu0 0.0
        %682 = vmatprep.subr.mxu0 0.0
        %683 = vmatpush1.msra.mxu0 0.0
        %684 = vmatprep.subr.mxu0 0.0
        %685 = vmatpush1.msra.mxu0 0.0
        %686 = vmatprep.subr.mxu0 0.0
        %687 = vmatpush1.msra.mxu0 0.0
        %688 = vmatprep.subr.mxu0 0.0
        %689 = vmatpush1.msra.mxu0 0.0
        %690 = vmatprep.subr.mxu0 0.0
        %691 = vmatpush1.msra.mxu0 0.0
        %692 = vmatprep.subr.mxu0 0.0
        %693 = vmatpush1.msra.mxu0 0.0
        %694 = vmatprep.subr.mxu0 0.0
        %695 = vmatpush1.msra.mxu0 0.0
        %696 = vmatprep.subr.mxu0 0.0
        %697 = vmatpush1.msra.mxu0 0.0
        %698 = vmatprep.subr.mxu0 0.0
        %699 = vmatpush1.msra.mxu0 0.0
        %700 = vmatprep.subr.mxu0 0.0
        %701 = vmatpush1.msra.mxu0 0.0
        %702 = vmatprep.subr.mxu0 0.0
        %703 = vmatpush1.msra.mxu0 0.0
        %704 = vmatprep.subr.mxu0 0.0
        %705 = vmatpush1.msra.mxu0 0.0
        %706 = vmatprep.subr.mxu0 0.0
        %707 = vmatpush1.msra.mxu0 0.0
        %708 = vmatprep.subr.mxu0 0.0
        %709 = vmatpush1.msra.mxu0 0.0
        %710 = vmatprep.subr.mxu0 0.0
        %711 = vmatpush1.msra.mxu0 0.0
        %712 = vmatprep.subr.mxu0 0.0
        %713 = vmatpush1.msra.mxu0 0.0
        %714 = vmatprep.subr.mxu0 0.0
        %715 = vmatpush1.msra.mxu0 0.0
        %716 = vmatprep.subr.mxu0 0.0
        %717 = vmatpush1.msra.mxu0 0.0
        %718 = vmatprep.subr.mxu0 0.0
        %719 = vmatpush1.msra.mxu0 0.0
        %720 = vmatprep.subr.mxu0 0.0
        %721 = vmatpush1.msra.mxu0 0.0
        %722 = vmatprep.subr.mxu0 0.0
        %723 = vmatpush1.msra.mxu0 0.0
        %724 = vmatprep.mubr.f32.mxu0 0.0
        %725 = vmatmul.mubr.f32.gmra.mrb[0].mxu0 %v658
        %v726 = vpop.f32.mrb[0].mxu0
        %v727 = vadd.f32 %v656, %v726
        %v728 = vpop.f32.mrb[0].mxu0
        %729 = vdwg.mxu0
        %731 = vrot.lane.b32.xlu0 %v727, 120
        %v732 = vpop.permute.xlu0 %731
        %733 = vrot.lane.b32.xlu0 %v727, 112
        %v734 = vpop.permute.xlu0 %733
        %735 = vrot.lane.b32.xlu0 %v727, 104
        %v736 = vpop.permute.xlu0 %735
        %737 = vrot.lane.b32.xlu0 %v727, 96
        %v738 = vpop.permute.xlu0 %737
        %739 = vrot.lane.b32.xlu0 %v732, 96
        %v740 = vpop.permute.xlu0 %739
        %741 = vrot.lane.b32.xlu0 %v734, 96
        %v742 = vpop.permute.xlu0 %741
        %743 = vrot.lane.b32.xlu0 %v736, 96
        %v744 = vpop.permute.xlu0 %743
        %749 = vxpose.xlu0.b32.start [1/16] %v738, 128
        %750 = vxpose.xlu0.b32.cont [2/16] 0.0, 128
        %751 = vxpose.xlu0.b32.cont [3/16] 0.0, 128
        %752 = vxpose.xlu0.b32.cont [4/16] 0.0, 128
        %753 = vxpose.xlu0.b32.cont [5/16] 0.0, 128
        %754 = vxpose.xlu0.b32.cont [6/16] 0.0, 128
        %755 = vxpose.xlu0.b32.cont [7/16] 0.0, 128
        %756 = vxpose.xlu0.b32.cont [8/16] 0.0, 128
        %757 = vxpose.xlu0.b32.cont [9/16] 0.0, 128
        %758 = vxpose.xlu0.b32.cont [10/16] 0.0, 128
        %759 = vxpose.xlu0.b32.cont [11/16] 0.0, 128
        %760 = vxpose.xlu0.b32.cont [12/16] 0.0, 128
        %761 = vxpose.xlu0.b32.cont [13/16] 0.0, 128
        %762 = vxpose.xlu0.b32.cont [14/16] 0.0, 128
        %763 = vxpose.xlu0.b32.cont [15/16] 0.0, 128
        %764 = vxpose.xlu0.b32.end [16/16] 0.0, 128
        %v765 = vpop.trf.xlu0
        %v766 = vpop.trf.xlu0
        %v767 = vpop.trf.xlu0
        %v768 = vpop.trf.xlu0
        %v769 = vpop.trf.xlu0
        %v770 = vpop.trf.xlu0
        %v771 = vpop.trf.xlu0
        %v772 = vpop.trf.xlu0
        %v773 = vpop.trf.xlu0
        %v774 = vpop.trf.xlu0
        %v775 = vpop.trf.xlu0
        %v776 = vpop.trf.xlu0
        %v777 = vpop.trf.xlu0
        %v778 = vpop.trf.xlu0
        %v779 = vpop.trf.xlu0
        %v780 = vpop.trf.xlu0
        %781 = vxpose.xlu0.b32.start [1/16] %v740, 128
        %782 = vxpose.xlu0.b32.cont [2/16] 0.0, 128
        %783 = vxpose.xlu0.b32.cont [3/16] 0.0, 128
        %784 = vxpose.xlu0.b32.cont [4/16] 0.0, 128
        %785 = vxpose.xlu0.b32.cont [5/16] 0.0, 128
        %786 = vxpose.xlu0.b32.cont [6/16] 0.0, 128
        %787 = vxpose.xlu0.b32.cont [7/16] 0.0, 128
        %788 = vxpose.xlu0.b32.cont [8/16] 0.0, 128
        %789 = vxpose.xlu0.b32.cont [9/16] 0.0, 128
        %790 = vxpose.xlu0.b32.cont [10/16] 0.0, 128
        %791 = vxpose.xlu0.b32.cont [11/16] 0.0, 128
        %792 = vxpose.xlu0.b32.cont [12/16] 0.0, 128
        %793 = vxpose.xlu0.b32.cont [13/16] 0.0, 128
        %794 = vxpose.xlu0.b32.cont [14/16] 0.0, 128
        %795 = vxpose.xlu0.b32.cont [15/16] 0.0, 128
        %796 = vxpose.xlu0.b32.end [16/16] 0.0, 128
        %v797 = vpop.trf.xlu0
        %v798 = vpop.trf.xlu0
        %v799 = vpop.trf.xlu0
        %v800 = vpop.trf.xlu0
        %v801 = vpop.trf.xlu0
        %v802 = vpop.trf.xlu0
        %v803 = vpop.trf.xlu0
        %v804 = vpop.trf.xlu0
        %v805 = vpop.trf.xlu0
        %v806 = vpop.trf.xlu0
        %v807 = vpop.trf.xlu0
        %v808 = vpop.trf.xlu0
        %v809 = vpop.trf.xlu0
        %v810 = vpop.trf.xlu0
        %v811 = vpop.trf.xlu0
        %v812 = vpop.trf.xlu0
        %813 = vxpose.xlu0.b32.start [1/16] %v742, 128
        %814 = vxpose.xlu0.b32.cont [2/16] 0.0, 128
        %815 = vxpose.xlu0.b32.cont [3/16] 0.0, 128
        %816 = vxpose.xlu0.b32.cont [4/16] 0.0, 128
        %817 = vxpose.xlu0.b32.cont [5/16] 0.0, 128
        %818 = vxpose.xlu0.b32.cont [6/16] 0.0, 128
        %819 = vxpose.xlu0.b32.cont [7/16] 0.0, 128
        %820 = vxpose.xlu0.b32.cont [8/16] 0.0, 128
        %821 = vxpose.xlu0.b32.cont [9/16] 0.0, 128
        %822 = vxpose.xlu0.b32.cont [10/16] 0.0, 128
        %823 = vxpose.xlu0.b32.cont [11/16] 0.0, 128
        %824 = vxpose.xlu0.b32.cont [12/16] 0.0, 128
        %825 = vxpose.xlu0.b32.cont [13/16] 0.0, 128
        %826 = vxpose.xlu0.b32.cont [14/16] 0.0, 128
        %827 = vxpose.xlu0.b32.cont [15/16] 0.0, 128
        %828 = vxpose.xlu0.b32.end [16/16] 0.0, 128
        %v829 = vpop.trf.xlu0
        %v830 = vpop.trf.xlu0
        %v831 = vpop.trf.xlu0
        %v832 = vpop.trf.xlu0
        %v833 = vpop.trf.xlu0
        %v834 = vpop.trf.xlu0
        %v835 = vpop.trf.xlu0
        %v836 = vpop.trf.xlu0
        %v837 = vpop.trf.xlu0
        %v838 = vpop.trf.xlu0
        %v839 = vpop.trf.xlu0
        %v840 = vpop.trf.xlu0
        %v841 = vpop.trf.xlu0
        %v842 = vpop.trf.xlu0
        %v843 = vpop.trf.xlu0
        %v844 = vpop.trf.xlu0
        %845 = vxpose.xlu0.b32.start [1/16] %v744, 128
        %846 = vxpose.xlu0.b32.cont [2/16] 0.0, 128
        %847 = vxpose.xlu0.b32.cont [3/16] 0.0, 128
        %848 = vxpose.xlu0.b32.cont [4/16] 0.0, 128
        %849 = vxpose.xlu0.b32.cont [5/16] 0.0, 128
        %850 = vxpose.xlu0.b32.cont [6/16] 0.0, 128
        %851 = vxpose.xlu0.b32.cont [7/16] 0.0, 128
        %852 = vxpose.xlu0.b32.cont [8/16] 0.0, 128
        %853 = vxpose.xlu0.b32.cont [9/16] 0.0, 128
        %854 = vxpose.xlu0.b32.cont [10/16] 0.0, 128
        %855 = vxpose.xlu0.b32.cont [11/16] 0.0, 128
        %856 = vxpose.xlu0.b32.cont [12/16] 0.0, 128
        %857 = vxpose.xlu0.b32.cont [13/16] 0.0, 128
        %858 = vxpose.xlu0.b32.cont [14/16] 0.0, 128
        %859 = vxpose.xlu0.b32.cont [15/16] 0.0, 128
        %860 = vxpose.xlu0.b32.end [16/16] 0.0, 128
        %v861 = vpop.trf.xlu0
        %v862 = vpop.trf.xlu0
        %v863 = vpop.trf.xlu0
        %v864 = vpop.trf.xlu0
        %v865 = vpop.trf.xlu0
        %v866 = vpop.trf.xlu0
        %v867 = vpop.trf.xlu0
        %v868 = vpop.trf.xlu0
        %v869 = vpop.trf.xlu0
        %v870 = vpop.trf.xlu0
        %v871 = vpop.trf.xlu0
        %v872 = vpop.trf.xlu0
        %v873 = vpop.trf.xlu0
        %v874 = vpop.trf.xlu0
        %v875 = vpop.trf.xlu0
        %v876 = vpop.trf.xlu0
        %vm877 = vcmask 64512
        %v878 = vsel %vm877, %v727, 0
        %880 = vmatprep.subr.mxu0 0.0
        %881 = vmatpush1.msra.mxu0 %v765
        %882 = vmatprep.subr.mxu0 0.0
        %883 = vmatpush1.msra.mxu0 0.0
        %884 = vmatprep.subr.mxu0 0.0
        %885 = vmatpush1.msra.mxu0 0.0
        %886 = vmatprep.subr.mxu0 0.0
        %887 = vmatpush1.msra.mxu0 0.0
        %888 = vmatprep.subr.mxu0 0.0
        %889 = vmatpush1.msra.mxu0 0.0
        %890 = vmatprep.subr.mxu0 0.0
        %891 = vmatpush1.msra.mxu0 0.0
        %892 = vmatprep.subr.mxu0 0.0
        %893 = vmatpush1.msra.mxu0 0.0
        %894 = vmatprep.subr.mxu0 0.0
        %895 = vmatpush1.msra.mxu0 0.0
        %896 = vmatprep.subr.mxu0 0.0
        %897 = vmatpush1.msra.mxu0 0.0
        %898 = vmatprep.subr.mxu0 0.0
        %899 = vmatpush1.msra.mxu0 0.0
        %900 = vmatprep.subr.mxu0 0.0
        %901 = vmatpush1.msra.mxu0 0.0
        %902 = vmatprep.subr.mxu0 0.0
        %903 = vmatpush1.msra.mxu0 0.0
        %904 = vmatprep.subr.mxu0 0.0
        %905 = vmatpush1.msra.mxu0 0.0
        %906 = vmatprep.subr.mxu0 0.0
        %907 = vmatpush1.msra.mxu0 0.0
        %908 = vmatprep.subr.mxu0 0.0
        %909 = vmatpush1.msra.mxu0 0.0
        %910 = vmatprep.subr.mxu0 0.0
        %911 = vmatpush1.msra.mxu0 0.0
        %912 = vmatprep.subr.mxu0 0.0
        %913 = vmatpush1.msra.mxu0 0.0
        %914 = vmatprep.subr.mxu0 0.0
        %915 = vmatpush1.msra.mxu0 0.0
        %916 = vmatprep.subr.mxu0 0.0
        %917 = vmatpush1.msra.mxu0 0.0
        %918 = vmatprep.subr.mxu0 0.0
        %919 = vmatpush1.msra.mxu0 0.0
        %920 = vmatprep.subr.mxu0 0.0
        %921 = vmatpush1.msra.mxu0 0.0
        %922 = vmatprep.subr.mxu0 0.0
        %923 = vmatpush1.msra.mxu0 0.0
        %924 = vmatprep.subr.mxu0 0.0
        %925 = vmatpush1.msra.mxu0 0.0
        %926 = vmatprep.subr.mxu0 0.0
        %927 = vmatpush1.msra.mxu0 0.0
        %928 = vmatprep.subr.mxu0 0.0
        %929 = vmatpush1.msra.mxu0 0.0
        %930 = vmatprep.subr.mxu0 0.0
        %931 = vmatpush1.msra.mxu0 0.0
        %932 = vmatprep.subr.mxu0 0.0
        %933 = vmatpush1.msra.mxu0 0.0
        %934 = vmatprep.subr.mxu0 0.0
        %935 = vmatpush1.msra.mxu0 0.0
        %936 = vmatprep.subr.mxu0 0.0
        %937 = vmatpush1.msra.mxu0 0.0
        %938 = vmatprep.subr.mxu0 0.0
        %939 = vmatpush1.msra.mxu0 0.0
        %940 = vmatprep.subr.mxu0 0.0
        %941 = vmatpush1.msra.mxu0 0.0
        %942 = vmatprep.subr.mxu0 0.0
        %943 = vmatpush1.msra.mxu0 0.0
        %944 = vmatprep.mubr.f32.mxu0 0.0
        %945 = vmatmul.mubr.f32.gmra.mrb[0].mxu0 %v878
        %v946 = vpop.f32.mrb[0].mxu0
        %v947 = vadd.f32 0.0, %v946
        %v948 = vpop.f32.mrb[0].mxu0
        %949 = vdwg.mxu0
        %v950 = vsel %vm877, %v732, 0
        %952 = vmatprep.subr.mxu0 0.0
        %953 = vmatpush1.msra.mxu0 %v797
        %954 = vmatprep.subr.mxu0 0.0
        %955 = vmatpush1.msra.mxu0 0.0
        %956 = vmatprep.subr.mxu0 0.0
        %957 = vmatpush1.msra.mxu0 0.0
        %958 = vmatprep.subr.mxu0 0.0
        %959 = vmatpush1.msra.mxu0 0.0
        %960 = vmatprep.subr.mxu0 0.0
        %961 = vmatpush1.msra.mxu0 0.0
        %962 = vmatprep.subr.mxu0 0.0
        %963 = vmatpush1.msra.mxu0 0.0
        %964 = vmatprep.subr.mxu0 0.0
        %965 = vmatpush1.msra.mxu0 0.0
        %966 = vmatprep.subr.mxu0 0.0
        %967 = vmatpush1.msra.mxu0 0.0
        %968 = vmatprep.subr.mxu0 0.0
        %969 = vmatpush1.msra.mxu0 0.0
        %970 = vmatprep.subr.mxu0 0.0
        %971 = vmatpush1.msra.mxu0 0.0
        %972 = vmatprep.subr.mxu0 0.0
        %973 = vmatpush1.msra.mxu0 0.0
        %974 = vmatprep.subr.mxu0 0.0
        %975 = vmatpush1.msra.mxu0 0.0
        %976 = vmatprep.subr.mxu0 0.0
        %977 = vmatpush1.msra.mxu0 0.0
        %978 = vmatprep.subr.mxu0 0.0
        %979 = vmatpush1.msra.mxu0 0.0
        %980 = vmatprep.subr.mxu0 0.0
        %981 = vmatpush1.msra.mxu0 0.0
        %982 = vmatprep.subr.mxu0 0.0
        %983 = vmatpush1.msra.mxu0 0.0
        %984 = vmatprep.subr.mxu0 0.0
        %985 = vmatpush1.msra.mxu0 0.0
        %986 = vmatprep.subr.mxu0 0.0
        %987 = vmatpush1.msra.mxu0 0.0
        %988 = vmatprep.subr.mxu0 0.0
        %989 = vmatpush1.msra.mxu0 0.0
        %990 = vmatprep.subr.mxu0 0.0
        %991 = vmatpush1.msra.mxu0 0.0
        %992 = vmatprep.subr.mxu0 0.0
        %993 = vmatpush1.msra.mxu0 0.0
        %994 = vmatprep.subr.mxu0 0.0
        %995 = vmatpush1.msra.mxu0 0.0
        %996 = vmatprep.subr.mxu0 0.0
        %997 = vmatpush1.msra.mxu0 0.0
        %998 = vmatprep.subr.mxu0 0.0
        %999 = vmatpush1.msra.mxu0 0.0
        %1000 = vmatprep.subr.mxu0 0.0
        %1001 = vmatpush1.msra.mxu0 0.0
        %1002 = vmatprep.subr.mxu0 0.0
        %1003 = vmatpush1.msra.mxu0 0.0
        %1004 = vmatprep.subr.mxu0 0.0
        %1005 = vmatpush1.msra.mxu0 0.0
        %1006 = vmatprep.subr.mxu0 0.0
        %1007 = vmatpush1.msra.mxu0 0.0
        %1008 = vmatprep.subr.mxu0 0.0
        %1009 = vmatpush1.msra.mxu0 0.0
        %1010 = vmatprep.subr.mxu0 0.0
        %1011 = vmatpush1.msra.mxu0 0.0
        %1012 = vmatprep.subr.mxu0 0.0
        %1013 = vmatpush1.msra.mxu0 0.0
        %1014 = vmatprep.subr.mxu0 0.0
        %1015 = vmatpush1.msra.mxu0 0.0
        %1016 = vmatprep.mubr.f32.mxu0 0.0
        %1017 = vmatmul.mubr.f32.gmra.mrb[0].mxu0 %v950
        %v1018 = vpop.f32.mrb[0].mxu0
        %v1019 = vadd.f32 0.0, %v1018
        %v1020 = vpop.f32.mrb[0].mxu0
        %1021 = vdwg.mxu0
        %v1022 = vsel %vm877, %v734, 0
        %1024 = vmatprep.subr.mxu0 0.0
        %1025 = vmatpush1.msra.mxu0 %v829
        %1026 = vmatprep.subr.mxu0 0.0
        %1027 = vmatpush1.msra.mxu0 0.0
        %1028 = vmatprep.subr.mxu0 0.0
        %1029 = vmatpush1.msra.mxu0 0.0
        %1030 = vmatprep.subr.mxu0 0.0
        %1031 = vmatpush1.msra.mxu0 0.0
        %1032 = vmatprep.subr.mxu0 0.0
        %1033 = vmatpush1.msra.mxu0 0.0
        %1034 = vmatprep.subr.mxu0 0.0
        %1035 = vmatpush1.msra.mxu0 0.0
        %1036 = vmatprep.subr.mxu0 0.0
        %1037 = vmatpush1.msra.mxu0 0.0
        %1038 = vmatprep.subr.mxu0 0.0
        %1039 = vmatpush1.msra.mxu0 0.0
        %1040 = vmatprep.subr.mxu0 0.0
        %1041 = vmatpush1.msra.mxu0 0.0
        %1042 = vmatprep.subr.mxu0 0.0
        %1043 = vmatpush1.msra.mxu0 0.0
        %1044 = vmatprep.subr.mxu0 0.0
        %1045 = vmatpush1.msra.mxu0 0.0
        %1046 = vmatprep.subr.mxu0 0.0
        %1047 = vmatpush1.msra.mxu0 0.0
        %1048 = vmatprep.subr.mxu0 0.0
        %1049 = vmatpush1.msra.mxu0 0.0
        %1050 = vmatprep.subr.mxu0 0.0
        %1051 = vmatpush1.msra.mxu0 0.0
        %1052 = vmatprep.subr.mxu0 0.0
        %1053 = vmatpush1.msra.mxu0 0.0
        %1054 = vmatprep.subr.mxu0 0.0
        %1055 = vmatpush1.msra.mxu0 0.0
        %1056 = vmatprep.subr.mxu0 0.0
        %1057 = vmatpush1.msra.mxu0 0.0
        %1058 = vmatprep.subr.mxu0 0.0
        %1059 = vmatpush1.msra.mxu0 0.0
        %1060 = vmatprep.subr.mxu0 0.0
        %1061 = vmatpush1.msra.mxu0 0.0
        %1062 = vmatprep.subr.mxu0 0.0
        %1063 = vmatpush1.msra.mxu0 0.0
        %1064 = vmatprep.subr.mxu0 0.0
        %1065 = vmatpush1.msra.mxu0 0.0
        %1066 = vmatprep.subr.mxu0 0.0
        %1067 = vmatpush1.msra.mxu0 0.0
        %1068 = vmatprep.subr.mxu0 0.0
        %1069 = vmatpush1.msra.mxu0 0.0
        %1070 = vmatprep.subr.mxu0 0.0
        %1071 = vmatpush1.msra.mxu0 0.0
        %1072 = vmatprep.subr.mxu0 0.0
        %1073 = vmatpush1.msra.mxu0 0.0
        %1074 = vmatprep.subr.mxu0 0.0
        %1075 = vmatpush1.msra.mxu0 0.0
        %1076 = vmatprep.subr.mxu0 0.0
        %1077 = vmatpush1.msra.mxu0 0.0
        %1078 = vmatprep.subr.mxu0 0.0
        %1079 = vmatpush1.msra.mxu0 0.0
        %1080 = vmatprep.subr.mxu0 0.0
        %1081 = vmatpush1.msra.mxu0 0.0
        %1082 = vmatprep.subr.mxu0 0.0
        %1083 = vmatpush1.msra.mxu0 0.0
        %1084 = vmatprep.subr.mxu0 0.0
        %1085 = vmatpush1.msra.mxu0 0.0
        %1086 = vmatprep.subr.mxu0 0.0
        %1087 = vmatpush1.msra.mxu0 0.0
        %1088 = vmatprep.mubr.f32.mxu0 0.0
        %1089 = vmatmul.mubr.f32.gmra.mrb[0].mxu0 %v1022
        %v1090 = vpop.f32.mrb[0].mxu0
        %v1091 = vadd.f32 0.0, %v1090
        %v1092 = vpop.f32.mrb[0].mxu0
        %1093 = vdwg.mxu0
        %v1094 = vsel %vm877, %v736, 0
        %1096 = vmatprep.subr.mxu0 0.0
        %1097 = vmatpush1.msra.mxu0 %v861
        %1098 = vmatprep.subr.mxu0 0.0
        %1099 = vmatpush1.msra.mxu0 0.0
        %1100 = vmatprep.subr.mxu0 0.0
        %1101 = vmatpush1.msra.mxu0 0.0
        %1102 = vmatprep.subr.mxu0 0.0
        %1103 = vmatpush1.msra.mxu0 0.0
        %1104 = vmatprep.subr.mxu0 0.0
        %1105 = vmatpush1.msra.mxu0 0.0
        %1106 = vmatprep.subr.mxu0 0.0
        %1107 = vmatpush1.msra.mxu0 0.0
        %1108 = vmatprep.subr.mxu0 0.0
        %1109 = vmatpush1.msra.mxu0 0.0
        %1110 = vmatprep.subr.mxu0 0.0
        %1111 = vmatpush1.msra.mxu0 0.0
        %1112 = vmatprep.subr.mxu0 0.0
        %1113 = vmatpush1.msra.mxu0 0.0
        %1114 = vmatprep.subr.mxu0 0.0
        %1115 = vmatpush1.msra.mxu0 0.0
        %1116 = vmatprep.subr.mxu0 0.0
        %1117 = vmatpush1.msra.mxu0 0.0
        %1118 = vmatprep.subr.mxu0 0.0
        %1119 = vmatpush1.msra.mxu0 0.0
        %1120 = vmatprep.subr.mxu0 0.0
        %1121 = vmatpush1.msra.mxu0 0.0
        %1122 = vmatprep.subr.mxu0 0.0
        %1123 = vmatpush1.msra.mxu0 0.0
        %1124 = vmatprep.subr.mxu0 0.0
        %1125 = vmatpush1.msra.mxu0 0.0
        %1126 = vmatprep.subr.mxu0 0.0
        %1127 = vmatpush1.msra.mxu0 0.0
        %1128 = vmatprep.subr.mxu0 0.0
        %1129 = vmatpush1.msra.mxu0 0.0
        %1130 = vmatprep.subr.mxu0 0.0
        %1131 = vmatpush1.msra.mxu0 0.0
        %1132 = vmatprep.subr.mxu0 0.0
        %1133 = vmatpush1.msra.mxu0 0.0
        %1134 = vmatprep.subr.mxu0 0.0
        %1135 = vmatpush1.msra.mxu0 0.0
        %1136 = vmatprep.subr.mxu0 0.0
        %1137 = vmatpush1.msra.mxu0 0.0
        %1138 = vmatprep.subr.mxu0 0.0
        %1139 = vmatpush1.msra.mxu0 0.0
        %1140 = vmatprep.subr.mxu0 0.0
        %1141 = vmatpush1.msra.mxu0 0.0
        %1142 = vmatprep.subr.mxu0 0.0
        %1143 = vmatpush1.msra.mxu0 0.0
        %1144 = vmatprep.subr.mxu0 0.0
        %1145 = vmatpush1.msra.mxu0 0.0
        %1146 = vmatprep.subr.mxu0 0.0
        %1147 = vmatpush1.msra.mxu0 0.0
        %1148 = vmatprep.subr.mxu0 0.0
        %1149 = vmatpush1.msra.mxu0 0.0
        %1150 = vmatprep.subr.mxu0 0.0
        %1151 = vmatpush1.msra.mxu0 0.0
        %1152 = vmatprep.subr.mxu0 0.0
        %1153 = vmatpush1.msra.mxu0 0.0
        %1154 = vmatprep.subr.mxu0 0.0
        %1155 = vmatpush1.msra.mxu0 0.0
        %1156 = vmatprep.subr.mxu0 0.0
        %1157 = vmatpush1.msra.mxu0 0.0
        %1158 = vmatprep.subr.mxu0 0.0
        %1159 = vmatpush1.msra.mxu0 0.0
        %1160 = vmatprep.mubr.f32.mxu0 0.0
        %1161 = vmatmul.mubr.f32.gmra.mrb[0].mxu0 %v1094
        %v1162 = vpop.f32.mrb[0].mxu0
        %v1163 = vadd.f32 0.0, %v1162
        %v1164 = vpop.f32.mrb[0].mxu0
        %1165 = vdwg.mxu0
        %v1166 = vsel %vm877, %v947, -inf
        %1167 = vmax.xlane.f32.xlu0 %v1166
        %v1168 = vpop.xlane.xlu0 %1167
        %v1169 = vsel %vm877, %v1019, -inf
        %1170 = vmax.xlane.f32.xlu0 %v1169
        %v1171 = vpop.xlane.xlu0 %1170
        %v1172 = vsel %vm877, %v1091, -inf
        %1173 = vmax.xlane.f32.xlu0 %v1172
        %v1174 = vpop.xlane.xlu0 %1173
        %v1175 = vsel %vm877, %v1163, -inf
        %1176 = vmax.xlane.f32.xlu0 %v1175
        %v1177 = vpop.xlane.xlu0 %1176
        %v1178 = vsub.f32 %v947, %v1168
        %v1179 = vsub.f32 %v1019, %v1171
        %v1180 = vsub.f32 %v1091, %v1174
        %v1181 = vsub.f32 %v1163, %v1177
        %v1182 = vmul.f32 %v1178, 1.442695
        %v1183 = vpow.pop %v1182
        %v1184 = vmul.f32 %v1179, 1.442695
        %v1185 = vpow.pop %v1184
        %v1186 = vmul.f32 %v1180, 1.442695
        %v1187 = vpow.pop %v1186
        %v1188 = vmul.f32 %v1181, 1.442695
        %v1189 = vpow.pop %v1188
        %v1190 = vsel %vm877, %v1183, 0.0
        %1191 = vadd.xlane.f32.xlu0 %v1190
        %v1192 = vpop.xlane.xlu0 %1191
        %v1193 = vsel %vm877, %v1185, 0.0
        %1194 = vadd.xlane.f32.xlu0 %v1193
        %v1195 = vpop.xlane.xlu0 %1194
        %v1196 = vsel %vm877, %v1187, 0.0
        %1197 = vadd.xlane.f32.xlu0 %v1196
        %v1198 = vpop.xlane.xlu0 %1197
        %v1199 = vsel %vm877, %v1189, 0.0
        %1200 = vadd.xlane.f32.xlu0 %v1199
        %v1201 = vpop.xlane.xlu0 %1200
        %v1202 = vrcp.pop %v1192
        %v1203 = vrcp.pop %v1195
        %v1204 = vrcp.pop %v1198
        %v1205 = vrcp.pop %v1201
        %v1206 = vmul.f32 %v1183, %v1202
        %v1207 = vmul.f32 %v1185, %v1203
        %v1208 = vmul.f32 %v1187, %v1204
        %v1209 = vmul.f32 %v1189, %v1205
        %1210 = vrot.lane.b32.xlu0 %v727, 64
        %v1211 = vpop.permute.xlu0 %1210
        %1212 = vrot.lane.b32.xlu0 %v732, 64
        %v1213 = vpop.permute.xlu0 %1212
        %1214 = vrot.lane.b32.xlu0 %v734, 64
        %v1215 = vpop.permute.xlu0 %1214
        %1216 = vrot.lane.b32.xlu0 %v736, 64
        %v1217 = vpop.permute.xlu0 %1216
        %1222 = vxpose.xlu0.b32.start [1/16] %v1211, 128
        %1223 = vxpose.xlu0.b32.cont [2/16] 0.0, 128
        %1224 = vxpose.xlu0.b32.cont [3/16] 0.0, 128
        %1225 = vxpose.xlu0.b32.cont [4/16] 0.0, 128
        %1226 = vxpose.xlu0.b32.cont [5/16] 0.0, 128
        %1227 = vxpose.xlu0.b32.cont [6/16] 0.0, 128
        %1228 = vxpose.xlu0.b32.cont [7/16] 0.0, 128
        %1229 = vxpose.xlu0.b32.cont [8/16] 0.0, 128
        %1230 = vxpose.xlu0.b32.cont [9/16] 0.0, 128
        %1231 = vxpose.xlu0.b32.cont [10/16] 0.0, 128
        %1232 = vxpose.xlu0.b32.cont [11/16] 0.0, 128
        %1233 = vxpose.xlu0.b32.cont [12/16] 0.0, 128
        %1234 = vxpose.xlu0.b32.cont [13/16] 0.0, 128
        %1235 = vxpose.xlu0.b32.cont [14/16] 0.0, 128
        %1236 = vxpose.xlu0.b32.cont [15/16] 0.0, 128
        %1237 = vxpose.xlu0.b32.end [16/16] 0.0, 128
        %v1238 = vpop.trf.xlu0
        %v1239 = vpop.trf.xlu0
        %v1240 = vpop.trf.xlu0
        %v1241 = vpop.trf.xlu0
        %v1242 = vpop.trf.xlu0
        %v1243 = vpop.trf.xlu0
        %v1244 = vpop.trf.xlu0
        %v1245 = vpop.trf.xlu0
        %v1246 = vpop.trf.xlu0
        %v1247 = vpop.trf.xlu0
        %v1248 = vpop.trf.xlu0
        %v1249 = vpop.trf.xlu0
        %v1250 = vpop.trf.xlu0
        %v1251 = vpop.trf.xlu0
        %v1252 = vpop.trf.xlu0
        %v1253 = vpop.trf.xlu0
        %1254 = vxpose.xlu0.b32.start [1/16] %v1213, 128
        %1255 = vxpose.xlu0.b32.cont [2/16] 0.0, 128
        %1256 = vxpose.xlu0.b32.cont [3/16] 0.0, 128
        %1257 = vxpose.xlu0.b32.cont [4/16] 0.0, 128
        %1258 = vxpose.xlu0.b32.cont [5/16] 0.0, 128
        %1259 = vxpose.xlu0.b32.cont [6/16] 0.0, 128
        %1260 = vxpose.xlu0.b32.cont [7/16] 0.0, 128
        %1261 = vxpose.xlu0.b32.cont [8/16] 0.0, 128
        %1262 = vxpose.xlu0.b32.cont [9/16] 0.0, 128
        %1263 = vxpose.xlu0.b32.cont [10/16] 0.0, 128
        %1264 = vxpose.xlu0.b32.cont [11/16] 0.0, 128
        %1265 = vxpose.xlu0.b32.cont [12/16] 0.0, 128
        %1266 = vxpose.xlu0.b32.cont [13/16] 0.0, 128
        %1267 = vxpose.xlu0.b32.cont [14/16] 0.0, 128
        %1268 = vxpose.xlu0.b32.cont [15/16] 0.0, 128
        %1269 = vxpose.xlu0.b32.end [16/16] 0.0, 128
        %v1270 = vpop.trf.xlu0
        %v1271 = vpop.trf.xlu0
        %v1272 = vpop.trf.xlu0
        %v1273 = vpop.trf.xlu0
        %v1274 = vpop.trf.xlu0
        %v1275 = vpop.trf.xlu0
        %v1276 = vpop.trf.xlu0
        %v1277 = vpop.trf.xlu0
        %v1278 = vpop.trf.xlu0
        %v1279 = vpop.trf.xlu0
        %v1280 = vpop.trf.xlu0
        %v1281 = vpop.trf.xlu0
        %v1282 = vpop.trf.xlu0
        %v1283 = vpop.trf.xlu0
        %v1284 = vpop.trf.xlu0
        %v1285 = vpop.trf.xlu0
        %1286 = vxpose.xlu0.b32.start [1/16] %v1215, 128
        %1287 = vxpose.xlu0.b32.cont [2/16] 0.0, 128
        %1288 = vxpose.xlu0.b32.cont [3/16] 0.0, 128
        %1289 = vxpose.xlu0.b32.cont [4/16] 0.0, 128
        %1290 = vxpose.xlu0.b32.cont [5/16] 0.0, 128
        %1291 = vxpose.xlu0.b32.cont [6/16] 0.0, 128
        %1292 = vxpose.xlu0.b32.cont [7/16] 0.0, 128
        %1293 = vxpose.xlu0.b32.cont [8/16] 0.0, 128
        %1294 = vxpose.xlu0.b32.cont [9/16] 0.0, 128
        %1295 = vxpose.xlu0.b32.cont [10/16] 0.0, 128
        %1296 = vxpose.xlu0.b32.cont [11/16] 0.0, 128
        %1297 = vxpose.xlu0.b32.cont [12/16] 0.0, 128
        %1298 = vxpose.xlu0.b32.cont [13/16] 0.0, 128
        %1299 = vxpose.xlu0.b32.cont [14/16] 0.0, 128
        %1300 = vxpose.xlu0.b32.cont [15/16] 0.0, 128
        %1301 = vxpose.xlu0.b32.end [16/16] 0.0, 128
        %v1302 = vpop.trf.xlu0
        %v1303 = vpop.trf.xlu0
        %v1304 = vpop.trf.xlu0
        %v1305 = vpop.trf.xlu0
        %v1306 = vpop.trf.xlu0
        %v1307 = vpop.trf.xlu0
        %v1308 = vpop.trf.xlu0
        %v1309 = vpop.trf.xlu0
        %v1310 = vpop.trf.xlu0
        %v1311 = vpop.trf.xlu0
        %v1312 = vpop.trf.xlu0
        %v1313 = vpop.trf.xlu0
        %v1314 = vpop.trf.xlu0
        %v1315 = vpop.trf.xlu0
        %v1316 = vpop.trf.xlu0
        %v1317 = vpop.trf.xlu0
        %1318 = vxpose.xlu0.b32.start [1/16] %v1217, 128
        %1319 = vxpose.xlu0.b32.cont [2/16] 0.0, 128
        %1320 = vxpose.xlu0.b32.cont [3/16] 0.0, 128
        %1321 = vxpose.xlu0.b32.cont [4/16] 0.0, 128
        %1322 = vxpose.xlu0.b32.cont [5/16] 0.0, 128
        %1323 = vxpose.xlu0.b32.cont [6/16] 0.0, 128
        %1324 = vxpose.xlu0.b32.cont [7/16] 0.0, 128
        %1325 = vxpose.xlu0.b32.cont [8/16] 0.0, 128
        %1326 = vxpose.xlu0.b32.cont [9/16] 0.0, 128
        %1327 = vxpose.xlu0.b32.cont [10/16] 0.0, 128
        %1328 = vxpose.xlu0.b32.cont [11/16] 0.0, 128
        %1329 = vxpose.xlu0.b32.cont [12/16] 0.0, 128
        %1330 = vxpose.xlu0.b32.cont [13/16] 0.0, 128
        %1331 = vxpose.xlu0.b32.cont [14/16] 0.0, 128
        %1332 = vxpose.xlu0.b32.cont [15/16] 0.0, 128
        %1333 = vxpose.xlu0.b32.end [16/16] 0.0, 128
        %v1334 = vpop.trf.xlu0
        %v1335 = vpop.trf.xlu0
        %v1336 = vpop.trf.xlu0
        %v1337 = vpop.trf.xlu0
        %v1338 = vpop.trf.xlu0
        %v1339 = vpop.trf.xlu0
        %v1340 = vpop.trf.xlu0
        %v1341 = vpop.trf.xlu0
        %v1342 = vpop.trf.xlu0
        %v1343 = vpop.trf.xlu0
        %v1344 = vpop.trf.xlu0
        %v1345 = vpop.trf.xlu0
        %v1346 = vpop.trf.xlu0
        %v1347 = vpop.trf.xlu0
        %v1348 = vpop.trf.xlu0
        %v1349 = vpop.trf.xlu0
        %v1351 = vsel %vm877, %v1238, 0
        %v1354 = vsel %vm877, %v1206, 0
        %1356 = vmatprep.subr.mxu0 0.0
        %1357 = vmatpush1.xpose.msra.mxu0 %v1354
        %1358 = vmatprep.subr.mxu0 0.0
        %1359 = vmatpush1.xpose.msra.mxu0 0.0
        %1360 = vmatprep.subr.mxu0 0.0
        %1361 = vmatpush1.xpose.msra.mxu0 0.0
        %1362 = vmatprep.subr.mxu0 0.0
        %1363 = vmatpush1.xpose.msra.mxu0 0.0
        %1364 = vmatprep.subr.mxu0 0.0
        %1365 = vmatpush1.xpose.msra.mxu0 0.0
        %1366 = vmatprep.subr.mxu0 0.0
        %1367 = vmatpush1.xpose.msra.mxu0 0.0
        %1368 = vmatprep.subr.mxu0 0.0
        %1369 = vmatpush1.xpose.msra.mxu0 0.0
        %1370 = vmatprep.subr.mxu0 0.0
        %1371 = vmatpush1.xpose.msra.mxu0 0.0
        %1372 = vmatprep.subr.mxu0 0.0
        %1373 = vmatpush1.xpose.msra.mxu0 0.0
        %1374 = vmatprep.subr.mxu0 0.0
        %1375 = vmatpush1.xpose.msra.mxu0 0.0
        %1376 = vmatprep.subr.mxu0 0.0
        %1377 = vmatpush1.xpose.msra.mxu0 0.0
        %1378 = vmatprep.subr.mxu0 0.0
        %1379 = vmatpush1.xpose.msra.mxu0 0.0
        %1380 = vmatprep.subr.mxu0 0.0
        %1381 = vmatpush1.xpose.msra.mxu0 0.0
        %1382 = vmatprep.subr.mxu0 0.0
        %1383 = vmatpush1.xpose.msra.mxu0 0.0
        %1384 = vmatprep.subr.mxu0 0.0
        %1385 = vmatpush1.xpose.msra.mxu0 0.0
        %1386 = vmatprep.subr.mxu0 0.0
        %1387 = vmatpush1.xpose.msra.mxu0 0.0
        %1388 = vmatprep.subr.mxu0 0.0
        %1389 = vmatpush1.xpose.msra.mxu0 0.0
        %1390 = vmatprep.subr.mxu0 0.0
        %1391 = vmatpush1.xpose.msra.mxu0 0.0
        %1392 = vmatprep.subr.mxu0 0.0
        %1393 = vmatpush1.xpose.msra.mxu0 0.0
        %1394 = vmatprep.subr.mxu0 0.0
        %1395 = vmatpush1.xpose.msra.mxu0 0.0
        %1396 = vmatprep.subr.mxu0 0.0
        %1397 = vmatpush1.xpose.msra.mxu0 0.0
        %1398 = vmatprep.subr.mxu0 0.0
        %1399 = vmatpush1.xpose.msra.mxu0 0.0
        %1400 = vmatprep.subr.mxu0 0.0
        %1401 = vmatpush1.xpose.msra.mxu0 0.0
        %1402 = vmatprep.subr.mxu0 0.0
        %1403 = vmatpush1.xpose.msra.mxu0 0.0
        %1404 = vmatprep.subr.mxu0 0.0
        %1405 = vmatpush1.xpose.msra.mxu0 0.0
        %1406 = vmatprep.subr.mxu0 0.0
        %1407 = vmatpush1.xpose.msra.mxu0 0.0
        %1408 = vmatprep.subr.mxu0 0.0
        %1409 = vmatpush1.xpose.msra.mxu0 0.0
        %1410 = vmatprep.subr.mxu0 0.0
        %1411 = vmatpush1.xpose.msra.mxu0 0.0
        %1412 = vmatprep.subr.mxu0 0.0
        %1413 = vmatpush1.xpose.msra.mxu0 0.0
        %1414 = vmatprep.subr.mxu0 0.0
        %1415 = vmatpush1.xpose.msra.mxu0 0.0
        %1416 = vmatprep.subr.mxu0 0.0
        %1417 = vmatpush1.xpose.msra.mxu0 0.0
        %1418 = vmatprep.subr.mxu0 0.0
        %1419 = vmatpush1.xpose.msra.mxu0 0.0
        %1420 = vmatprep.mubr.f32.mxu0 0.0
        %1421 = vmatmul.mubr.f32.gmra.mrb[0].mxu0 %v1351
        %v1422 = vpop.f32.mrb[0].mxu0
        %v1423 = vadd.f32 0.0, %v1422
        %v1424 = vpop.f32.mrb[0].mxu0
        %1425 = vdwg.mxu0
        %v1427 = vsel %vm877, %v1270, 0
        %v1430 = vsel %vm877, %v1207, 0
        %1432 = vmatprep.subr.mxu0 0.0
        %1433 = vmatpush1.xpose.msra.mxu0 %v1430
        %1434 = vmatprep.subr.mxu0 0.0
        %1435 = vmatpush1.xpose.msra.mxu0 0.0
        %1436 = vmatprep.subr.mxu0 0.0
        %1437 = vmatpush1.xpose.msra.mxu0 0.0
        %1438 = vmatprep.subr.mxu0 0.0
        %1439 = vmatpush1.xpose.msra.mxu0 0.0
        %1440 = vmatprep.subr.mxu0 0.0
        %1441 = vmatpush1.xpose.msra.mxu0 0.0
        %1442 = vmatprep.subr.mxu0 0.0
        %1443 = vmatpush1.xpose.msra.mxu0 0.0
        %1444 = vmatprep.subr.mxu0 0.0
        %1445 = vmatpush1.xpose.msra.mxu0 0.0
        %1446 = vmatprep.subr.mxu0 0.0
        %1447 = vmatpush1.xpose.msra.mxu0 0.0
        %1448 = vmatprep.subr.mxu0 0.0
        %1449 = vmatpush1.xpose.msra.mxu0 0.0
        %1450 = vmatprep.subr.mxu0 0.0
        %1451 = vmatpush1.xpose.msra.mxu0 0.0
        %1452 = vmatprep.subr.mxu0 0.0
        %1453 = vmatpush1.xpose.msra.mxu0 0.0
        %1454 = vmatprep.subr.mxu0 0.0
        %1455 = vmatpush1.xpose.msra.mxu0 0.0
        %1456 = vmatprep.subr.mxu0 0.0
        %1457 = vmatpush1.xpose.msra.mxu0 0.0
        %1458 = vmatprep.subr.mxu0 0.0
        %1459 = vmatpush1.xpose.msra.mxu0 0.0
        %1460 = vmatprep.subr.mxu0 0.0
        %1461 = vmatpush1.xpose.msra.mxu0 0.0
        %1462 = vmatprep.subr.mxu0 0.0
        %1463 = vmatpush1.xpose.msra.mxu0 0.0
        %1464 = vmatprep.subr.mxu0 0.0
        %1465 = vmatpush1.xpose.msra.mxu0 0.0
        %1466 = vmatprep.subr.mxu0 0.0
        %1467 = vmatpush1.xpose.msra.mxu0 0.0
        %1468 = vmatprep.subr.mxu0 0.0
        %1469 = vmatpush1.xpose.msra.mxu0 0.0
        %1470 = vmatprep.subr.mxu0 0.0
        %1471 = vmatpush1.xpose.msra.mxu0 0.0
        %1472 = vmatprep.subr.mxu0 0.0
        %1473 = vmatpush1.xpose.msra.mxu0 0.0
        %1474 = vmatprep.subr.mxu0 0.0
        %1475 = vmatpush1.xpose.msra.mxu0 0.0
        %1476 = vmatprep.subr.mxu0 0.0
        %1477 = vmatpush1.xpose.msra.mxu0 0.0
        %1478 = vmatprep.subr.mxu0 0.0
        %1479 = vmatpush1.xpose.msra.mxu0 0.0
        %1480 = vmatprep.subr.mxu0 0.0
        %1481 = vmatpush1.xpose.msra.mxu0 0.0
        %1482 = vmatprep.subr.mxu0 0.0
        %1483 = vmatpush1.xpose.msra.mxu0 0.0
        %1484 = vmatprep.subr.mxu0 0.0
        %1485 = vmatpush1.xpose.msra.mxu0 0.0
        %1486 = vmatprep.subr.mxu0 0.0
        %1487 = vmatpush1.xpose.msra.mxu0 0.0
        %1488 = vmatprep.subr.mxu0 0.0
        %1489 = vmatpush1.xpose.msra.mxu0 0.0
        %1490 = vmatprep.subr.mxu0 0.0
        %1491 = vmatpush1.xpose.msra.mxu0 0.0
        %1492 = vmatprep.subr.mxu0 0.0
        %1493 = vmatpush1.xpose.msra.mxu0 0.0
        %1494 = vmatprep.subr.mxu0 0.0
        %1495 = vmatpush1.xpose.msra.mxu0 0.0
        %1496 = vmatprep.mubr.f32.mxu0 0.0
        %1497 = vmatmul.mubr.f32.gmra.mrb[0].mxu0 %v1427
        %v1498 = vpop.f32.mrb[0].mxu0
        %v1499 = vadd.f32 0.0, %v1498
        %v1500 = vpop.f32.mrb[0].mxu0
        %1501 = vdwg.mxu0
        %v1503 = vsel %vm877, %v1302, 0
        %v1506 = vsel %vm877, %v1208, 0
        %1508 = vmatprep.subr.mxu0 0.0
        %1509 = vmatpush1.xpose.msra.mxu0 %v1506
        %1510 = vmatprep.subr.mxu0 0.0
        %1511 = vmatpush1.xpose.msra.mxu0 0.0
        %1512 = vmatprep.subr.mxu0 0.0
        %1513 = vmatpush1.xpose.msra.mxu0 0.0
        %1514 = vmatprep.subr.mxu0 0.0
        %1515 = vmatpush1.xpose.msra.mxu0 0.0
        %1516 = vmatprep.subr.mxu0 0.0
        %1517 = vmatpush1.xpose.msra.mxu0 0.0
        %1518 = vmatprep.subr.mxu0 0.0
        %1519 = vmatpush1.xpose.msra.mxu0 0.0
        %1520 = vmatprep.subr.mxu0 0.0
        %1521 = vmatpush1.xpose.msra.mxu0 0.0
        %1522 = vmatprep.subr.mxu0 0.0
        %1523 = vmatpush1.xpose.msra.mxu0 0.0
        %1524 = vmatprep.subr.mxu0 0.0
        %1525 = vmatpush1.xpose.msra.mxu0 0.0
        %1526 = vmatprep.subr.mxu0 0.0
        %1527 = vmatpush1.xpose.msra.mxu0 0.0
        %1528 = vmatprep.subr.mxu0 0.0
        %1529 = vmatpush1.xpose.msra.mxu0 0.0
        %1530 = vmatprep.subr.mxu0 0.0
        %1531 = vmatpush1.xpose.msra.mxu0 0.0
        %1532 = vmatprep.subr.mxu0 0.0
        %1533 = vmatpush1.xpose.msra.mxu0 0.0
        %1534 = vmatprep.subr.mxu0 0.0
        %1535 = vmatpush1.xpose.msra.mxu0 0.0
        %1536 = vmatprep.subr.mxu0 0.0
        %1537 = vmatpush1.xpose.msra.mxu0 0.0
        %1538 = vmatprep.subr.mxu0 0.0
        %1539 = vmatpush1.xpose.msra.mxu0 0.0
        %1540 = vmatprep.subr.mxu0 0.0
        %1541 = vmatpush1.xpose.msra.mxu0 0.0
        %1542 = vmatprep.subr.mxu0 0.0
        %1543 = vmatpush1.xpose.msra.mxu0 0.0
        %1544 = vmatprep.subr.mxu0 0.0
        %1545 = vmatpush1.xpose.msra.mxu0 0.0
        %1546 = vmatprep.subr.mxu0 0.0
        %1547 = vmatpush1.xpose.msra.mxu0 0.0
        %1548 = vmatprep.subr.mxu0 0.0
        %1549 = vmatpush1.xpose.msra.mxu0 0.0
        %1550 = vmatprep.subr.mxu0 0.0
        %1551 = vmatpush1.xpose.msra.mxu0 0.0
        %1552 = vmatprep.subr.mxu0 0.0
        %1553 = vmatpush1.xpose.msra.mxu0 0.0
        %1554 = vmatprep.subr.mxu0 0.0
        %1555 = vmatpush1.xpose.msra.mxu0 0.0
        %1556 = vmatprep.subr.mxu0 0.0
        %1557 = vmatpush1.xpose.msra.mxu0 0.0
        %1558 = vmatprep.subr.mxu0 0.0
        %1559 = vmatpush1.xpose.msra.mxu0 0.0
        %1560 = vmatprep.subr.mxu0 0.0
        %1561 = vmatpush1.xpose.msra.mxu0 0.0
        %1562 = vmatprep.subr.mxu0 0.0
        %1563 = vmatpush1.xpose.msra.mxu0 0.0
        %1564 = vmatprep.subr.mxu0 0.0
        %1565 = vmatpush1.xpose.msra.mxu0 0.0
        %1566 = vmatprep.subr.mxu0 0.0
        %1567 = vmatpush1.xpose.msra.mxu0 0.0
        %1568 = vmatprep.subr.mxu0 0.0
        %1569 = vmatpush1.xpose.msra.mxu0 0.0
        %1570 = vmatprep.subr.mxu0 0.0
        %1571 = vmatpush1.xpose.msra.mxu0 0.0
        %1572 = vmatprep.mubr.f32.mxu0 0.0
        %1573 = vmatmul.mubr.f32.gmra.mrb[0].mxu0 %v1503
        %v1574 = vpop.f32.mrb[0].mxu0
        %v1575 = vadd.f32 0.0, %v1574
        %v1576 = vpop.f32.mrb[0].mxu0
        %1577 = vdwg.mxu0
        %v1579 = vsel %vm877, %v1334, 0
        %v1582 = vsel %vm877, %v1209, 0
        %1584 = vmatprep.subr.mxu0 0.0
        %1585 = vmatpush1.xpose.msra.mxu0 %v1582
        %1586 = vmatprep.subr.mxu0 0.0
        %1587 = vmatpush1.xpose.msra.mxu0 0.0
        %1588 = vmatprep.subr.mxu0 0.0
        %1589 = vmatpush1.xpose.msra.mxu0 0.0
        %1590 = vmatprep.subr.mxu0 0.0
        %1591 = vmatpush1.xpose.msra.mxu0 0.0
        %1592 = vmatprep.subr.mxu0 0.0
        %1593 = vmatpush1.xpose.msra.mxu0 0.0
        %1594 = vmatprep.subr.mxu0 0.0
        %1595 = vmatpush1.xpose.msra.mxu0 0.0
        %1596 = vmatprep.subr.mxu0 0.0
        %1597 = vmatpush1.xpose.msra.mxu0 0.0
        %1598 = vmatprep.subr.mxu0 0.0
        %1599 = vmatpush1.xpose.msra.mxu0 0.0
        %1600 = vmatprep.subr.mxu0 0.0
        %1601 = vmatpush1.xpose.msra.mxu0 0.0
        %1602 = vmatprep.subr.mxu0 0.0
        %1603 = vmatpush1.xpose.msra.mxu0 0.0
        %1604 = vmatprep.subr.mxu0 0.0
        %1605 = vmatpush1.xpose.msra.mxu0 0.0
        %1606 = vmatprep.subr.mxu0 0.0
        %1607 = vmatpush1.xpose.msra.mxu0 0.0
        %1608 = vmatprep.subr.mxu0 0.0
        %1609 = vmatpush1.xpose.msra.mxu0 0.0
        %1610 = vmatprep.subr.mxu0 0.0
        %1611 = vmatpush1.xpose.msra.mxu0 0.0
        %1612 = vmatprep.subr.mxu0 0.0
        %1613 = vmatpush1.xpose.msra.mxu0 0.0
        %1614 = vmatprep.subr.mxu0 0.0
        %1615 = vmatpush1.xpose.msra.mxu0 0.0
        %1616 = vmatprep.subr.mxu0 0.0
        %1617 = vmatpush1.xpose.msra.mxu0 0.0
        %1618 = vmatprep.subr.mxu0 0.0
        %1619 = vmatpush1.xpose.msra.mxu0 0.0
        %1620 = vmatprep.subr.mxu0 0.0
        %1621 = vmatpush1.xpose.msra.mxu0 0.0
        %1622 = vmatprep.subr.mxu0 0.0
        %1623 = vmatpush1.xpose.msra.mxu0 0.0
        %1624 = vmatprep.subr.mxu0 0.0
        %1625 = vmatpush1.xpose.msra.mxu0 0.0
        %1626 = vmatprep.subr.mxu0 0.0
        %1627 = vmatpush1.xpose.msra.mxu0 0.0
        %1628 = vmatprep.subr.mxu0 0.0
        %1629 = vmatpush1.xpose.msra.mxu0 0.0
        %1630 = vmatprep.subr.mxu0 0.0
        %1631 = vmatpush1.xpose.msra.mxu0 0.0
        %1632 = vmatprep.subr.mxu0 0.0
        %1633 = vmatpush1.xpose.msra.mxu0 0.0
        %1634 = vmatprep.subr.mxu0 0.0
        %1635 = vmatpush1.xpose.msra.mxu0 0.0
        %1636 = vmatprep.subr.mxu0 0.0
        %1637 = vmatpush1.xpose.msra.mxu0 0.0
        %1638 = vmatprep.subr.mxu0 0.0
        %1639 = vmatpush1.xpose.msra.mxu0 0.0
        %1640 = vmatprep.subr.mxu0 0.0
        %1641 = vmatpush1.xpose.msra.mxu0 0.0
        %1642 = vmatprep.subr.mxu0 0.0
        %1643 = vmatpush1.xpose.msra.mxu0 0.0
        %1644 = vmatprep.subr.mxu0 0.0
        %1645 = vmatpush1.xpose.msra.mxu0 0.0
        %1646 = vmatprep.subr.mxu0 0.0
        %1647 = vmatpush1.xpose.msra.mxu0 0.0
        %1648 = vmatprep.mubr.f32.mxu0 0.0
        %1649 = vmatmul.mubr.f32.gmra.mrb[0].mxu0 %v1579
        %v1650 = vpop.f32.mrb[0].mxu0
        %v1651 = vadd.f32 0.0, %v1650
        %v1652 = vpop.f32.mrb[0].mxu0
        %1653 = vdwg.mxu0
        %1654 = vxpose.xlu0.b32.start [1/16] %v1423, 128
        %1655 = vxpose.xlu0.b32.cont [2/16] 0.0, 128
        %1656 = vxpose.xlu0.b32.cont [3/16] 0.0, 128
        %1657 = vxpose.xlu0.b32.cont [4/16] 0.0, 128
        %1658 = vxpose.xlu0.b32.cont [5/16] 0.0, 128
        %1659 = vxpose.xlu0.b32.cont [6/16] 0.0, 128
        %1660 = vxpose.xlu0.b32.cont [7/16] 0.0, 128
        %1661 = vxpose.xlu0.b32.cont [8/16] 0.0, 128
        %1662 = vxpose.xlu0.b32.cont [9/16] 0.0, 128
        %1663 = vxpose.xlu0.b32.cont [10/16] 0.0, 128
        %1664 = vxpose.xlu0.b32.cont [11/16] 0.0, 128
        %1665 = vxpose.xlu0.b32.cont [12/16] 0.0, 128
        %1666 = vxpose.xlu0.b32.cont [13/16] 0.0, 128
        %1667 = vxpose.xlu0.b32.cont [14/16] 0.0, 128
        %1668 = vxpose.xlu0.b32.cont [15/16] 0.0, 128
        %1669 = vxpose.xlu0.b32.end [16/16] 0.0, 128
        %v1670 = vpop.trf.xlu0
        %v1671 = vpop.trf.xlu0
        %v1672 = vpop.trf.xlu0
        %v1673 = vpop.trf.xlu0
        %v1674 = vpop.trf.xlu0
        %v1675 = vpop.trf.xlu0
        %v1676 = vpop.trf.xlu0
        %v1677 = vpop.trf.xlu0
        %v1678 = vpop.trf.xlu0
        %v1679 = vpop.trf.xlu0
        %v1680 = vpop.trf.xlu0
        %v1681 = vpop.trf.xlu0
        %v1682 = vpop.trf.xlu0
        %v1683 = vpop.trf.xlu0
        %v1684 = vpop.trf.xlu0
        %v1685 = vpop.trf.xlu0
        %1686 = vxpose.xlu0.b32.start [1/16] %v1499, 128
        %1687 = vxpose.xlu0.b32.cont [2/16] 0.0, 128
        %1688 = vxpose.xlu0.b32.cont [3/16] 0.0, 128
        %1689 = vxpose.xlu0.b32.cont [4/16] 0.0, 128
        %1690 = vxpose.xlu0.b32.cont [5/16] 0.0, 128
        %1691 = vxpose.xlu0.b32.cont [6/16] 0.0, 128
        %1692 = vxpose.xlu0.b32.cont [7/16] 0.0, 128
        %1693 = vxpose.xlu0.b32.cont [8/16] 0.0, 128
        %1694 = vxpose.xlu0.b32.cont [9/16] 0.0, 128
        %1695 = vxpose.xlu0.b32.cont [10/16] 0.0, 128
        %1696 = vxpose.xlu0.b32.cont [11/16] 0.0, 128
        %1697 = vxpose.xlu0.b32.cont [12/16] 0.0, 128
        %1698 = vxpose.xlu0.b32.cont [13/16] 0.0, 128
        %1699 = vxpose.xlu0.b32.cont [14/16] 0.0, 128
        %1700 = vxpose.xlu0.b32.cont [15/16] 0.0, 128
        %1701 = vxpose.xlu0.b32.end [16/16] 0.0, 128
        %v1702 = vpop.trf.xlu0
        %v1703 = vpop.trf.xlu0
        %v1704 = vpop.trf.xlu0
        %v1705 = vpop.trf.xlu0
        %v1706 = vpop.trf.xlu0
        %v1707 = vpop.trf.xlu0
        %v1708 = vpop.trf.xlu0
        %v1709 = vpop.trf.xlu0
        %v1710 = vpop.trf.xlu0
        %v1711 = vpop.trf.xlu0
        %v1712 = vpop.trf.xlu0
        %v1713 = vpop.trf.xlu0
        %v1714 = vpop.trf.xlu0
        %v1715 = vpop.trf.xlu0
        %v1716 = vpop.trf.xlu0
        %v1717 = vpop.trf.xlu0
        %1718 = vxpose.xlu0.b32.start [1/16] %v1575, 128
        %1719 = vxpose.xlu0.b32.cont [2/16] 0.0, 128
        %1720 = vxpose.xlu0.b32.cont [3/16] 0.0, 128
        %1721 = vxpose.xlu0.b32.cont [4/16] 0.0, 128
        %1722 = vxpose.xlu0.b32.cont [5/16] 0.0, 128
        %1723 = vxpose.xlu0.b32.cont [6/16] 0.0, 128
        %1724 = vxpose.xlu0.b32.cont [7/16] 0.0, 128
        %1725 = vxpose.xlu0.b32.cont [8/16] 0.0, 128
        %1726 = vxpose.xlu0.b32.cont [9/16] 0.0, 128
        %1727 = vxpose.xlu0.b32.cont [10/16] 0.0, 128
        %1728 = vxpose.xlu0.b32.cont [11/16] 0.0, 128
        %1729 = vxpose.xlu0.b32.cont [12/16] 0.0, 128
        %1730 = vxpose.xlu0.b32.cont [13/16] 0.0, 128
        %1731 = vxpose.xlu0.b32.cont [14/16] 0.0, 128
        %1732 = vxpose.xlu0.b32.cont [15/16] 0.0, 128
        %1733 = vxpose.xlu0.b32.end [16/16] 0.0, 128
        %v1734 = vpop.trf.xlu0
        %v1735 = vpop.trf.xlu0
        %v1736 = vpop.trf.xlu0
        %v1737 = vpop.trf.xlu0
        %v1738 = vpop.trf.xlu0
        %v1739 = vpop.trf.xlu0
        %v1740 = vpop.trf.xlu0
        %v1741 = vpop.trf.xlu0
        %v1742 = vpop.trf.xlu0
        %v1743 = vpop.trf.xlu0
        %v1744 = vpop.trf.xlu0
        %v1745 = vpop.trf.xlu0
        %v1746 = vpop.trf.xlu0
        %v1747 = vpop.trf.xlu0
        %v1748 = vpop.trf.xlu0
        %v1749 = vpop.trf.xlu0
        %1750 = vxpose.xlu0.b32.start [1/16] %v1651, 128
        %1751 = vxpose.xlu0.b32.cont [2/16] 0.0, 128
        %1752 = vxpose.xlu0.b32.cont [3/16] 0.0, 128
        %1753 = vxpose.xlu0.b32.cont [4/16] 0.0, 128
        %1754 = vxpose.xlu0.b32.cont [5/16] 0.0, 128
        %1755 = vxpose.xlu0.b32.cont [6/16] 0.0, 128
        %1756 = vxpose.xlu0.b32.cont [7/16] 0.0, 128
        %1757 = vxpose.xlu0.b32.cont [8/16] 0.0, 128
        %1758 = vxpose.xlu0.b32.cont [9/16] 0.0, 128
        %1759 = vxpose.xlu0.b32.cont [10/16] 0.0, 128
        %1760 = vxpose.xlu0.b32.cont [11/16] 0.0, 128
        %1761 = vxpose.xlu0.b32.cont [12/16] 0.0, 128
        %1762 = vxpose.xlu0.b32.cont [13/16] 0.0, 128
        %1763 = vxpose.xlu0.b32.cont [14/16] 0.0, 128
        %1764 = vxpose.xlu0.b32.cont [15/16] 0.0, 128
        %1765 = vxpose.xlu0.b32.end [16/16] 0.0, 128
        %v1766 = vpop.trf.xlu0
        %v1767 = vpop.trf.xlu0
        %v1768 = vpop.trf.xlu0
        %v1769 = vpop.trf.xlu0
        %v1770 = vpop.trf.xlu0
        %v1771 = vpop.trf.xlu0
        %v1772 = vpop.trf.xlu0
        %v1773 = vpop.trf.xlu0
        %v1774 = vpop.trf.xlu0
        %v1775 = vpop.trf.xlu0
        %v1776 = vpop.trf.xlu0
        %v1777 = vpop.trf.xlu0
        %v1778 = vpop.trf.xlu0
        %v1779 = vpop.trf.xlu0
        %v1780 = vpop.trf.xlu0
        %v1781 = vpop.trf.xlu0
        %v1782 = vcombine.low %v1670, %v1734
        %v1783 = vcombine.high %v1670, %v1734
        %v1785 = vunpack.c.l.s4 1983009808
        %v1786 = vunpack.c.0.s8 %v1785
        %v1787 = vlaneseq
        %v1788 = vshrl.u32 %v1787, 7
        %v1789 = vsub.s32 %v1786, %v1788
        %v1790 = vrot.slane %v1782, %v1789
        %v1792 = vunpack.c.l.s4 1983009808
        %v1793 = vunpack.c.0.s8 %v1792
        %v1794 = vlaneseq
        %v1795 = vshrl.u32 %v1794, 7
        %v1796 = vsub.s32 %v1793, %v1795
        %v1797 = vrot.slane %v1783, %v1796
        %v1798 = vcombine.low %v1702, %v1766
        %v1799 = vcombine.high %v1702, %v1766
        %v1801 = vunpack.c.l.s4 1983009808
        %v1802 = vunpack.c.0.s8 %v1801
        %v1803 = vlaneseq
        %v1804 = vshrl.u32 %v1803, 7
        %v1805 = vsub.s32 %v1802, %v1804
        %v1806 = vrot.slane %v1798, %v1805
        %v1808 = vunpack.c.l.s4 1983009808
        %v1809 = vunpack.c.0.s8 %v1808
        %v1810 = vlaneseq
        %v1811 = vshrl.u32 %v1810, 7
        %v1812 = vsub.s32 %v1809, %v1811
        %v1813 = vrot.slane %v1799, %v1812
        %v1814 = vcombine.low %v1790, %v1806
        %v1815 = vcombine.high %v1790, %v1806
        %v1817 = vunpack.c.l.s4 1934713408
        %v1818 = vunpack.c.0.s8 %v1817
        %v1819 = vlaneseq
        %v1820 = vshrl.u32 %v1819, 7
        %v1821 = vsub.s32 %v1818, %v1820
        %v1822 = vrot.slane %v1814, %v1821
        %v1824 = vunpack.c.l.s4 1934713408
        %v1825 = vunpack.c.0.s8 %v1824
        %v1826 = vlaneseq
        %v1827 = vshrl.u32 %v1826, 7
        %v1828 = vsub.s32 %v1825, %v1827
        %v1829 = vrot.slane %v1815, %v1828
        %v1830 = vcombine.low %v1797, %v1813
        %v1831 = vcombine.high %v1797, %v1813
        %v1833 = vunpack.c.l.s4 1934713408
        %v1834 = vunpack.c.0.s8 %v1833
        %v1835 = vlaneseq
        %v1836 = vshrl.u32 %v1835, 7
        %v1837 = vsub.s32 %v1834, %v1836
        %v1838 = vrot.slane %v1830, %v1837
        %v1840 = vunpack.c.l.s4 1934713408
        %v1841 = vunpack.c.0.s8 %v1840
        %v1842 = vlaneseq
        %v1843 = vshrl.u32 %v1842, 7
        %v1844 = vsub.s32 %v1841, %v1843
        %v1845 = vrot.slane %v1831, %v1844
        %v1846 = vcombine.high %v1822, 0.0
        %v1847 = vcombine.high %v1829, 0.0
        %v1848 = vcombine.high %v1838, 0.0
        %v1849 = vcombine.high %v1845, 0.0
        %v1850 = vcombine.low %v1822, %v1829
        %v1852 = vunpack.c.l.s4 1983009808
        %v1853 = vunpack.c.0.s8 %v1852
        %v1854 = vlaneseq
        %v1855 = vshrl.u32 %v1854, 7
        %v1856 = vsub.s32 %v1853, %v1855
        %v1857 = vrot.slane %v1850, %v1856
        %v1858 = vcombine.low %v1846, %v1847
        %v1860 = vunpack.c.l.s4 1983009808
        %v1861 = vunpack.c.0.s8 %v1860
        %v1862 = vlaneseq
        %v1863 = vshrl.u32 %v1862, 7
        %v1864 = vsub.s32 %v1861, %v1863
        %v1865 = vrot.slane %v1858, %v1864
        %v1866 = vcombine.low %v1838, %v1845
        %v1868 = vunpack.c.l.s4 1983009808
        %v1869 = vunpack.c.0.s8 %v1868
        %v1870 = vlaneseq
        %v1871 = vshrl.u32 %v1870, 7
        %v1872 = vsub.s32 %v1869, %v1871
        %v1873 = vrot.slane %v1866, %v1872
        %v1874 = vcombine.low %v1848, %v1849
        %v1876 = vunpack.c.l.s4 1983009808
        %v1877 = vunpack.c.0.s8 %v1876
        %v1878 = vlaneseq
        %v1879 = vshrl.u32 %v1878, 7
        %v1880 = vsub.s32 %v1877, %v1879
        %v1881 = vrot.slane %v1874, %v1880
        %v1882 = vcombine.low %v1857, %v1865
        %v1883 = vcombine.high %v1857, %v1865
        %v1885 = vunpack.c.l.s4 1934713408
        %v1886 = vunpack.c.0.s8 %v1885
        %v1887 = vlaneseq
        %v1888 = vshrl.u32 %v1887, 7
        %v1889 = vsub.s32 %v1886, %v1888
        %v1890 = vrot.slane %v1882, %v1889
        %v1892 = vunpack.c.l.s4 1934713408
        %v1893 = vunpack.c.0.s8 %v1892
        %v1894 = vlaneseq
        %v1895 = vshrl.u32 %v1894, 7
        %v1896 = vsub.s32 %v1893, %v1895
        %v1897 = vrot.slane %v1883, %v1896
        %v1898 = vcombine.low %v1873, %v1881
        %v1899 = vcombine.high %v1873, %v1881
        %v1901 = vunpack.c.l.s4 1934713408
        %v1902 = vunpack.c.0.s8 %v1901
        %v1903 = vlaneseq
        %v1904 = vshrl.u32 %v1903, 7
        %v1905 = vsub.s32 %v1902, %v1904
        %v1906 = vrot.slane %v1898, %v1905
        %v1908 = vunpack.c.l.s4 1934713408
        %v1909 = vunpack.c.0.s8 %v1908
        %v1910 = vlaneseq
        %v1911 = vshrl.u32 %v1910, 7
        %v1912 = vsub.s32 %v1909, %v1911
        %v1913 = vrot.slane %v1899, %v1912
        %v1914 = vcombine.low %v1890, %v1906
        %v1915 = vcombine.high %v1890, %v1906
        %v1916 = vcombine.low %v1897, %v1913
        %v1917 = vcombine.high %v1897, %v1913
        %1919 = vrot.lane.b32.xlu0 %v1915, 8
        %v1920 = vpop.permute.xlu0 %1919
        %1923 = vrot.lane.b32.xlu0 %v1916, 16
        %v1924 = vpop.permute.xlu0 %1923
        %1927 = vrot.lane.b32.xlu0 %v1917, 24
        %v1928 = vpop.permute.xlu0 %1927
        %v1930 = vsel %vm877, %v1914, %v1920
        %vm1931 = vcmask 130048
        %v1932 = vsel %vm1931, %v1930, %v1924
        %v1933 = vsel %vm549, %v1932, %v1928
        %v1934 = vld [vmem:[%s3] sm:$0xff]
        %v1935 = vld [vmem:[%s3 + $0x8] sm:$0xff]
        %v1936 = vld [vmem:[%s3 + $0x10] sm:$0xff]
        %v1937 = vld [vmem:[%s3 + $0x18] sm:$0xff]
        %v1938 = vlaneseq
        %v1939 = vshrl.u32 %v1938, 7
        %v1940 = vsub.s32 3, %v1939
        %v1941 = vrot.slane %v623, %v1940
        %v1943 = vsel %vm624, %v1933, 0
        %1945 = vmatprep.subr.mxu0 0.0
        %1946 = vmatpush1.msra.mxu0 %v1934
        %1947 = vmatprep.subr.mxu0 0.0
        %1948 = vmatpush1.msra.mxu0 %v1935
        %1949 = vmatprep.subr.mxu0 0.0
        %1950 = vmatpush1.msra.mxu0 %v1936
        %1951 = vmatprep.subr.mxu0 0.0
        %1952 = vmatpush1.msra.mxu0 %v1937
        %1953 = vmatprep.subr.mxu0 0.0
        %1954 = vmatpush1.msra.mxu0 0.0
        %1955 = vmatprep.subr.mxu0 0.0
        %1956 = vmatpush1.msra.mxu0 0.0
        %1957 = vmatprep.subr.mxu0 0.0
        %1958 = vmatpush1.msra.mxu0 0.0
        %1959 = vmatprep.subr.mxu0 0.0
        %1960 = vmatpush1.msra.mxu0 0.0
        %1961 = vmatprep.subr.mxu0 0.0
        %1962 = vmatpush1.msra.mxu0 0.0
        %1963 = vmatprep.subr.mxu0 0.0
        %1964 = vmatpush1.msra.mxu0 0.0
        %1965 = vmatprep.subr.mxu0 0.0
        %1966 = vmatpush1.msra.mxu0 0.0
        %1967 = vmatprep.subr.mxu0 0.0
        %1968 = vmatpush1.msra.mxu0 0.0
        %1969 = vmatprep.subr.mxu0 0.0
        %1970 = vmatpush1.msra.mxu0 0.0
        %1971 = vmatprep.subr.mxu0 0.0
        %1972 = vmatpush1.msra.mxu0 0.0
        %1973 = vmatprep.subr.mxu0 0.0
        %1974 = vmatpush1.msra.mxu0 0.0
        %1975 = vmatprep.subr.mxu0 0.0
        %1976 = vmatpush1.msra.mxu0 0.0
        %1977 = vmatprep.subr.mxu0 0.0
        %1978 = vmatpush1.msra.mxu0 0.0
        %1979 = vmatprep.subr.mxu0 0.0
        %1980 = vmatpush1.msra.mxu0 0.0
        %1981 = vmatprep.subr.mxu0 0.0
        %1982 = vmatpush1.msra.mxu0 0.0
        %1983 = vmatprep.subr.mxu0 0.0
        %1984 = vmatpush1.msra.mxu0 0.0
        %1985 = vmatprep.subr.mxu0 0.0
        %1986 = vmatpush1.msra.mxu0 0.0
        %1987 = vmatprep.subr.mxu0 0.0
        %1988 = vmatpush1.msra.mxu0 0.0
        %1989 = vmatprep.subr.mxu0 0.0
        %1990 = vmatpush1.msra.mxu0 0.0
        %1991 = vmatprep.subr.mxu0 0.0
        %1992 = vmatpush1.msra.mxu0 0.0
        %1993 = vmatprep.subr.mxu0 0.0
        %1994 = vmatpush1.msra.mxu0 0.0
        %1995 = vmatprep.subr.mxu0 0.0
        %1996 = vmatpush1.msra.mxu0 0.0
        %1997 = vmatprep.subr.mxu0 0.0
        %1998 = vmatpush1.msra.mxu0 0.0
        %1999 = vmatprep.subr.mxu0 0.0
        %2000 = vmatpush1.msra.mxu0 0.0
        %2001 = vmatprep.subr.mxu0 0.0
        %2002 = vmatpush1.msra.mxu0 0.0
        %2003 = vmatprep.subr.mxu0 0.0
        %2004 = vmatpush1.msra.mxu0 0.0
        %2005 = vmatprep.subr.mxu0 0.0
        %2006 = vmatpush1.msra.mxu0 0.0
        %2007 = vmatprep.subr.mxu0 0.0
        %2008 = vmatpush1.msra.mxu0 0.0
        %2009 = vmatprep.mubr.f32.mxu0 0.0
        %2010 = vmatmul.mubr.f32.gmra.mrb[0].mxu0 %v1943
        %v2011 = vpop.f32.mrb[0].mxu0
        %v2012 = vadd.f32 %v1941, %v2011
        %v2013 = vpop.f32.mrb[0].mxu0
        %2014 = vdwg.mxu0
        %v2015 = vadd.f32 %v648, %v2012
        %v2016 = vsel %vm624, %v2015, 0.0
        %2017 = vadd.xlane.f32.xlu0 %v2016
        %v2018 = vpop.xlane.xlu0 %2017
        %v2019 = vmul.f32 %v2018, %v628
        %v2020 = vsub.f32 %v2015, %v2019
        %v2021 = vmul.f32 %v2020, %v2020
        %v2022 = vsel %vm624, %v2021, 0.0
        %2023 = vadd.xlane.f32.xlu0 %v2022
        %v2024 = vpop.xlane.xlu0 %2023
        %v2025 = vmul.f32 %v2024, %v628
        %v2026 = vadd.f32 %v2025, 1e-05
        %v2027 = vrsqrt.pop %v2026
        %v2028 = vmul.f32 %v2020, %v2027
        %v2029 = vlaneseq
        %v2030 = vshrl.u32 %v2029, 7
        %v2031 = vsub.s32 4, %v2030
        %v2032 = vrot.slane %v623, %v2031
        %v2033 = vmul.f32 %v2028, %v2032
        %v2034 = vlaneseq
        %v2035 = vshrl.u32 %v2034, 7
        %v2036 = vsub.s32 5, %v2035
        %v2037 = vrot.slane %v623, %v2036
        %v2038 = vadd.f32 %v2033, %v2037
        %v2039 = vld [vmem:[%s4] sm:$0xff]
        %v2040 = vld [vmem:[%s4 + $0x8] sm:$0xff]
        %v2041 = vld [vmem:[%s4 + $0x10] sm:$0xff]
        %v2042 = vld [vmem:[%s4 + $0x18] sm:$0xff]
        %v2043 = vlaneseq
        %v2044 = vshrl.u32 %v2043, 7
        %v2045 = vsub.s32 6, %v2044
        %v2046 = vrot.slane %v623, %v2045
        %v2048 = vsel %vm624, %v2038, 0
        %2050 = vmatprep.subr.mxu0 0.0
        %2051 = vmatpush1.msra.mxu0 %v2039
        %2052 = vmatprep.subr.mxu0 0.0
        %2053 = vmatpush1.msra.mxu0 %v2040
        %2054 = vmatprep.subr.mxu0 0.0
        %2055 = vmatpush1.msra.mxu0 %v2041
        %2056 = vmatprep.subr.mxu0 0.0
        %2057 = vmatpush1.msra.mxu0 %v2042
        %2058 = vmatprep.subr.mxu0 0.0
        %2059 = vmatpush1.msra.mxu0 0.0
        %2060 = vmatprep.subr.mxu0 0.0
        %2061 = vmatpush1.msra.mxu0 0.0
        %2062 = vmatprep.subr.mxu0 0.0
        %2063 = vmatpush1.msra.mxu0 0.0
        %2064 = vmatprep.subr.mxu0 0.0
        %2065 = vmatpush1.msra.mxu0 0.0
        %2066 = vmatprep.subr.mxu0 0.0
        %2067 = vmatpush1.msra.mxu0 0.0
        %2068 = vmatprep.subr.mxu0 0.0
        %2069 = vmatpush1.msra.mxu0 0.0
        %2070 = vmatprep.subr.mxu0 0.0
        %2071 = vmatpush1.msra.mxu0 0.0
        %2072 = vmatprep.subr.mxu0 0.0
        %2073 = vmatpush1.msra.mxu0 0.0
        %2074 = vmatprep.subr.mxu0 0.0
        %2075 = vmatpush1.msra.mxu0 0.0
        %2076 = vmatprep.subr.mxu0 0.0
        %2077 = vmatpush1.msra.mxu0 0.0
        %2078 = vmatprep.subr.mxu0 0.0
        %2079 = vmatpush1.msra.mxu0 0.0
        %2080 = vmatprep.subr.mxu0 0.0
        %2081 = vmatpush1.msra.mxu0 0.0
        %2082 = vmatprep.subr.mxu0 0.0
        %2083 = vmatpush1.msra.mxu0 0.0
        %2084 = vmatprep.subr.mxu0 0.0
        %2085 = vmatpush1.msra.mxu0 0.0
        %2086 = vmatprep.subr.mxu0 0.0
        %2087 = vmatpush1.msra.mxu0 0.0
        %2088 = vmatprep.subr.mxu0 0.0
        %2089 = vmatpush1.msra.mxu0 0.0
        %2090 = vmatprep.subr.mxu0 0.0
        %2091 = vmatpush1.msra.mxu0 0.0
        %2092 = vmatprep.subr.mxu0 0.0
        %2093 = vmatpush1.msra.mxu0 0.0
        %2094 = vmatprep.subr.mxu0 0.0
        %2095 = vmatpush1.msra.mxu0 0.0
        %2096 = vmatprep.subr.mxu0 0.0
        %2097 = vmatpush1.msra.mxu0 0.0
        %2098 = vmatprep.subr.mxu0 0.0
        %2099 = vmatpush1.msra.mxu0 0.0
        %2100 = vmatprep.subr.mxu0 0.0
        %2101 = vmatpush1.msra.mxu0 0.0
        %2102 = vmatprep.subr.mxu0 0.0
        %2103 = vmatpush1.msra.mxu0 0.0
        %2104 = vmatprep.subr.mxu0 0.0
        %2105 = vmatpush1.msra.mxu0 0.0
        %2106 = vmatprep.subr.mxu0 0.0
        %2107 = vmatpush1.msra.mxu0 0.0
        %2108 = vmatprep.subr.mxu0 0.0
        %2109 = vmatpush1.msra.mxu0 0.0
        %2110 = vmatprep.subr.mxu0 0.0
        %2111 = vmatpush1.msra.mxu0 0.0
        %2112 = vmatprep.subr.mxu0 0.0
        %2113 = vmatpush1.msra.mxu0 0.0
        %2114 = vmatprep.mubr.f32.mxu0 0.0
        %2115 = vmatmul.mubr.f32.gmra.mrb[0].mxu0 %v2048
        %v2116 = vpop.f32.mrb[0].mxu0
        %v2117 = vadd.f32 %v2046, %v2116
        %v2118 = vpop.f32.mrb[0].mxu0
        %2119 = vdwg.mxu0
        %v2120 = vmax.f32 %v2117, 0.0
        %v2121 = vld [vmem:[%s5] sm:$0xff]
        %v2122 = vld [vmem:[%s5 + $0x8] sm:$0xff]
        %v2123 = vld [vmem:[%s5 + $0x10] sm:$0xff]
        %v2124 = vld [vmem:[%s5 + $0x18] sm:$0xff]
        %v2125 = vld [vmem:[%s5 + $0x20] sm:$0xff]
        %v2126 = vld [vmem:[%s5 + $0x28] sm:$0xff]
        %v2127 = vld [vmem:[%s5 + $0x30] sm:$0xff]
        %v2128 = vld [vmem:[%s5 + $0x38] sm:$0xff]
        %vm2129 = vcmask 523264
        %v2131 = vsel %vm2129, %v2120, 0
        %2133 = vmatprep.subr.mxu0 0.0
        %2134 = vmatpush1.msra.mxu0 %v2121
        %2135 = vmatprep.subr.mxu0 0.0
        %2136 = vmatpush1.msra.mxu0 %v2122
        %2137 = vmatprep.subr.mxu0 0.0
        %2138 = vmatpush1.msra.mxu0 %v2123
        %2139 = vmatprep.subr.mxu0 0.0
        %2140 = vmatpush1.msra.mxu0 %v2124
        %2141 = vmatprep.subr.mxu0 0.0
        %2142 = vmatpush1.msra.mxu0 %v2125
        %2143 = vmatprep.subr.mxu0 0.0
        %2144 = vmatpush1.msra.mxu0 %v2126
        %2145 = vmatprep.subr.mxu0 0.0
        %2146 = vmatpush1.msra.mxu0 %v2127
        %2147 = vmatprep.subr.mxu0 0.0
        %2148 = vmatpush1.msra.mxu0 %v2128
        %2149 = vmatprep.subr.mxu0 0.0
        %2150 = vmatpush1.msra.mxu0 0.0
        %2151 = vmatprep.subr.mxu0 0.0
        %2152 = vmatpush1.msra.mxu0 0.0
        %2153 = vmatprep.subr.mxu0 0.0
        %2154 = vmatpush1.msra.mxu0 0.0
        %2155 = vmatprep.subr.mxu0 0.0
        %2156 = vmatpush1.msra.mxu0 0.0
        %2157 = vmatprep.subr.mxu0 0.0
        %2158 = vmatpush1.msra.mxu0 0.0
        %2159 = vmatprep.subr.mxu0 0.0
        %2160 = vmatpush1.msra.mxu0 0.0
        %2161 = vmatprep.subr.mxu0 0.0
        %2162 = vmatpush1.msra.mxu0 0.0
        %2163 = vmatprep.subr.mxu0 0.0
        %2164 = vmatpush1.msra.mxu0 0.0
        %2165 = vmatprep.subr.mxu0 0.0
        %2166 = vmatpush1.msra.mxu0 0.0
        %2167 = vmatprep.subr.mxu0 0.0
        %2168 = vmatpush1.msra.mxu0 0.0
        %2169 = vmatprep.subr.mxu0 0.0
        %2170 = vmatpush1.msra.mxu0 0.0
        %2171 = vmatprep.subr.mxu0 0.0
        %2172 = vmatpush1.msra.mxu0 0.0
        %2173 = vmatprep.subr.mxu0 0.0
        %2174 = vmatpush1.msra.mxu0 0.0
        %2175 = vmatprep.subr.mxu0 0.0
        %2176 = vmatpush1.msra.mxu0 0.0
        %2177 = vmatprep.subr.mxu0 0.0
        %2178 = vmatpush1.msra.mxu0 0.0
        %2179 = vmatprep.subr.mxu0 0.0
        %2180 = vmatpush1.msra.mxu0 0.0
        %2181 = vmatprep.subr.mxu0 0.0
        %2182 = vmatpush1.msra.mxu0 0.0
        %2183 = vmatprep.subr.mxu0 0.0
        %2184 = vmatpush1.msra.mxu0 0.0
        %2185 = vmatprep.subr.mxu0 0.0
        %2186 = vmatpush1.msra.mxu0 0.0
        %2187 = vmatprep.subr.mxu0 0.0
        %2188 = vmatpush1.msra.mxu0 0.0
        %2189 = vmatprep.subr.mxu0 0.0
        %2190 = vmatpush1.msra.mxu0 0.0
        %2191 = vmatprep.subr.mxu0 0.0
        %2192 = vmatpush1.msra.mxu0 0.0
        %2193 = vmatprep.subr.mxu0 0.0
        %2194 = vmatpush1.msra.mxu0 0.0
        %2195 = vmatprep.subr.mxu0 0.0
        %2196 = vmatpush1.msra.mxu0 0.0
        %2197 = vmatprep.mubr.f32.mxu0 0.0
        %2198 = vmatmul.mubr.f32.gmra.mrb[0].mxu0 %v2131
        %v2199 = vpop.f32.mrb[0].mxu0
        %v2200 = vadd.f32 0.0, %v2199
        %v2201 = vpop.f32.mrb[0].mxu0
        %2202 = vdwg.mxu0
        %v2203 = vadd.f32 %v2038, %v2200
        %v2204 = vlaneseq
        %v2205 = vshrl.u32 %v2204, 7
        %v2206 = vsub.s32 7, %v2205
        %v2207 = vrot.slane %v623, %v2206
        %v2208 = vadd.f32 %v2203, %v2207
        %s2209 = scalar_lea.vmem [#allocation7], 8
        %v2210 = vld [vmem:[%s2209] sm:$0xff]
        %v2211 = vsel %vm624, %v2208, 0.0
        %2212 = vadd.xlane.f32.xlu0 %v2211
        %v2213 = vpop.xlane.xlu0 %2212
        %v2214 = vmul.f32 %v2213, %v628
        %v2215 = vsub.f32 %v2208, %v2214
        %v2216 = vmul.f32 %v2215, %v2215
        %v2217 = vsel %vm624, %v2216, 0.0
        %2218 = vadd.xlane.f32.xlu0 %v2217
        %v2219 = vpop.xlane.xlu0 %2218
        %v2220 = vmul.f32 %v2219, %v628
        %v2221 = vadd.f32 %v2220, 1e-05
        %v2222 = vrsqrt.pop %v2221
        %v2223 = vmul.f32 %v2215, %v2222
        %v2224 = vlaneseq
        %v2225 = vshrl.u32 %v2224, 7
        %v2226 = vsub.s32 0, %v2225
        %v2227 = vrot.slane %v2210, %v2226
        %v2228 = vmul.f32 %v2223, %v2227
        %v2229 = vlaneseq
        %v2230 = vshrl.u32 %v2229, 7
        %v2231 = vsub.s32 1, %v2230
        %v2232 = vrot.slane %v2210, %v2231
        %v2233 = vadd.f32 %v2228, %v2232
        %s2234 = scalar_lea.vmem %s2, 32
        %v2235 = vld [vmem:[%s2234] sm:$0xff]
        %v2236 = vld [vmem:[%s2234 + $0x8] sm:$0xff]
        %v2237 = vld [vmem:[%s2234 + $0x10] sm:$0xff]
        %v2238 = vld [vmem:[%s2234 + $0x18] sm:$0xff]
        %v2239 = vlaneseq
        %v2240 = vshrl.u32 %v2239, 7
        %v2241 = vsub.s32 2, %v2240
        %v2242 = vrot.slane %v2210, %v2241
        %v2244 = vsel %vm624, %v2233, 0
        %2246 = vmatprep.subr.mxu0 0.0
        %2247 = vmatpush1.msra.mxu0 %v2235
        %2248 = vmatprep.subr.mxu0 0.0
        %2249 = vmatpush1.msra.mxu0 %v2236
        %2250 = vmatprep.subr.mxu0 0.0
        %2251 = vmatpush1.msra.mxu0 %v2237
        %2252 = vmatprep.subr.mxu0 0.0
        %2253 = vmatpush1.msra.mxu0 %v2238
        %2254 = vmatprep.subr.mxu0 0.0
        %2255 = vmatpush1.msra.mxu0 0.0
        %2256 = vmatprep.subr.mxu0 0.0
        %2257 = vmatpush1.msra.mxu0 0.0
        %2258 = vmatprep.subr.mxu0 0.0
        %2259 = vmatpush1.msra.mxu0 0.0
        %2260 = vmatprep.subr.mxu0 0.0
        %2261 = vmatpush1.msra.mxu0 0.0
        %2262 = vmatprep.subr.mxu0 0.0
        %2263 = vmatpush1.msra.mxu0 0.0
        %2264 = vmatprep.subr.mxu0 0.0
        %2265 = vmatpush1.msra.mxu0 0.0
        %2266 = vmatprep.subr.mxu0 0.0
        %2267 = vmatpush1.msra.mxu0 0.0
        %2268 = vmatprep.subr.mxu0 0.0
        %2269 = vmatpush1.msra.mxu0 0.0
        %2270 = vmatprep.subr.mxu0 0.0
        %2271 = vmatpush1.msra.mxu0 0.0
        %2272 = vmatprep.subr.mxu0 0.0
        %2273 = vmatpush1.msra.mxu0 0.0
        %2274 = vmatprep.subr.mxu0 0.0
        %2275 = vmatpush1.msra.mxu0 0.0
        %2276 = vmatprep.subr.mxu0 0.0
        %2277 = vmatpush1.msra.mxu0 0.0
        %2278 = vmatprep.subr.mxu0 0.0
        %2279 = vmatpush1.msra.mxu0 0.0
        %2280 = vmatprep.subr.mxu0 0.0
        %2281 = vmatpush1.msra.mxu0 0.0
        %2282 = vmatprep.subr.mxu0 0.0
        %2283 = vmatpush1.msra.mxu0 0.0
        %2284 = vmatprep.subr.mxu0 0.0
        %2285 = vmatpush1.msra.mxu0 0.0
        %2286 = vmatprep.subr.mxu0 0.0
        %2287 = vmatpush1.msra.mxu0 0.0
        %2288 = vmatprep.subr.mxu0 0.0
        %2289 = vmatpush1.msra.mxu0 0.0
        %2290 = vmatprep.subr.mxu0 0.0
        %2291 = vmatpush1.msra.mxu0 0.0
        %2292 = vmatprep.subr.mxu0 0.0
        %2293 = vmatpush1.msra.mxu0 0.0
        %2294 = vmatprep.subr.mxu0 0.0
        %2295 = vmatpush1.msra.mxu0 0.0
        %2296 = vmatprep.subr.mxu0 0.0
        %2297 = vmatpush1.msra.mxu0 0.0
        %2298 = vmatprep.subr.mxu0 0.0
        %2299 = vmatpush1.msra.mxu0 0.0
        %2300 = vmatprep.subr.mxu0 0.0
        %2301 = vmatpush1.msra.mxu0 0.0
        %2302 = vmatprep.subr.mxu0 0.0
        %2303 = vmatpush1.msra.mxu0 0.0
        %2304 = vmatprep.subr.mxu0 0.0
        %2305 = vmatpush1.msra.mxu0 0.0
        %2306 = vmatprep.subr.mxu0 0.0
        %2307 = vmatpush1.msra.mxu0 0.0
        %2308 = vmatprep.subr.mxu0 0.0
        %2309 = vmatpush1.msra.mxu0 0.0
        %2310 = vmatprep.mubr.f32.mxu0 0.0
        %2311 = vmatmul.mubr.f32.gmra.mrb[0].mxu0 %v2244
        %v2312 = vpop.f32.mrb[0].mxu0
        %v2313 = vadd.f32 %v2242, %v2312
        %v2314 = vpop.f32.mrb[0].mxu0
        %2315 = vdwg.mxu0
        %2317 = vrot.lane.b32.xlu0 %v2313, 120
        %v2318 = vpop.permute.xlu0 %2317
        %2319 = vrot.lane.b32.xlu0 %v2313, 112
        %v2320 = vpop.permute.xlu0 %2319
        %2321 = vrot.lane.b32.xlu0 %v2313, 104
        %v2322 = vpop.permute.xlu0 %2321
        %2323 = vrot.lane.b32.xlu0 %v2313, 96
        %v2324 = vpop.permute.xlu0 %2323
        %2325 = vrot.lane.b32.xlu0 %v2318, 96
        %v2326 = vpop.permute.xlu0 %2325
        %2327 = vrot.lane.b32.xlu0 %v2320, 96
        %v2328 = vpop.permute.xlu0 %2327
        %2329 = vrot.lane.b32.xlu0 %v2322, 96
        %v2330 = vpop.permute.xlu0 %2329
        %2335 = vxpose.xlu0.b32.start [1/16] %v2324, 128
        %2336 = vxpose.xlu0.b32.cont [2/16] 0.0, 128
        %2337 = vxpose.xlu0.b32.cont [3/16] 0.0, 128
        %2338 = vxpose.xlu0.b32.cont [4/16] 0.0, 128
        %2339 = vxpose.xlu0.b32.cont [5/16] 0.0, 128
        %2340 = vxpose.xlu0.b32.cont [6/16] 0.0, 128
        %2341 = vxpose.xlu0.b32.cont [7/16] 0.0, 128
        %2342 = vxpose.xlu0.b32.cont [8/16] 0.0, 128
        %2343 = vxpose.xlu0.b32.cont [9/16] 0.0, 128
        %2344 = vxpose.xlu0.b32.cont [10/16] 0.0, 128
        %2345 = vxpose.xlu0.b32.cont [11/16] 0.0, 128
        %2346 = vxpose.xlu0.b32.cont [12/16] 0.0, 128
        %2347 = vxpose.xlu0.b32.cont [13/16] 0.0, 128
        %2348 = vxpose.xlu0.b32.cont [14/16] 0.0, 128
        %2349 = vxpose.xlu0.b32.cont [15/16] 0.0, 128
        %2350 = vxpose.xlu0.b32.end [16/16] 0.0, 128
        %v2351 = vpop.trf.xlu0
        %v2352 = vpop.trf.xlu0
        %v2353 = vpop.trf.xlu0
        %v2354 = vpop.trf.xlu0
        %v2355 = vpop.trf.xlu0
        %v2356 = vpop.trf.xlu0
        %v2357 = vpop.trf.xlu0
        %v2358 = vpop.trf.xlu0
        %v2359 = vpop.trf.xlu0
        %v2360 = vpop.trf.xlu0
        %v2361 = vpop.trf.xlu0
        %v2362 = vpop.trf.xlu0
        %v2363 = vpop.trf.xlu0
        %v2364 = vpop.trf.xlu0
        %v2365 = vpop.trf.xlu0
        %v2366 = vpop.trf.xlu0
        %2367 = vxpose.xlu0.b32.start [1/16] %v2326, 128
        %2368 = vxpose.xlu0.b32.cont [2/16] 0.0, 128
        %2369 = vxpose.xlu0.b32.cont [3/16] 0.0, 128
        %2370 = vxpose.xlu0.b32.cont [4/16] 0.0, 128
        %2371 = vxpose.xlu0.b32.cont [5/16] 0.0, 128
        %2372 = vxpose.xlu0.b32.cont [6/16] 0.0, 128
        %2373 = vxpose.xlu0.b32.cont [7/16] 0.0, 128
        %2374 = vxpose.xlu0.b32.cont [8/16] 0.0, 128
        %2375 = vxpose.xlu0.b32.cont [9/16] 0.0, 128
        %2376 = vxpose.xlu0.b32.cont [10/16] 0.0, 128
        %2377 = vxpose.xlu0.b32.cont [11/16] 0.0, 128
        %2378 = vxpose.xlu0.b32.cont [12/16] 0.0, 128
        %2379 = vxpose.xlu0.b32.cont [13/16] 0.0, 128
        %2380 = vxpose.xlu0.b32.cont [14/16] 0.0, 128
        %2381 = vxpose.xlu0.b32.cont [15/16] 0.0, 128
        %2382 = vxpose.xlu0.b32.end [16/16] 0.0, 128
        %v2383 = vpop.trf.xlu0
        %v2384 = vpop.trf.xlu0
        %v2385 = vpop.trf.xlu0
        %v2386 = vpop.trf.xlu0
        %v2387 = vpop.trf.xlu0
        %v2388 = vpop.trf.xlu0
        %v2389 = vpop.trf.xlu0
        %v2390 = vpop.trf.xlu0
        %v2391 = vpop.trf.xlu0
        %v2392 = vpop.trf.xlu0
        %v2393 = vpop.trf.xlu0
        %v2394 = vpop.trf.xlu0
        %v2395 = vpop.trf.xlu0
        %v2396 = vpop.trf.xlu0
        %v2397 = vpop.trf.xlu0
        %v2398 = vpop.trf.xlu0
        %2399 = vxpose.xlu0.b32.start [1/16] %v2328, 128
        %2400 = vxpose.xlu0.b32.cont [2/16] 0.0, 128
        %2401 = vxpose.xlu0.b32.cont [3/16] 0.0, 128
        %2402 = vxpose.xlu0.b32.cont [4/16] 0.0, 128
        %2403 = vxpose.xlu0.b32.cont [5/16] 0.0, 128
        %2404 = vxpose.xlu0.b32.cont [6/16] 0.0, 128
        %2405 = vxpose.xlu0.b32.cont [7/16] 0.0, 128
        %2406 = vxpose.xlu0.b32.cont [8/16] 0.0, 128
        %2407 = vxpose.xlu0.b32.cont [9/16] 0.0, 128
        %2408 = vxpose.xlu0.b32.cont [10/16] 0.0, 128
        %2409 = vxpose.xlu0.b32.cont [11/16] 0.0, 128
        %2410 = vxpose.xlu0.b32.cont [12/16] 0.0, 128
        %2411 = vxpose.xlu0.b32.cont [13/16] 0.0, 128
        %2412 = vxpose.xlu0.b32.cont [14/16] 0.0, 128
        %2413 = vxpose.xlu0.b32.cont [15/16] 0.0, 128
        %2414 = vxpose.xlu0.b32.end [16/16] 0.0, 128
        %v2415 = vpop.trf.xlu0
        %v2416 = vpop.trf.xlu0
        %v2417 = vpop.trf.xlu0
        %v2418 = vpop.trf.xlu0
        %v2419 = vpop.trf.xlu0
        %v2420 = vpop.trf.xlu0
        %v2421 = vpop.trf.xlu0
        %v2422 = vpop.trf.xlu0
        %v2423 = vpop.trf.xlu0
        %v2424 = vpop.trf.xlu0
        %v2425 = vpop.trf.xlu0
        %v2426 = vpop.trf.xlu0
        %v2427 = vpop.trf.xlu0
        %v2428 = vpop.trf.xlu0
        %v2429 = vpop.trf.xlu0
        %v2430 = vpop.trf.xlu0
        %2431 = vxpose.xlu0.b32.start [1/16] %v2330, 128
        %2432 = vxpose.xlu0.b32.cont [2/16] 0.0, 128
        %2433 = vxpose.xlu0.b32.cont [3/16] 0.0, 128
        %2434 = vxpose.xlu0.b32.cont [4/16] 0.0, 128
        %2435 = vxpose.xlu0.b32.cont [5/16] 0.0, 128
        %2436 = vxpose.xlu0.b32.cont [6/16] 0.0, 128
        %2437 = vxpose.xlu0.b32.cont [7/16] 0.0, 128
        %2438 = vxpose.xlu0.b32.cont [8/16] 0.0, 128
        %2439 = vxpose.xlu0.b32.cont [9/16] 0.0, 128
        %2440 = vxpose.xlu0.b32.cont [10/16] 0.0, 128
        %2441 = vxpose.xlu0.b32.cont [11/16] 0.0, 128
        %2442 = vxpose.xlu0.b32.cont [12/16] 0.0, 128
        %2443 = vxpose.xlu0.b32.cont [13/16] 0.0, 128
        %2444 = vxpose.xlu0.b32.cont [14/16] 0.0, 128
        %2445 = vxpose.xlu0.b32.cont [15/16] 0.0, 128
        %2446 = vxpose.xlu0.b32.end [16/16] 0.0, 128
        %v2447 = vpop.trf.xlu0
        %v2448 = vpop.trf.xlu0
        %v2449 = vpop.trf.xlu0
        %v2450 = vpop.trf.xlu0
        %v2451 = vpop.trf.xlu0
        %v2452 = vpop.trf.xlu0
        %v2453 = vpop.trf.xlu0
        %v2454 = vpop.trf.xlu0
        %v2455 = vpop.trf.xlu0
        %v2456 = vpop.trf.xlu0
        %v2457 = vpop.trf.xlu0
        %v2458 = vpop.trf.xlu0
        %v2459 = vpop.trf.xlu0
        %v2460 = vpop.trf.xlu0
        %v2461 = vpop.trf.xlu0
        %v2462 = vpop.trf.xlu0
        %v2463 = vsel %vm877, %v2313, 0
        %2465 = vmatprep.subr.mxu0 0.0
        %2466 = vmatpush1.msra.mxu0 %v2351
        %2467 = vmatprep.subr.mxu0 0.0
        %2468 = vmatpush1.msra.mxu0 0.0
        %2469 = vmatprep.subr.mxu0 0.0
        %2470 = vmatpush1.msra.mxu0 0.0
        %2471 = vmatprep.subr.mxu0 0.0
        %2472 = vmatpush1.msra.mxu0 0.0
        %2473 = vmatprep.subr.mxu0 0.0
        %2474 = vmatpush1.msra.mxu0 0.0
        %2475 = vmatprep.subr.mxu0 0.0
        %2476 = vmatpush1.msra.mxu0 0.0
        %2477 = vmatprep.subr.mxu0 0.0
        %2478 = vmatpush1.msra.mxu0 0.0
        %2479 = vmatprep.subr.mxu0 0.0
        %2480 = vmatpush1.msra.mxu0 0.0
        %2481 = vmatprep.subr.mxu0 0.0
        %2482 = vmatpush1.msra.mxu0 0.0
        %2483 = vmatprep.subr.mxu0 0.0
        %2484 = vmatpush1.msra.mxu0 0.0
        %2485 = vmatprep.subr.mxu0 0.0
        %2486 = vmatpush1.msra.mxu0 0.0
        %2487 = vmatprep.subr.mxu0 0.0
        %2488 = vmatpush1.msra.mxu0 0.0
        %2489 = vmatprep.subr.mxu0 0.0
        %2490 = vmatpush1.msra.mxu0 0.0
        %2491 = vmatprep.subr.mxu0 0.0
        %2492 = vmatpush1.msra.mxu0 0.0
        %2493 = vmatprep.subr.mxu0 0.0
        %2494 = vmatpush1.msra.mxu0 0.0
        %2495 = vmatprep.subr.mxu0 0.0
        %2496 = vmatpush1.msra.mxu0 0.0
        %2497 = vmatprep.subr.mxu0 0.0
        %2498 = vmatpush1.msra.mxu0 0.0
        %2499 = vmatprep.subr.mxu0 0.0
        %2500 = vmatpush1.msra.mxu0 0.0
        %2501 = vmatprep.subr.mxu0 0.0
        %2502 = vmatpush1.msra.mxu0 0.0
        %2503 = vmatprep.subr.mxu0 0.0
        %2504 = vmatpush1.msra.mxu0 0.0
        %2505 = vmatprep.subr.mxu0 0.0
        %2506 = vmatpush1.msra.mxu0 0.0
        %2507 = vmatprep.subr.mxu0 0.0
        %2508 = vmatpush1.msra.mxu0 0.0
        %2509 = vmatprep.subr.mxu0 0.0
        %2510 = vmatpush1.msra.mxu0 0.0
        %2511 = vmatprep.subr.mxu0 0.0
        %2512 = vmatpush1.msra.mxu0 0.0
        %2513 = vmatprep.subr.mxu0 0.0
        %2514 = vmatpush1.msra.mxu0 0.0
        %2515 = vmatprep.subr.mxu0 0.0
        %2516 = vmatpush1.msra.mxu0 0.0
        %2517 = vmatprep.subr.mxu0 0.0
        %2518 = vmatpush1.msra.mxu0 0.0
        %2519 = vmatprep.subr.mxu0 0.0
        %2520 = vmatpush1.msra.mxu0 0.0
        %2521 = vmatprep.subr.mxu0 0.0
        %2522 = vmatpush1.msra.mxu0 0.0
        %2523 = vmatprep.subr.mxu0 0.0
        %2524 = vmatpush1.msra.mxu0 0.0
        %2525 = vmatprep.subr.mxu0 0.0
        %2526 = vmatpush1.msra.mxu0 0.0
        %2527 = vmatprep.subr.mxu0 0.0
        %2528 = vmatpush1.msra.mxu0 0.0
        %2529 = vmatprep.mubr.f32.mxu0 0.0
        %2530 = vmatmul.mubr.f32.gmra.mrb[0].mxu0 %v2463
        %v2531 = vpop.f32.mrb[0].mxu0
        %v2532 = vadd.f32 0.0, %v2531
        %v2533 = vpop.f32.mrb[0].mxu0
        %2534 = vdwg.mxu0
        %v2535 = vsel %vm877, %v2318, 0
        %2537 = vmatprep.subr.mxu0 0.0
        %2538 = vmatpush1.msra.mxu0 %v2383
        %2539 = vmatprep.subr.mxu0 0.0
        %2540 = vmatpush1.msra.mxu0 0.0
        %2541 = vmatprep.subr.mxu0 0.0
        %2542 = vmatpush1.msra.mxu0 0.0
        %2543 = vmatprep.subr.mxu0 0.0
        %2544 = vmatpush1.msra.mxu0 0.0
        %2545 = vmatprep.subr.mxu0 0.0
        %2546 = vmatpush1.msra.mxu0 0.0
        %2547 = vmatprep.subr.mxu0 0.0
        %2548 = vmatpush1.msra.mxu0 0.0
        %2549 = vmatprep.subr.mxu0 0.0
        %2550 = vmatpush1.msra.mxu0 0.0
        %2551 = vmatprep.subr.mxu0 0.0
        %2552 = vmatpush1.msra.mxu0 0.0
        %2553 = vmatprep.subr.mxu0 0.0
        %2554 = vmatpush1.msra.mxu0 0.0
        %2555 = vmatprep.subr.mxu0 0.0
        %2556 = vmatpush1.msra.mxu0 0.0
        %2557 = vmatprep.subr.mxu0 0.0
        %2558 = vmatpush1.msra.mxu0 0.0
        %2559 = vmatprep.subr.mxu0 0.0
        %2560 = vmatpush1.msra.mxu0 0.0
        %2561 = vmatprep.subr.mxu0 0.0
        %2562 = vmatpush1.msra.mxu0 0.0
        %2563 = vmatprep.subr.mxu0 0.0
        %2564 = vmatpush1.msra.mxu0 0.0
        %2565 = vmatprep.subr.mxu0 0.0
        %2566 = vmatpush1.msra.mxu0 0.0
        %2567 = vmatprep.subr.mxu0 0.0
        %2568 = vmatpush1.msra.mxu0 0.0
        %2569 = vmatprep.subr.mxu0 0.0
        %2570 = vmatpush1.msra.mxu0 0.0
        %2571 = vmatprep.subr.mxu0 0.0
        %2572 = vmatpush1.msra.mxu0 0.0
        %2573 = vmatprep.subr.mxu0 0.0
        %2574 = vmatpush1.msra.mxu0 0.0
        %2575 = vmatprep.subr.mxu0 0.0
        %2576 = vmatpush1.msra.mxu0 0.0
        %2577 = vmatprep.subr.mxu0 0.0
        %2578 = vmatpush1.msra.mxu0 0.0
        %2579 = vmatprep.subr.mxu0 0.0
        %2580 = vmatpush1.msra.mxu0 0.0
        %2581 = vmatprep.subr.mxu0 0.0
        %2582 = vmatpush1.msra.mxu0 0.0
        %2583 = vmatprep.subr.mxu0 0.0
        %2584 = vmatpush1.msra.mxu0 0.0
        %2585 = vmatprep.subr.mxu0 0.0
        %2586 = vmatpush1.msra.mxu0 0.0
        %2587 = vmatprep.subr.mxu0 0.0
        %2588 = vmatpush1.msra.mxu0 0.0
        %2589 = vmatprep.subr.mxu0 0.0
        %2590 = vmatpush1.msra.mxu0 0.0
        %2591 = vmatprep.subr.mxu0 0.0
        %2592 = vmatpush1.msra.mxu0 0.0
        %2593 = vmatprep.subr.mxu0 0.0
        %2594 = vmatpush1.msra.mxu0 0.0
        %2595 = vmatprep.subr.mxu0 0.0
        %2596 = vmatpush1.msra.mxu0 0.0
        %2597 = vmatprep.subr.mxu0 0.0
        %2598 = vmatpush1.msra.mxu0 0.0
        %2599 = vmatprep.subr.mxu0 0.0
        %2600 = vmatpush1.msra.mxu0 0.0
        %2601 = vmatprep.mubr.f32.mxu0 0.0
        %2602 = vmatmul.mubr.f32.gmra.mrb[0].mxu0 %v2535
        %v2603 = vpop.f32.mrb[0].mxu0
        %v2604 = vadd.f32 0.0, %v2603
        %v2605 = vpop.f32.mrb[0].mxu0
        %2606 = vdwg.mxu0
        %v2607 = vsel %vm877, %v2320, 0
        %2609 = vmatprep.subr.mxu0 0.0
        %2610 = vmatpush1.msra.mxu0 %v2415
        %2611 = vmatprep.subr.mxu0 0.0
        %2612 = vmatpush1.msra.mxu0 0.0
        %2613 = vmatprep.subr.mxu0 0.0
        %2614 = vmatpush1.msra.mxu0 0.0
        %2615 = vmatprep.subr.mxu0 0.0
        %2616 = vmatpush1.msra.mxu0 0.0
        %2617 = vmatprep.subr.mxu0 0.0
        %2618 = vmatpush1.msra.mxu0 0.0
        %2619 = vmatprep.subr.mxu0 0.0
        %2620 = vmatpush1.msra.mxu0 0.0
        %2621 = vmatprep.subr.mxu0 0.0
        %2622 = vmatpush1.msra.mxu0 0.0
        %2623 = vmatprep.subr.mxu0 0.0
        %2624 = vmatpush1.msra.mxu0 0.0
        %2625 = vmatprep.subr.mxu0 0.0
        %2626 = vmatpush1.msra.mxu0 0.0
        %2627 = vmatprep.subr.mxu0 0.0
        %2628 = vmatpush1.msra.mxu0 0.0
        %2629 = vmatprep.subr.mxu0 0.0
        %2630 = vmatpush1.msra.mxu0 0.0
        %2631 = vmatprep.subr.mxu0 0.0
        %2632 = vmatpush1.msra.mxu0 0.0
        %2633 = vmatprep.subr.mxu0 0.0
        %2634 = vmatpush1.msra.mxu0 0.0
        %2635 = vmatprep.subr.mxu0 0.0
        %2636 = vmatpush1.msra.mxu0 0.0
        %2637 = vmatprep.subr.mxu0 0.0
        %2638 = vmatpush1.msra.mxu0 0.0
        %2639 = vmatprep.subr.mxu0 0.0
        %2640 = vmatpush1.msra.mxu0 0.0
        %2641 = vmatprep.subr.mxu0 0.0
        %2642 = vmatpush1.msra.mxu0 0.0
        %2643 = vmatprep.subr.mxu0 0.0
        %2644 = vmatpush1.msra.mxu0 0.0
        %2645 = vmatprep.subr.mxu0 0.0
        %2646 = vmatpush1.msra.mxu0 0.0
        %2647 = vmatprep.subr.mxu0 0.0
        %2648 = vmatpush1.msra.mxu0 0.0
        %2649 = vmatprep.subr.mxu0 0.0
        %2650 = vmatpush1.msra.mxu0 0.0
        %2651 = vmatprep.subr.mxu0 0.0
        %2652 = vmatpush1.msra.mxu0 0.0
        %2653 = vmatprep.subr.mxu0 0.0
        %2654 = vmatpush1.msra.mxu0 0.0
        %2655 = vmatprep.subr.mxu0 0.0
        %2656 = vmatpush1.msra.mxu0 0.0
        %2657 = vmatprep.subr.mxu0 0.0
        %2658 = vmatpush1.msra.mxu0 0.0
        %2659 = vmatprep.subr.mxu0 0.0
        %2660 = vmatpush1.msra.mxu0 0.0
        %2661 = vmatprep.subr.mxu0 0.0
        %2662 = vmatpush1.msra.mxu0 0.0
        %2663 = vmatprep.subr.mxu0 0.0
        %2664 = vmatpush1.msra.mxu0 0.0
        %2665 = vmatprep.subr.mxu0 0.0
        %2666 = vmatpush1.msra.mxu0 0.0
        %2667 = vmatprep.subr.mxu0 0.0
        %2668 = vmatpush1.msra.mxu0 0.0
        %2669 = vmatprep.subr.mxu0 0.0
        %2670 = vmatpush1.msra.mxu0 0.0
        %2671 = vmatprep.subr.mxu0 0.0
        %2672 = vmatpush1.msra.mxu0 0.0
        %2673 = vmatprep.mubr.f32.mxu0 0.0
        %2674 = vmatmul.mubr.f32.gmra.mrb[0].mxu0 %v2607
        %v2675 = vpop.f32.mrb[0].mxu0
        %v2676 = vadd.f32 0.0, %v2675
        %v2677 = vpop.f32.mrb[0].mxu0
        %2678 = vdwg.mxu0
        %v2679 = vsel %vm877, %v2322, 0
        %2681 = vmatprep.subr.mxu0 0.0
        %2682 = vmatpush1.msra.mxu0 %v2447
        %2683 = vmatprep.subr.mxu0 0.0
        %2684 = vmatpush1.msra.mxu0 0.0
        %2685 = vmatprep.subr.mxu0 0.0
        %2686 = vmatpush1.msra.mxu0 0.0
        %2687 = vmatprep.subr.mxu0 0.0
        %2688 = vmatpush1.msra.mxu0 0.0
        %2689 = vmatprep.subr.mxu0 0.0
        %2690 = vmatpush1.msra.mxu0 0.0
        %2691 = vmatprep.subr.mxu0 0.0
        %2692 = vmatpush1.msra.mxu0 0.0
        %2693 = vmatprep.subr.mxu0 0.0
        %2694 = vmatpush1.msra.mxu0 0.0
        %2695 = vmatprep.subr.mxu0 0.0
        %2696 = vmatpush1.msra.mxu0 0.0
        %2697 = vmatprep.subr.mxu0 0.0
        %2698 = vmatpush1.msra.mxu0 0.0
        %2699 = vmatprep.subr.mxu0 0.0
        %2700 = vmatpush1.msra.mxu0 0.0
        %2701 = vmatprep.subr.mxu0 0.0
        %2702 = vmatpush1.msra.mxu0 0.0
        %2703 = vmatprep.subr.mxu0 0.0
        %2704 = vmatpush1.msra.mxu0 0.0
        %2705 = vmatprep.subr.mxu0 0.0
        %2706 = vmatpush1.msra.mxu0 0.0
        %2707 = vmatprep.subr.mxu0 0.0
        %2708 = vmatpush1.msra.mxu0 0.0
        %2709 = vmatprep.subr.mxu0 0.0
        %2710 = vmatpush1.msra.mxu0 0.0
        %2711 = vmatprep.subr.mxu0 0.0
        %2712 = vmatpush1.msra.mxu0 0.0
        %2713 = vmatprep.subr.mxu0 0.0
        %2714 = vmatpush1.msra.mxu0 0.0
        %2715 = vmatprep.subr.mxu0 0.0
        %2716 = vmatpush1.msra.mxu0 0.0
        %2717 = vmatprep.subr.mxu0 0.0
        %2718 = vmatpush1.msra.mxu0 0.0
        %2719 = vmatprep.subr.mxu0 0.0
        %2720 = vmatpush1.msra.mxu0 0.0
        %2721 = vmatprep.subr.mxu0 0.0
        %2722 = vmatpush1.msra.mxu0 0.0
        %2723 = vmatprep.subr.mxu0 0.0
        %2724 = vmatpush1.msra.mxu0 0.0
        %2725 = vmatprep.subr.mxu0 0.0
        %2726 = vmatpush1.msra.mxu0 0.0
        %2727 = vmatprep.subr.mxu0 0.0
        %2728 = vmatpush1.msra.mxu0 0.0
        %2729 = vmatprep.subr.mxu0 0.0
        %2730 = vmatpush1.msra.mxu0 0.0
        %2731 = vmatprep.subr.mxu0 0.0
        %2732 = vmatpush1.msra.mxu0 0.0
        %2733 = vmatprep.subr.mxu0 0.0
        %2734 = vmatpush1.msra.mxu0 0.0
        %2735 = vmatprep.subr.mxu0 0.0
        %2736 = vmatpush1.msra.mxu0 0.0
        %2737 = vmatprep.subr.mxu0 0.0
        %2738 = vmatpush1.msra.mxu0 0.0
        %2739 = vmatprep.subr.mxu0 0.0
        %2740 = vmatpush1.msra.mxu0 0.0
        %2741 = vmatprep.subr.mxu0 0.0
        %2742 = vmatpush1.msra.mxu0 0.0
        %2743 = vmatprep.subr.mxu0 0.0
        %2744 = vmatpush1.msra.mxu0 0.0
        %2745 = vmatprep.mubr.f32.mxu0 0.0
        %2746 = vmatmul.mubr.f32.gmra.mrb[0].mxu0 %v2679
        %v2747 = vpop.f32.mrb[0].mxu0
        %v2748 = vadd.f32 0.0, %v2747
        %v2749 = vpop.f32.mrb[0].mxu0
        %2750 = vdwg.mxu0
        %v2751 = vsel %vm877, %v2532, -inf
        %2752 = vmax.xlane.f32.xlu0 %v2751
        %v2753 = vpop.xlane.xlu0 %2752
        %v2754 = vsel %vm877, %v2604, -inf
        %2755 = vmax.xlane.f32.xlu0 %v2754
        %v2756 = vpop.xlane.xlu0 %2755
        %v2757 = vsel %vm877, %v2676, -inf
        %2758 = vmax.xlane.f32.xlu0 %v2757
        %v2759 = vpop.xlane.xlu0 %2758
        %v2760 = vsel %vm877, %v2748, -inf
        %2761 = vmax.xlane.f32.xlu0 %v2760
        %v2762 = vpop.xlane.xlu0 %2761
        %v2763 = vsub.f32 %v2532, %v2753
        %v2764 = vsub.f32 %v2604, %v2756
        %v2765 = vsub.f32 %v2676, %v2759
        %v2766 = vsub.f32 %v2748, %v2762
        %v2767 = vmul.f32 %v2763, 1.442695
        %v2768 = vpow.pop %v2767
        %v2769 = vmul.f32 %v2764, 1.442695
        %v2770 = vpow.pop %v2769
        %v2771 = vmul.f32 %v2765, 1.442695
        %v2772 = vpow.pop %v2771
        %v2773 = vmul.f32 %v2766, 1.442695
        %v2774 = vpow.pop %v2773
        %v2775 = vsel %vm877, %v2768, 0.0
        %2776 = vadd.xlane.f32.xlu0 %v2775
        %v2777 = vpop.xlane.xlu0 %2776
        %v2778 = vsel %vm877, %v2770, 0.0
        %2779 = vadd.xlane.f32.xlu0 %v2778
        %v2780 = vpop.xlane.xlu0 %2779
        %v2781 = vsel %vm877, %v2772, 0.0
        %2782 = vadd.xlane.f32.xlu0 %v2781
        %v2783 = vpop.xlane.xlu0 %2782
        %v2784 = vsel %vm877, %v2774, 0.0
        %2785 = vadd.xlane.f32.xlu0 %v2784
        %v2786 = vpop.xlane.xlu0 %2785
        %v2787 = vrcp.pop %v2777
        %v2788 = vrcp.pop %v2780
        %v2789 = vrcp.pop %v2783
        %v2790 = vrcp.pop %v2786
        %v2791 = vmul.f32 %v2768, %v2787
        %v2792 = vmul.f32 %v2770, %v2788
        %v2793 = vmul.f32 %v2772, %v2789
        %v2794 = vmul.f32 %v2774, %v2790
        %2795 = vrot.lane.b32.xlu0 %v2313, 64
        %v2796 = vpop.permute.xlu0 %2795
        %2797 = vrot.lane.b32.xlu0 %v2318, 64
        %v2798 = vpop.permute.xlu0 %2797
        %2799 = vrot.lane.b32.xlu0 %v2320, 64
        %v2800 = vpop.permute.xlu0 %2799
        %2801 = vrot.lane.b32.xlu0 %v2322, 64
        %v2802 = vpop.permute.xlu0 %2801
        %2807 = vxpose.xlu0.b32.start [1/16] %v2796, 128
        %2808 = vxpose.xlu0.b32.cont [2/16] 0.0, 128
        %2809 = vxpose.xlu0.b32.cont [3/16] 0.0, 128
        %2810 = vxpose.xlu0.b32.cont [4/16] 0.0, 128
        %2811 = vxpose.xlu0.b32.cont [5/16] 0.0, 128
        %2812 = vxpose.xlu0.b32.cont [6/16] 0.0, 128
        %2813 = vxpose.xlu0.b32.cont [7/16] 0.0, 128
        %2814 = vxpose.xlu0.b32.cont [8/16] 0.0, 128
        %2815 = vxpose.xlu0.b32.cont [9/16] 0.0, 128
        %2816 = vxpose.xlu0.b32.cont [10/16] 0.0, 128
        %2817 = vxpose.xlu0.b32.cont [11/16] 0.0, 128
        %2818 = vxpose.xlu0.b32.cont [12/16] 0.0, 128
        %2819 = vxpose.xlu0.b32.cont [13/16] 0.0, 128
        %2820 = vxpose.xlu0.b32.cont [14/16] 0.0, 128
        %2821 = vxpose.xlu0.b32.cont [15/16] 0.0, 128
        %2822 = vxpose.xlu0.b32.end [16/16] 0.0, 128
        %v2823 = vpop.trf.xlu0
        %v2824 = vpop.trf.xlu0
        %v2825 = vpop.trf.xlu0
        %v2826 = vpop.trf.xlu0
        %v2827 = vpop.trf.xlu0
        %v2828 = vpop.trf.xlu0
        %v2829 = vpop.trf.xlu0
        %v2830 = vpop.trf.xlu0
        %v2831 = vpop.trf.xlu0
        %v2832 = vpop.trf.xlu0
        %v2833 = vpop.trf.xlu0
        %v2834 = vpop.trf.xlu0
        %v2835 = vpop.trf.xlu0
        %v2836 = vpop.trf.xlu0
        %v2837 = vpop.trf.xlu0
        %v2838 = vpop.trf.xlu0
        %2839 = vxpose.xlu0.b32.start [1/16] %v2798, 128
        %2840 = vxpose.xlu0.b32.cont [2/16] 0.0, 128
        %2841 = vxpose.xlu0.b32.cont [3/16] 0.0, 128
        %2842 = vxpose.xlu0.b32.cont [4/16] 0.0, 128
        %2843 = vxpose.xlu0.b32.cont [5/16] 0.0, 128
        %2844 = vxpose.xlu0.b32.cont [6/16] 0.0, 128
        %2845 = vxpose.xlu0.b32.cont [7/16] 0.0, 128
        %2846 = vxpose.xlu0.b32.cont [8/16] 0.0, 128
        %2847 = vxpose.xlu0.b32.cont [9/16] 0.0, 128
        %2848 = vxpose.xlu0.b32.cont [10/16] 0.0, 128
        %2849 = vxpose.xlu0.b32.cont [11/16] 0.0, 128
        %2850 = vxpose.xlu0.b32.cont [12/16] 0.0, 128
        %2851 = vxpose.xlu0.b32.cont [13/16] 0.0, 128
        %2852 = vxpose.xlu0.b32.cont [14/16] 0.0, 128
        %2853 = vxpose.xlu0.b32.cont [15/16] 0.0, 128
        %2854 = vxpose.xlu0.b32.end [16/16] 0.0, 128
        %v2855 = vpop.trf.xlu0
        %v2856 = vpop.trf.xlu0
        %v2857 = vpop.trf.xlu0
        %v2858 = vpop.trf.xlu0
        %v2859 = vpop.trf.xlu0
        %v2860 = vpop.trf.xlu0
        %v2861 = vpop.trf.xlu0
        %v2862 = vpop.trf.xlu0
        %v2863 = vpop.trf.xlu0
        %v2864 = vpop.trf.xlu0
        %v2865 = vpop.trf.xlu0
        %v2866 = vpop.trf.xlu0
        %v2867 = vpop.trf.xlu0
        %v2868 = vpop.trf.xlu0
        %v2869 = vpop.trf.xlu0
        %v2870 = vpop.trf.xlu0
        %2871 = vxpose.xlu0.b32.start [1/16] %v2800, 128
        %2872 = vxpose.xlu0.b32.cont [2/16] 0.0, 128
        %2873 = vxpose.xlu0.b32.cont [3/16] 0.0, 128
        %2874 = vxpose.xlu0.b32.cont [4/16] 0.0, 128
        %2875 = vxpose.xlu0.b32.cont [5/16] 0.0, 128
        %2876 = vxpose.xlu0.b32.cont [6/16] 0.0, 128
        %2877 = vxpose.xlu0.b32.cont [7/16] 0.0, 128
        %2878 = vxpose.xlu0.b32.cont [8/16] 0.0, 128
        %2879 = vxpose.xlu0.b32.cont [9/16] 0.0, 128
        %2880 = vxpose.xlu0.b32.cont [10/16] 0.0, 128
        %2881 = vxpose.xlu0.b32.cont [11/16] 0.0, 128
        %2882 = vxpose.xlu0.b32.cont [12/16] 0.0, 128
        %2883 = vxpose.xlu0.b32.cont [13/16] 0.0, 128
        %2884 = vxpose.xlu0.b32.cont [14/16] 0.0, 128
        %2885 = vxpose.xlu0.b32.cont [15/16] 0.0, 128
        %2886 = vxpose.xlu0.b32.end [16/16] 0.0, 128
        %v2887 = vpop.trf.xlu0
        %v2888 = vpop.trf.xlu0
        %v2889 = vpop.trf.xlu0
        %v2890 = vpop.trf.xlu0
        %v2891 = vpop.trf.xlu0
        %v2892 = vpop.trf.xlu0
        %v2893 = vpop.trf.xlu0
        %v2894 = vpop.trf.xlu0
        %v2895 = vpop.trf.xlu0
        %v2896 = vpop.trf.xlu0
        %v2897 = vpop.trf.xlu0
        %v2898 = vpop.trf.xlu0
        %v2899 = vpop.trf.xlu0
        %v2900 = vpop.trf.xlu0
        %v2901 = vpop.trf.xlu0
        %v2902 = vpop.trf.xlu0
        %2903 = vxpose.xlu0.b32.start [1/16] %v2802, 128
        %2904 = vxpose.xlu0.b32.cont [2/16] 0.0, 128
        %2905 = vxpose.xlu0.b32.cont [3/16] 0.0, 128
        %2906 = vxpose.xlu0.b32.cont [4/16] 0.0, 128
        %2907 = vxpose.xlu0.b32.cont [5/16] 0.0, 128
        %2908 = vxpose.xlu0.b32.cont [6/16] 0.0, 128
        %2909 = vxpose.xlu0.b32.cont [7/16] 0.0, 128
        %2910 = vxpose.xlu0.b32.cont [8/16] 0.0, 128
        %2911 = vxpose.xlu0.b32.cont [9/16] 0.0, 128
        %2912 = vxpose.xlu0.b32.cont [10/16] 0.0, 128
        %2913 = vxpose.xlu0.b32.cont [11/16] 0.0, 128
        %2914 = vxpose.xlu0.b32.cont [12/16] 0.0, 128
        %2915 = vxpose.xlu0.b32.cont [13/16] 0.0, 128
        %2916 = vxpose.xlu0.b32.cont [14/16] 0.0, 128
        %2917 = vxpose.xlu0.b32.cont [15/16] 0.0, 128
        %2918 = vxpose.xlu0.b32.end [16/16] 0.0, 128
        %v2919 = vpop.trf.xlu0
        %v2920 = vpop.trf.xlu0
        %v2921 = vpop.trf.xlu0
        %v2922 = vpop.trf.xlu0
        %v2923 = vpop.trf.xlu0
        %v2924 = vpop.trf.xlu0
        %v2925 = vpop.trf.xlu0
        %v2926 = vpop.trf.xlu0
        %v2927 = vpop.trf.xlu0
        %v2928 = vpop.trf.xlu0
        %v2929 = vpop.trf.xlu0
        %v2930 = vpop.trf.xlu0
        %v2931 = vpop.trf.xlu0
        %v2932 = vpop.trf.xlu0
        %v2933 = vpop.trf.xlu0
        %v2934 = vpop.trf.xlu0
        %v2936 = vsel %vm877, %v2823, 0
        %v2939 = vsel %vm877, %v2791, 0
        %2941 = vmatprep.subr.mxu0 0.0
        %2942 = vmatpush1.xpose.msra.mxu0 %v2939
        %2943 = vmatprep.subr.mxu0 0.0
        %2944 = vmatpush1.xpose.msra.mxu0 0.0
        %2945 = vmatprep.subr.mxu0 0.0
        %2946 = vmatpush1.xpose.msra.mxu0 0.0
        %2947 = vmatprep.subr.mxu0 0.0
        %2948 = vmatpush1.xpose.msra.mxu0 0.0
        %2949 = vmatprep.subr.mxu0 0.0
        %2950 = vmatpush1.xpose.msra.mxu0 0.0
        %2951 = vmatprep.subr.mxu0 0.0
        %2952 = vmatpush1.xpose.msra.mxu0 0.0
        %2953 = vmatprep.subr.mxu0 0.0
        %2954 = vmatpush1.xpose.msra.mxu0 0.0
        %2955 = vmatprep.subr.mxu0 0.0
        %2956 = vmatpush1.xpose.msra.mxu0 0.0
        %2957 = vmatprep.subr.mxu0 0.0
        %2958 = vmatpush1.xpose.msra.mxu0 0.0
        %2959 = vmatprep.subr.mxu0 0.0
        %2960 = vmatpush1.xpose.msra.mxu0 0.0
        %2961 = vmatprep.subr.mxu0 0.0
        %2962 = vmatpush1.xpose.msra.mxu0 0.0
        %2963 = vmatprep.subr.mxu0 0.0
        %2964 = vmatpush1.xpose.msra.mxu0 0.0
        %2965 = vmatprep.subr.mxu0 0.0
        %2966 = vmatpush1.xpose.msra.mxu0 0.0
        %2967 = vmatprep.subr.mxu0 0.0
        %2968 = vmatpush1.xpose.msra.mxu0 0.0
        %2969 = vmatprep.subr.mxu0 0.0
        %2970 = vmatpush1.xpose.msra.mxu0 0.0
        %2971 = vmatprep.subr.mxu0 0.0
        %2972 = vmatpush1.xpose.msra.mxu0 0.0
        %2973 = vmatprep.subr.mxu0 0.0
        %2974 = vmatpush1.xpose.msra.mxu0 0.0
        %2975 = vmatprep.subr.mxu0 0.0
        %2976 = vmatpush1.xpose.msra.mxu0 0.0
        %2977 = vmatprep.subr.mxu0 0.0
        %2978 = vmatpush1.xpose.msra.mxu0 0.0
        %2979 = vmatprep.subr.mxu0 0.0
        %2980 = vmatpush1.xpose.msra.mxu0 0.0
        %2981 = vmatprep.subr.mxu0 0.0
        %2982 = vmatpush1.xpose.msra.mxu0 0.0
        %2983 = vmatprep.subr.mxu0 0.0
        %2984 = vmatpush1.xpose.msra.mxu0 0.0
        %2985 = vmatprep.subr.mxu0 0.0
        %2986 = vmatpush1.xpose.msra.mxu0 0.0
        %2987 = vmatprep.subr.mxu0 0.0
        %2988 = vmatpush1.xpose.msra.mxu0 0.0
        %2989 = vmatprep.subr.mxu0 0.0
        %2990 = vmatpush1.xpose.msra.mxu0 0.0
        %2991 = vmatprep.subr.mxu0 0.0
        %2992 = vmatpush1.xpose.msra.mxu0 0.0
        %2993 = vmatprep.subr.mxu0 0.0
        %2994 = vmatpush1.xpose.msra.mxu0 0.0
        %2995 = vmatprep.subr.mxu0 0.0
        %2996 = vmatpush1.xpose.msra.mxu0 0.0
        %2997 = vmatprep.subr.mxu0 0.0
        %2998 = vmatpush1.xpose.msra.mxu0 0.0
        %2999 = vmatprep.subr.mxu0 0.0
        %3000 = vmatpush1.xpose.msra.mxu0 0.0
        %3001 = vmatprep.subr.mxu0 0.0
        %3002 = vmatpush1.xpose.msra.mxu0 0.0
        %3003 = vmatprep.subr.mxu0 0.0
        %3004 = vmatpush1.xpose.msra.mxu0 0.0
        %3005 = vmatprep.mubr.f32.mxu0 0.0
        %3006 = vmatmul.mubr.f32.gmra.mrb[0].mxu0 %v2936
        %v3007 = vpop.f32.mrb[0].mxu0
        %v3008 = vadd.f32 0.0, %v3007
        %v3009 = vpop.f32.mrb[0].mxu0
        %3010 = vdwg.mxu0
        %v3012 = vsel %vm877, %v2855, 0
        %v3015 = vsel %vm877, %v2792, 0
        %3017 = vmatprep.subr.mxu0 0.0
        %3018 = vmatpush1.xpose.msra.mxu0 %v3015
        %3019 = vmatprep.subr.mxu0 0.0
        %3020 = vmatpush1.xpose.msra.mxu0 0.0
        %3021 = vmatprep.subr.mxu0 0.0
        %3022 = vmatpush1.xpose.msra.mxu0 0.0
        %3023 = vmatprep.subr.mxu0 0.0
        %3024 = vmatpush1.xpose.msra.mxu0 0.0
        %3025 = vmatprep.subr.mxu0 0.0
        %3026 = vmatpush1.xpose.msra.mxu0 0.0
        %3027 = vmatprep.subr.mxu0 0.0
        %3028 = vmatpush1.xpose.msra.mxu0 0.0
        %3029 = vmatprep.subr.mxu0 0.0
        %3030 = vmatpush1.xpose.msra.mxu0 0.0
        %3031 = vmatprep.subr.mxu0 0.0
        %3032 = vmatpush1.xpose.msra.mxu0 0.0
        %3033 = vmatprep.subr.mxu0 0.0
        %3034 = vmatpush1.xpose.msra.mxu0 0.0
        %3035 = vmatprep.subr.mxu0 0.0
        %3036 = vmatpush1.xpose.msra.mxu0 0.0
        %3037 = vmatprep.subr.mxu0 0.0
        %3038 = vmatpush1.xpose.msra.mxu0 0.0
        %3039 = vmatprep.subr.mxu0 0.0
        %3040 = vmatpush1.xpose.msra.mxu0 0.0
        %3041 = vmatprep.subr.mxu0 0.0
        %3042 = vmatpush1.xpose.msra.mxu0 0.0
        %3043 = vmatprep.subr.mxu0 0.0
        %3044 = vmatpush1.xpose.msra.mxu0 0.0
        %3045 = vmatprep.subr.mxu0 0.0
        %3046 = vmatpush1.xpose.msra.mxu0 0.0
        %3047 = vmatprep.subr.mxu0 0.0
        %3048 = vmatpush1.xpose.msra.mxu0 0.0
        %3049 = vmatprep.subr.mxu0 0.0
        %3050 = vmatpush1.xpose.msra.mxu0 0.0
        %3051 = vmatprep.subr.mxu0 0.0
        %3052 = vmatpush1.xpose.msra.mxu0 0.0
        %3053 = vmatprep.subr.mxu0 0.0
        %3054 = vmatpush1.xpose.msra.mxu0 0.0
        %3055 = vmatprep.subr.mxu0 0.0
        %3056 = vmatpush1.xpose.msra.mxu0 0.0
        %3057 = vmatprep.subr.mxu0 0.0
        %3058 = vmatpush1.xpose.msra.mxu0 0.0
        %3059 = vmatprep.subr.mxu0 0.0
        %3060 = vmatpush1.xpose.msra.mxu0 0.0
        %3061 = vmatprep.subr.mxu0 0.0
        %3062 = vmatpush1.xpose.msra.mxu0 0.0
        %3063 = vmatprep.subr.mxu0 0.0
        %3064 = vmatpush1.xpose.msra.mxu0 0.0
        %3065 = vmatprep.subr.mxu0 0.0
        %3066 = vmatpush1.xpose.msra.mxu0 0.0
        %3067 = vmatprep.subr.mxu0 0.0
        %3068 = vmatpush1.xpose.msra.mxu0 0.0
        %3069 = vmatprep.subr.mxu0 0.0
        %3070 = vmatpush1.xpose.msra.mxu0 0.0
        %3071 = vmatprep.subr.mxu0 0.0
        %3072 = vmatpush1.xpose.msra.mxu0 0.0
        %3073 = vmatprep.subr.mxu0 0.0
        %3074 = vmatpush1.xpose.msra.mxu0 0.0
        %3075 = vmatprep.subr.mxu0 0.0
        %3076 = vmatpush1.xpose.msra.mxu0 0.0
        %3077 = vmatprep.subr.mxu0 0.0
        %3078 = vmatpush1.xpose.msra.mxu0 0.0
        %3079 = vmatprep.subr.mxu0 0.0
        %3080 = vmatpush1.xpose.msra.mxu0 0.0
        %3081 = vmatprep.mubr.f32.mxu0 0.0
        %3082 = vmatmul.mubr.f32.gmra.mrb[0].mxu0 %v3012
        %v3083 = vpop.f32.mrb[0].mxu0
        %v3084 = vadd.f32 0.0, %v3083
        %v3085 = vpop.f32.mrb[0].mxu0
        %3086 = vdwg.mxu0
        %v3088 = vsel %vm877, %v2887, 0
        %v3091 = vsel %vm877, %v2793, 0
        %3093 = vmatprep.subr.mxu0 0.0
        %3094 = vmatpush1.xpose.msra.mxu0 %v3091
        %3095 = vmatprep.subr.mxu0 0.0
        %3096 = vmatpush1.xpose.msra.mxu0 0.0
        %3097 = vmatprep.subr.mxu0 0.0
        %3098 = vmatpush1.xpose.msra.mxu0 0.0
        %3099 = vmatprep.subr.mxu0 0.0
        %3100 = vmatpush1.xpose.msra.mxu0 0.0
        %3101 = vmatprep.subr.mxu0 0.0
        %3102 = vmatpush1.xpose.msra.mxu0 0.0
        %3103 = vmatprep.subr.mxu0 0.0
        %3104 = vmatpush1.xpose.msra.mxu0 0.0
        %3105 = vmatprep.subr.mxu0 0.0
        %3106 = vmatpush1.xpose.msra.mxu0 0.0
        %3107 = vmatprep.subr.mxu0 0.0
        %3108 = vmatpush1.xpose.msra.mxu0 0.0
        %3109 = vmatprep.subr.mxu0 0.0
        %3110 = vmatpush1.xpose.msra.mxu0 0.0
        %3111 = vmatprep.subr.mxu0 0.0
        %3112 = vmatpush1.xpose.msra.mxu0 0.0
        %3113 = vmatprep.subr.mxu0 0.0
        %3114 = vmatpush1.xpose.msra.mxu0 0.0
        %3115 = vmatprep.subr.mxu0 0.0
        %3116 = vmatpush1.xpose.msra.mxu0 0.0
        %3117 = vmatprep.subr.mxu0 0.0
        %3118 = vmatpush1.xpose.msra.mxu0 0.0
        %3119 = vmatprep.subr.mxu0 0.0
        %3120 = vmatpush1.xpose.msra.mxu0 0.0
        %3121 = vmatprep.subr.mxu0 0.0
        %3122 = vmatpush1.xpose.msra.mxu0 0.0
        %3123 = vmatprep.subr.mxu0 0.0
        %3124 = vmatpush1.xpose.msra.mxu0 0.0
        %3125 = vmatprep.subr.mxu0 0.0
        %3126 = vmatpush1.xpose.msra.mxu0 0.0
        %3127 = vmatprep.subr.mxu0 0.0
        %3128 = vmatpush1.xpose.msra.mxu0 0.0
        %3129 = vmatprep.subr.mxu0 0.0
        %3130 = vmatpush1.xpose.msra.mxu0 0.0
        %3131 = vmatprep.subr.mxu0 0.0
        %3132 = vmatpush1.xpose.msra.mxu0 0.0
        %3133 = vmatprep.subr.mxu0 0.0
        %3134 = vmatpush1.xpose.msra.mxu0 0.0
        %3135 = vmatprep.subr.mxu0 0.0
        %3136 = vmatpush1.xpose.msra.mxu0 0.0
        %3137 = vmatprep.subr.mxu0 0.0
        %3138 = vmatpush1.xpose.msra.mxu0 0.0
        %3139 = vmatprep.subr.mxu0 0.0
        %3140 = vmatpush1.xpose.msra.mxu0 0.0
        %3141 = vmatprep.subr.mxu0 0.0
        %3142 = vmatpush1.xpose.msra.mxu0 0.0
        %3143 = vmatprep.subr.mxu0 0.0
        %3144 = vmatpush1.xpose.msra.mxu0 0.0
        %3145 = vmatprep.subr.mxu0 0.0
        %3146 = vmatpush1.xpose.msra.mxu0 0.0
        %3147 = vmatprep.subr.mxu0 0.0
        %3148 = vmatpush1.xpose.msra.mxu0 0.0
        %3149 = vmatprep.subr.mxu0 0.0
        %3150 = vmatpush1.xpose.msra.mxu0 0.0
        %3151 = vmatprep.subr.mxu0 0.0
        %3152 = vmatpush1.xpose.msra.mxu0 0.0
        %3153 = vmatprep.subr.mxu0 0.0
        %3154 = vmatpush1.xpose.msra.mxu0 0.0
        %3155 = vmatprep.subr.mxu0 0.0
        %3156 = vmatpush1.xpose.msra.mxu0 0.0
        %3157 = vmatprep.mubr.f32.mxu0 0.0
        %3158 = vmatmul.mubr.f32.gmra.mrb[0].mxu0 %v3088
        %v3159 = vpop.f32.mrb[0].mxu0
        %v3160 = vadd.f32 0.0, %v3159
        %v3161 = vpop.f32.mrb[0].mxu0
        %3162 = vdwg.mxu0
        %v3164 = vsel %vm877, %v2919, 0
        %v3167 = vsel %vm877, %v2794, 0
        %3169 = vmatprep.subr.mxu0 0.0
        %3170 = vmatpush1.xpose.msra.mxu0 %v3167
        %3171 = vmatprep.subr.mxu0 0.0
        %3172 = vmatpush1.xpose.msra.mxu0 0.0
        %3173 = vmatprep.subr.mxu0 0.0
        %3174 = vmatpush1.xpose.msra.mxu0 0.0
        %3175 = vmatprep.subr.mxu0 0.0
        %3176 = vmatpush1.xpose.msra.mxu0 0.0
        %3177 = vmatprep.subr.mxu0 0.0
        %3178 = vmatpush1.xpose.msra.mxu0 0.0
        %3179 = vmatprep.subr.mxu0 0.0
        %3180 = vmatpush1.xpose.msra.mxu0 0.0
        %3181 = vmatprep.subr.mxu0 0.0
        %3182 = vmatpush1.xpose.msra.mxu0 0.0
        %3183 = vmatprep.subr.mxu0 0.0
        %3184 = vmatpush1.xpose.msra.mxu0 0.0
        %3185 = vmatprep.subr.mxu0 0.0
        %3186 = vmatpush1.xpose.msra.mxu0 0.0
        %3187 = vmatprep.subr.mxu0 0.0
        %3188 = vmatpush1.xpose.msra.mxu0 0.0
        %3189 = vmatprep.subr.mxu0 0.0
        %3190 = vmatpush1.xpose.msra.mxu0 0.0
        %3191 = vmatprep.subr.mxu0 0.0
        %3192 = vmatpush1.xpose.msra.mxu0 0.0
        %3193 = vmatprep.subr.mxu0 0.0
        %3194 = vmatpush1.xpose.msra.mxu0 0.0
        %3195 = vmatprep.subr.mxu0 0.0
        %3196 = vmatpush1.xpose.msra.mxu0 0.0
        %3197 = vmatprep.subr.mxu0 0.0
        %3198 = vmatpush1.xpose.msra.mxu0 0.0
        %3199 = vmatprep.subr.mxu0 0.0
        %3200 = vmatpush1.xpose.msra.mxu0 0.0
        %3201 = vmatprep.subr.mxu0 0.0
        %3202 = vmatpush1.xpose.msra.mxu0 0.0
        %3203 = vmatprep.subr.mxu0 0.0
        %3204 = vmatpush1.xpose.msra.mxu0 0.0
        %3205 = vmatprep.subr.mxu0 0.0
        %3206 = vmatpush1.xpose.msra.mxu0 0.0
        %3207 = vmatprep.subr.mxu0 0.0
        %3208 = vmatpush1.xpose.msra.mxu0 0.0
        %3209 = vmatprep.subr.mxu0 0.0
        %3210 = vmatpush1.xpose.msra.mxu0 0.0
        %3211 = vmatprep.subr.mxu0 0.0
        %3212 = vmatpush1.xpose.msra.mxu0 0.0
        %3213 = vmatprep.subr.mxu0 0.0
        %3214 = vmatpush1.xpose.msra.mxu0 0.0
        %3215 = vmatprep.subr.mxu0 0.0
        %3216 = vmatpush1.xpose.msra.mxu0 0.0
        %3217 = vmatprep.subr.mxu0 0.0
        %3218 = vmatpush1.xpose.msra.mxu0 0.0
        %3219 = vmatprep.subr.mxu0 0.0
        %3220 = vmatpush1.xpose.msra.mxu0 0.0
        %3221 = vmatprep.subr.mxu0 0.0
        %3222 = vmatpush1.xpose.msra.mxu0 0.0
        %3223 = vmatprep.subr.mxu0 0.0
        %3224 = vmatpush1.xpose.msra.mxu0 0.0
        %3225 = vmatprep.subr.mxu0 0.0
        %3226 = vmatpush1.xpose.msra.mxu0 0.0
        %3227 = vmatprep.subr.mxu0 0.0
        %3228 = vmatpush1.xpose.msra.mxu0 0.0
        %3229 = vmatprep.subr.mxu0 0.0
        %3230 = vmatpush1.xpose.msra.mxu0 0.0
        %3231 = vmatprep.subr.mxu0 0.0
        %3232 = vmatpush1.xpose.msra.mxu0 0.0
        %3233 = vmatprep.mubr.f32.mxu0 0.0
        %3234 = vmatmul.mubr.f32.gmra.mrb[0].mxu0 %v3164
        %v3235 = vpop.f32.mrb[0].mxu0
        %v3236 = vadd.f32 0.0, %v3235
        %v3237 = vpop.f32.mrb[0].mxu0
        %3238 = vdwg.mxu0
        %3239 = vxpose.xlu0.b32.start [1/16] %v3008, 128
        %3240 = vxpose.xlu0.b32.cont [2/16] 0.0, 128
        %3241 = vxpose.xlu0.b32.cont [3/16] 0.0, 128
        %3242 = vxpose.xlu0.b32.cont [4/16] 0.0, 128
        %3243 = vxpose.xlu0.b32.cont [5/16] 0.0, 128
        %3244 = vxpose.xlu0.b32.cont [6/16] 0.0, 128
        %3245 = vxpose.xlu0.b32.cont [7/16] 0.0, 128
        %3246 = vxpose.xlu0.b32.cont [8/16] 0.0, 128
        %3247 = vxpose.xlu0.b32.cont [9/16] 0.0, 128
        %3248 = vxpose.xlu0.b32.cont [10/16] 0.0, 128
        %3249 = vxpose.xlu0.b32.cont [11/16] 0.0, 128
        %3250 = vxpose.xlu0.b32.cont [12/16] 0.0, 128
        %3251 = vxpose.xlu0.b32.cont [13/16] 0.0, 128
        %3252 = vxpose.xlu0.b32.cont [14/16] 0.0, 128
        %3253 = vxpose.xlu0.b32.cont [15/16] 0.0, 128
        %3254 = vxpose.xlu0.b32.end [16/16] 0.0, 128
        %v3255 = vpop.trf.xlu0
        %v3256 = vpop.trf.xlu0
        %v3257 = vpop.trf.xlu0
        %v3258 = vpop.trf.xlu0
        %v3259 = vpop.trf.xlu0
        %v3260 = vpop.trf.xlu0
        %v3261 = vpop.trf.xlu0
        %v3262 = vpop.trf.xlu0
        %v3263 = vpop.trf.xlu0
        %v3264 = vpop.trf.xlu0
        %v3265 = vpop.trf.xlu0
        %v3266 = vpop.trf.xlu0
        %v3267 = vpop.trf.xlu0
        %v3268 = vpop.trf.xlu0
        %v3269 = vpop.trf.xlu0
        %v3270 = vpop.trf.xlu0
        %3271 = vxpose.xlu0.b32.start [1/16] %v3084, 128
        %3272 = vxpose.xlu0.b32.cont [2/16] 0.0, 128
        %3273 = vxpose.xlu0.b32.cont [3/16] 0.0, 128
        %3274 = vxpose.xlu0.b32.cont [4/16] 0.0, 128
        %3275 = vxpose.xlu0.b32.cont [5/16] 0.0, 128
        %3276 = vxpose.xlu0.b32.cont [6/16] 0.0, 128
        %3277 = vxpose.xlu0.b32.cont [7/16] 0.0, 128
        %3278 = vxpose.xlu0.b32.cont [8/16] 0.0, 128
        %3279 = vxpose.xlu0.b32.cont [9/16] 0.0, 128
        %3280 = vxpose.xlu0.b32.cont [10/16] 0.0, 128
        %3281 = vxpose.xlu0.b32.cont [11/16] 0.0, 128
        %3282 = vxpose.xlu0.b32.cont [12/16] 0.0, 128
        %3283 = vxpose.xlu0.b32.cont [13/16] 0.0, 128
        %3284 = vxpose.xlu0.b32.cont [14/16] 0.0, 128
        %3285 = vxpose.xlu0.b32.cont [15/16] 0.0, 128
        %3286 = vxpose.xlu0.b32.end [16/16] 0.0, 128
        %v3287 = vpop.trf.xlu0
        %v3288 = vpop.trf.xlu0
        %v3289 = vpop.trf.xlu0
        %v3290 = vpop.trf.xlu0
        %v3291 = vpop.trf.xlu0
        %v3292 = vpop.trf.xlu0
        %v3293 = vpop.trf.xlu0
        %v3294 = vpop.trf.xlu0
        %v3295 = vpop.trf.xlu0
        %v3296 = vpop.trf.xlu0
        %v3297 = vpop.trf.xlu0
        %v3298 = vpop.trf.xlu0
        %v3299 = vpop.trf.xlu0
        %v3300 = vpop.trf.xlu0
        %v3301 = vpop.trf.xlu0
        %v3302 = vpop.trf.xlu0
        %3303 = vxpose.xlu0.b32.start [1/16] %v3160, 128
        %3304 = vxpose.xlu0.b32.cont [2/16] 0.0, 128
        %3305 = vxpose.xlu0.b32.cont [3/16] 0.0, 128
        %3306 = vxpose.xlu0.b32.cont [4/16] 0.0, 128
        %3307 = vxpose.xlu0.b32.cont [5/16] 0.0, 128
        %3308 = vxpose.xlu0.b32.cont [6/16] 0.0, 128
        %3309 = vxpose.xlu0.b32.cont [7/16] 0.0, 128
        %3310 = vxpose.xlu0.b32.cont [8/16] 0.0, 128
        %3311 = vxpose.xlu0.b32.cont [9/16] 0.0, 128
        %3312 = vxpose.xlu0.b32.cont [10/16] 0.0, 128
        %3313 = vxpose.xlu0.b32.cont [11/16] 0.0, 128
        %3314 = vxpose.xlu0.b32.cont [12/16] 0.0, 128
        %3315 = vxpose.xlu0.b32.cont [13/16] 0.0, 128
        %3316 = vxpose.xlu0.b32.cont [14/16] 0.0, 128
        %3317 = vxpose.xlu0.b32.cont [15/16] 0.0, 128
        %3318 = vxpose.xlu0.b32.end [16/16] 0.0, 128
        %v3319 = vpop.trf.xlu0
        %v3320 = vpop.trf.xlu0
        %v3321 = vpop.trf.xlu0
        %v3322 = vpop.trf.xlu0
        %v3323 = vpop.trf.xlu0
        %v3324 = vpop.trf.xlu0
        %v3325 = vpop.trf.xlu0
        %v3326 = vpop.trf.xlu0
        %v3327 = vpop.trf.xlu0
        %v3328 = vpop.trf.xlu0
        %v3329 = vpop.trf.xlu0
        %v3330 = vpop.trf.xlu0
        %v3331 = vpop.trf.xlu0
        %v3332 = vpop.trf.xlu0
        %v3333 = vpop.trf.xlu0
        %v3334 = vpop.trf.xlu0
        %3335 = vxpose.xlu0.b32.start [1/16] %v3236, 128
        %3336 = vxpose.xlu0.b32.cont [2/16] 0.0, 128
        %3337 = vxpose.xlu0.b32.cont [3/16] 0.0, 128
        %3338 = vxpose.xlu0.b32.cont [4/16] 0.0, 128
        %3339 = vxpose.xlu0.b32.cont [5/16] 0.0, 128
        %3340 = vxpose.xlu0.b32.cont [6/16] 0.0, 128
        %3341 = vxpose.xlu0.b32.cont [7/16] 0.0, 128
        %3342 = vxpose.xlu0.b32.cont [8/16] 0.0, 128
        %3343 = vxpose.xlu0.b32.cont [9/16] 0.0, 128
        %3344 = vxpose.xlu0.b32.cont [10/16] 0.0, 128
        %3345 = vxpose.xlu0.b32.cont [11/16] 0.0, 128
        %3346 = vxpose.xlu0.b32.cont [12/16] 0.0, 128
        %3347 = vxpose.xlu0.b32.cont [13/16] 0.0, 128
        %3348 = vxpose.xlu0.b32.cont [14/16] 0.0, 128
        %3349 = vxpose.xlu0.b32.cont [15/16] 0.0, 128
        %3350 = vxpose.xlu0.b32.end [16/16] 0.0, 128
        %v3351 = vpop.trf.xlu0
        %v3352 = vpop.trf.xlu0
        %v3353 = vpop.trf.xlu0
        %v3354 = vpop.trf.xlu0
        %v3355 = vpop.trf.xlu0
        %v3356 = vpop.trf.xlu0
        %v3357 = vpop.trf.xlu0
        %v3358 = vpop.trf.xlu0
        %v3359 = vpop.trf.xlu0
        %v3360 = vpop.trf.xlu0
        %v3361 = vpop.trf.xlu0
        %v3362 = vpop.trf.xlu0
        %v3363 = vpop.trf.xlu0
        %v3364 = vpop.trf.xlu0
        %v3365 = vpop.trf.xlu0
        %v3366 = vpop.trf.xlu0
        %v3367 = vcombine.low %v3255, %v3319
        %v3368 = vcombine.high %v3255, %v3319
        %v3370 = vunpack.c.l.s4 1983009808
        %v3371 = vunpack.c.0.s8 %v3370
        %v3372 = vlaneseq
        %v3373 = vshrl.u32 %v3372, 7
        %v3374 = vsub.s32 %v3371, %v3373
        %v3375 = vrot.slane %v3367, %v3374
        %v3377 = vunpack.c.l.s4 1983009808
        %v3378 = vunpack.c.0.s8 %v3377
        %v3379 = vlaneseq
        %v3380 = vshrl.u32 %v3379, 7
        %v3381 = vsub.s32 %v3378, %v3380
        %v3382 = vrot.slane %v3368, %v3381
        %v3383 = vcombine.low %v3287, %v3351
        %v3384 = vcombine.high %v3287, %v3351
        %v3386 = vunpack.c.l.s4 1983009808
        %v3387 = vunpack.c.0.s8 %v3386
        %v3388 = vlaneseq
        %v3389 = vshrl.u32 %v3388, 7
        %v3390 = vsub.s32 %v3387, %v3389
        %v3391 = vrot.slane %v3383, %v3390
        %v3393 = vunpack.c.l.s4 1983009808
        %v3394 = vunpack.c.0.s8 %v3393
        %v3395 = vlaneseq
        %v3396 = vshrl.u32 %v3395, 7
        %v3397 = vsub.s32 %v3394, %v3396
        %v3398 = vrot.slane %v3384, %v3397
        %v3399 = vcombine.low %v3375, %v3391
        %v3400 = vcombine.high %v3375, %v3391
        %v3402 = vunpack.c.l.s4 1934713408
        %v3403 = vunpack.c.0.s8 %v3402
        %v3404 = vlaneseq
        %v3405 = vshrl.u32 %v3404, 7
        %v3406 = vsub.s32 %v3403, %v3405
        %v3407 = vrot.slane %v3399, %v3406
        %v3409 = vunpack.c.l.s4 1934713408
        %v3410 = vunpack.c.0.s8 %v3409
        %v3411 = vlaneseq
        %v3412 = vshrl.u32 %v3411, 7
        %v3413 = vsub.s32 %v3410, %v3412
        %v3414 = vrot.slane %v3400, %v3413
        %v3415 = vcombine.low %v3382, %v3398
        %v3416 = vcombine.high %v3382, %v3398
        %v3418 = vunpack.c.l.s4 1934713408
        %v3419 = vunpack.c.0.s8 %v3418
        %v3420 = vlaneseq
        %v3421 = vshrl.u32 %v3420, 7
        %v3422 = vsub.s32 %v3419, %v3421
        %v3423 = vrot.slane %v3415, %v3422
        %v3425 = vunpack.c.l.s4 1934713408
        %v3426 = vunpack.c.0.s8 %v3425
        %v3427 = vlaneseq
        %v3428 = vshrl.u32 %v3427, 7
        %v3429 = vsub.s32 %v3426, %v3428
        %v3430 = vrot.slane %v3416, %v3429
        %v3431 = vcombine.high %v3407, 0.0
        %v3432 = vcombine.high %v3414, 0.0
        %v3433 = vcombine.high %v3423, 0.0
        %v3434 = vcombine.high %v3430, 0.0
        %v3435 = vcombine.low %v3407, %v3414
        %v3437 = vunpack.c.l.s4 1983009808
        %v3438 = vunpack.c.0.s8 %v3437
        %v3439 = vlaneseq
        %v3440 = vshrl.u32 %v3439, 7
        %v3441 = vsub.s32 %v3438, %v3440
        %v3442 = vrot.slane %v3435, %v3441
        %v3443 = vcombine.low %v3431, %v3432
        %v3445 = vunpack.c.l.s4 1983009808
        %v3446 = vunpack.c.0.s8 %v3445
        %v3447 = vlaneseq
        %v3448 = vshrl.u32 %v3447, 7
        %v3449 = vsub.s32 %v3446, %v3448
        %v3450 = vrot.slane %v3443, %v3449
        %v3451 = vcombine.low %v3423, %v3430
        %v3453 = vunpack.c.l.s4 1983009808
        %v3454 = vunpack.c.0.s8 %v3453
        %v3455 = vlaneseq
        %v3456 = vshrl.u32 %v3455, 7
        %v3457 = vsub.s32 %v3454, %v3456
        %v3458 = vrot.slane %v3451, %v3457
        %v3459 = vcombine.low %v3433, %v3434
        %v3461 = vunpack.c.l.s4 1983009808
        %v3462 = vunpack.c.0.s8 %v3461
        %v3463 = vlaneseq
        %v3464 = vshrl.u32 %v3463, 7
        %v3465 = vsub.s32 %v3462, %v3464
        %v3466 = vrot.slane %v3459, %v3465
        %v3467 = vcombine.low %v3442, %v3450
        %v3468 = vcombine.high %v3442, %v3450
        %v3470 = vunpack.c.l.s4 1934713408
        %v3471 = vunpack.c.0.s8 %v3470
        %v3472 = vlaneseq
        %v3473 = vshrl.u32 %v3472, 7
        %v3474 = vsub.s32 %v3471, %v3473
        %v3475 = vrot.slane %v3467, %v3474
        %v3477 = vunpack.c.l.s4 1934713408
        %v3478 = vunpack.c.0.s8 %v3477
        %v3479 = vlaneseq
        %v3480 = vshrl.u32 %v3479, 7
        %v3481 = vsub.s32 %v3478, %v3480
        %v3482 = vrot.slane %v3468, %v3481
        %v3483 = vcombine.low %v3458, %v3466
        %v3484 = vcombine.high %v3458, %v3466
        %v3486 = vunpack.c.l.s4 1934713408
        %v3487 = vunpack.c.0.s8 %v3486
        %v3488 = vlaneseq
        %v3489 = vshrl.u32 %v3488, 7
        %v3490 = vsub.s32 %v3487, %v3489
        %v3491 = vrot.slane %v3483, %v3490
        %v3493 = vunpack.c.l.s4 1934713408
        %v3494 = vunpack.c.0.s8 %v3493
        %v3495 = vlaneseq
        %v3496 = vshrl.u32 %v3495, 7
        %v3497 = vsub.s32 %v3494, %v3496
        %v3498 = vrot.slane %v3484, %v3497
        %v3499 = vcombine.low %v3475, %v3491
        %v3500 = vcombine.high %v3475, %v3491
        %v3501 = vcombine.low %v3482, %v3498
        %v3502 = vcombine.high %v3482, %v3498
        %3504 = vrot.lane.b32.xlu0 %v3500, 8
        %v3505 = vpop.permute.xlu0 %3504
        %3508 = vrot.lane.b32.xlu0 %v3501, 16
        %v3509 = vpop.permute.xlu0 %3508
        %3512 = vrot.lane.b32.xlu0 %v3502, 24
        %v3513 = vpop.permute.xlu0 %3512
        %v3515 = vsel %vm877, %v3499, %v3505
        %v3516 = vsel %vm1931, %v3515, %v3509
        %v3517 = vsel %vm549, %v3516, %v3513
        %s3518 = scalar_lea.vmem %s3, 32
        %v3519 = vld [vmem:[%s3518] sm:$0xff]
        %v3520 = vld [vmem:[%s3518 + $0x8] sm:$0xff]
        %v3521 = vld [vmem:[%s3518 + $0x10] sm:$0xff]
        %v3522 = vld [vmem:[%s3518 + $0x18] sm:$0xff]
        %v3523 = vlaneseq
        %v3524 = vshrl.u32 %v3523, 7
        %v3525 = vsub.s32 3, %v3524
        %v3526 = vrot.slane %v2210, %v3525
        %v3528 = vsel %vm624, %v3517, 0
        %3530 = vmatprep.subr.mxu0 0.0
        %3531 = vmatpush1.msra.mxu0 %v3519
        %3532 = vmatprep.subr.mxu0 0.0
        %3533 = vmatpush1.msra.mxu0 %v3520
        %3534 = vmatprep.subr.mxu0 0.0
        %3535 = vmatpush1.msra.mxu0 %v3521
        %3536 = vmatprep.subr.mxu0 0.0
        %3537 = vmatpush1.msra.mxu0 %v3522
        %3538 = vmatprep.subr.mxu0 0.0
        %3539 = vmatpush1.msra.mxu0 0.0
        %3540 = vmatprep.subr.mxu0 0.0
        %3541 = vmatpush1.msra.mxu0 0.0
        %3542 = vmatprep.subr.mxu0 0.0
        %3543 = vmatpush1.msra.mxu0 0.0
        %3544 = vmatprep.subr.mxu0 0.0
        %3545 = vmatpush1.msra.mxu0 0.0
        %3546 = vmatprep.subr.mxu0 0.0
        %3547 = vmatpush1.msra.mxu0 0.0
        %3548 = vmatprep.subr.mxu0 0.0
        %3549 = vmatpush1.msra.mxu0 0.0
        %3550 = vmatprep.subr.mxu0 0.0
        %3551 = vmatpush1.msra.mxu0 0.0
        %3552 = vmatprep.subr.mxu0 0.0
        %3553 = vmatpush1.msra.mxu0 0.0
        %3554 = vmatprep.subr.mxu0 0.0
        %3555 = vmatpush1.msra.mxu0 0.0
        %3556 = vmatprep.subr.mxu0 0.0
        %3557 = vmatpush1.msra.mxu0 0.0
        %3558 = vmatprep.subr.mxu0 0.0
        %3559 = vmatpush1.msra.mxu0 0.0
        %3560 = vmatprep.subr.mxu0 0.0
        %3561 = vmatpush1.msra.mxu0 0.0
        %3562 = vmatprep.subr.mxu0 0.0
        %3563 = vmatpush1.msra.mxu0 0.0
        %3564 = vmatprep.subr.mxu0 0.0
        %3565 = vmatpush1.msra.mxu0 0.0
        %3566 = vmatprep.subr.mxu0 0.0
        %3567 = vmatpush1.msra.mxu0 0.0
        %3568 = vmatprep.subr.mxu0 0.0
        %3569 = vmatpush1.msra.mxu0 0.0
        %3570 = vmatprep.subr.mxu0 0.0
        %3571 = vmatpush1.msra.mxu0 0.0
        %3572 = vmatprep.subr.mxu0 0.0
        %3573 = vmatpush1.msra.mxu0 0.0
        %3574 = vmatprep.subr.mxu0 0.0
        %3575 = vmatpush1.msra.mxu0 0.0
        %3576 = vmatprep.subr.mxu0 0.0
        %3577 = vmatpush1.msra.mxu0 0.0
        %3578 = vmatprep.subr.mxu0 0.0
        %3579 = vmatpush1.msra.mxu0 0.0
        %3580 = vmatprep.subr.mxu0 0.0
        %3581 = vmatpush1.msra.mxu0 0.0
        %3582 = vmatprep.subr.mxu0 0.0
        %3583 = vmatpush1.msra.mxu0 0.0
        %3584 = vmatprep.subr.mxu0 0.0
        %3585 = vmatpush1.msra.mxu0 0.0
        %3586 = vmatprep.subr.mxu0 0.0
        %3587 = vmatpush1.msra.mxu0 0.0
        %3588 = vmatprep.subr.mxu0 0.0
        %3589 = vmatpush1.msra.mxu0 0.0
        %3590 = vmatprep.subr.mxu0 0.0
        %3591 = vmatpush1.msra.mxu0 0.0
        %3592 = vmatprep.subr.mxu0 0.0
        %3593 = vmatpush1.msra.mxu0 0.0
        %3594 = vmatprep.mubr.f32.mxu0 0.0
        %3595 = vmatmul.mubr.f32.gmra.mrb[0].mxu0 %v3528
        %v3596 = vpop.f32.mrb[0].mxu0
        %v3597 = vadd.f32 %v3526, %v3596
        %v3598 = vpop.f32.mrb[0].mxu0
        %3599 = vdwg.mxu0
        %v3600 = vadd.f32 %v2233, %v3597
        %v3601 = vsel %vm624, %v3600, 0.0
        %3602 = vadd.xlane.f32.xlu0 %v3601
        %v3603 = vpop.xlane.xlu0 %3602
        %v3604 = vmul.f32 %v3603, %v628
        %v3605 = vsub.f32 %v3600, %v3604
        %v3606 = vmul.f32 %v3605, %v3605
        %v3607 = vsel %vm624, %v3606, 0.0
        %3608 = vadd.xlane.f32.xlu0 %v3607
        %v3609 = vpop.xlane.xlu0 %3608
        %v3610 = vmul.f32 %v3609, %v628
        %v3611 = vadd.f32 %v3610, 1e-05
        %v3612 = vrsqrt.pop %v3611
        %v3613 = vmul.f32 %v3605, %v3612
        %v3614 = vlaneseq
        %v3615 = vshrl.u32 %v3614, 7
        %v3616 = vsub.s32 4, %v3615
        %v3617 = vrot.slane %v2210, %v3616
        %v3618 = vmul.f32 %v3613, %v3617
        %v3619 = vlaneseq
        %v3620 = vshrl.u32 %v3619, 7
        %v3621 = vsub.s32 5, %v3620
        %v3622 = vrot.slane %v2210, %v3621
        %v3623 = vadd.f32 %v3618, %v3622
        %s3624 = scalar_lea.vmem %s4, 32
        %v3625 = vld [vmem:[%s3624] sm:$0xff]
        %v3626 = vld [vmem:[%s3624 + $0x8] sm:$0xff]
        %v3627 = vld [vmem:[%s3624 + $0x10] sm:$0xff]
        %v3628 = vld [vmem:[%s3624 + $0x18] sm:$0xff]
        %v3629 = vlaneseq
        %v3630 = vshrl.u32 %v3629, 7
        %v3631 = vsub.s32 6, %v3630
        %v3632 = vrot.slane %v2210, %v3631
        %v3634 = vsel %vm624, %v3623, 0
        %3636 = vmatprep.subr.mxu0 0.0
        %3637 = vmatpush1.msra.mxu0 %v3625
        %3638 = vmatprep.subr.mxu0 0.0
        %3639 = vmatpush1.msra.mxu0 %v3626
        %3640 = vmatprep.subr.mxu0 0.0
        %3641 = vmatpush1.msra.mxu0 %v3627
        %3642 = vmatprep.subr.mxu0 0.0
        %3643 = vmatpush1.msra.mxu0 %v3628
        %3644 = vmatprep.subr.mxu0 0.0
        %3645 = vmatpush1.msra.mxu0 0.0
        %3646 = vmatprep.subr.mxu0 0.0
        %3647 = vmatpush1.msra.mxu0 0.0
        %3648 = vmatprep.subr.mxu0 0.0
        %3649 = vmatpush1.msra.mxu0 0.0
        %3650 = vmatprep.subr.mxu0 0.0
        %3651 = vmatpush1.msra.mxu0 0.0
        %3652 = vmatprep.subr.mxu0 0.0
        %3653 = vmatpush1.msra.mxu0 0.0
        %3654 = vmatprep.subr.mxu0 0.0
        %3655 = vmatpush1.msra.mxu0 0.0
        %3656 = vmatprep.subr.mxu0 0.0
        %3657 = vmatpush1.msra.mxu0 0.0
        %3658 = vmatprep.subr.mxu0 0.0
        %3659 = vmatpush1.msra.mxu0 0.0
        %3660 = vmatprep.subr.mxu0 0.0
        %3661 = vmatpush1.msra.mxu0 0.0
        %3662 = vmatprep.subr.mxu0 0.0
        %3663 = vmatpush1.msra.mxu0 0.0
        %3664 = vmatprep.subr.mxu0 0.0
        %3665 = vmatpush1.msra.mxu0 0.0
        %3666 = vmatprep.subr.mxu0 0.0
        %3667 = vmatpush1.msra.mxu0 0.0
        %3668 = vmatprep.subr.mxu0 0.0
        %3669 = vmatpush1.msra.mxu0 0.0
        %3670 = vmatprep.subr.mxu0 0.0
        %3671 = vmatpush1.msra.mxu0 0.0
        %3672 = vmatprep.subr.mxu0 0.0
        %3673 = vmatpush1.msra.mxu0 0.0
        %3674 = vmatprep.subr.mxu0 0.0
        %3675 = vmatpush1.msra.mxu0 0.0
        %3676 = vmatprep.subr.mxu0 0.0
        %3677 = vmatpush1.msra.mxu0 0.0
        %3678 = vmatprep.subr.mxu0 0.0
        %3679 = vmatpush1.msra.mxu0 0.0
        %3680 = vmatprep.subr.mxu0 0.0
        %3681 = vmatpush1.msra.mxu0 0.0
        %3682 = vmatprep.subr.mxu0 0.0
        %3683 = vmatpush1.msra.mxu0 0.0
        %3684 = vmatprep.subr.mxu0 0.0
        %3685 = vmatpush1.msra.mxu0 0.0
        %3686 = vmatprep.subr.mxu0 0.0
        %3687 = vmatpush1.msra.mxu0 0.0
        %3688 = vmatprep.subr.mxu0 0.0
        %3689 = vmatpush1.msra.mxu0 0.0
        %3690 = vmatprep.subr.mxu0 0.0
        %3691 = vmatpush1.msra.mxu0 0.0
        %3692 = vmatprep.subr.mxu0 0.0
        %3693 = vmatpush1.msra.mxu0 0.0
        %3694 = vmatprep.subr.mxu0 0.0
        %3695 = vmatpush1.msra.mxu0 0.0
        %3696 = vmatprep.subr.mxu0 0.0
        %3697 = vmatpush1.msra.mxu0 0.0
        %3698 = vmatprep.subr.mxu0 0.0
        %3699 = vmatpush1.msra.mxu0 0.0
        %3700 = vmatprep.mubr.f32.mxu0 0.0
        %3701 = vmatmul.mubr.f32.gmra.mrb[0].mxu0 %v3634
        %v3702 = vpop.f32.mrb[0].mxu0
        %v3703 = vadd.f32 %v3632, %v3702
        %v3704 = vpop.f32.mrb[0].mxu0
        %3705 = vdwg.mxu0
        %v3706 = vmax.f32 %v3703, 0.0
        %s3707 = scalar_lea.vmem %s5, 64
        %v3708 = vld [vmem:[%s3707] sm:$0xff]
        %v3709 = vld [vmem:[%s3707 + $0x8] sm:$0xff]
        %v3710 = vld [vmem:[%s3707 + $0x10] sm:$0xff]
        %v3711 = vld [vmem:[%s3707 + $0x18] sm:$0xff]
        %v3712 = vld [vmem:[%s3707 + $0x20] sm:$0xff]
        %v3713 = vld [vmem:[%s3707 + $0x28] sm:$0xff]
        %v3714 = vld [vmem:[%s3707 + $0x30] sm:$0xff]
        %v3715 = vld [vmem:[%s3707 + $0x38] sm:$0xff]
        %v3717 = vsel %vm2129, %v3706, 0
        %3719 = vmatprep.subr.mxu0 0.0
        %3720 = vmatpush1.msra.mxu0 %v3708
        %3721 = vmatprep.subr.mxu0 0.0
        %3722 = vmatpush1.msra.mxu0 %v3709
        %3723 = vmatprep.subr.mxu0 0.0
        %3724 = vmatpush1.msra.mxu0 %v3710
        %3725 = vmatprep.subr.mxu0 0.0
        %3726 = vmatpush1.msra.mxu0 %v3711
        %3727 = vmatprep.subr.mxu0 0.0
        %3728 = vmatpush1.msra.mxu0 %v3712
        %3729 = vmatprep.subr.mxu0 0.0
        %3730 = vmatpush1.msra.mxu0 %v3713
        %3731 = vmatprep.subr.mxu0 0.0
        %3732 = vmatpush1.msra.mxu0 %v3714
        %3733 = vmatprep.subr.mxu0 0.0
        %3734 = vmatpush1.msra.mxu0 %v3715
        %3735 = vmatprep.subr.mxu0 0.0
        %3736 = vmatpush1.msra.mxu0 0.0
        %3737 = vmatprep.subr.mxu0 0.0
        %3738 = vmatpush1.msra.mxu0 0.0
        %3739 = vmatprep.subr.mxu0 0.0
        %3740 = vmatpush1.msra.mxu0 0.0
        %3741 = vmatprep.subr.mxu0 0.0
        %3742 = vmatpush1.msra.mxu0 0.0
        %3743 = vmatprep.subr.mxu0 0.0
        %3744 = vmatpush1.msra.mxu0 0.0
        %3745 = vmatprep.subr.mxu0 0.0
        %3746 = vmatpush1.msra.mxu0 0.0
        %3747 = vmatprep.subr.mxu0 0.0
        %3748 = vmatpush1.msra.mxu0 0.0
        %3749 = vmatprep.subr.mxu0 0.0
        %3750 = vmatpush1.msra.mxu0 0.0
        %3751 = vmatprep.subr.mxu0 0.0
        %3752 = vmatpush1.msra.mxu0 0.0
        %3753 = vmatprep.subr.mxu0 0.0
        %3754 = vmatpush1.msra.mxu0 0.0
        %3755 = vmatprep.subr.mxu0 0.0
        %3756 = vmatpush1.msra.mxu0 0.0
        %3757 = vmatprep.subr.mxu0 0.0
        %3758 = vmatpush1.msra.mxu0 0.0
        %3759 = vmatprep.subr.mxu0 0.0
        %3760 = vmatpush1.msra.mxu0 0.0
        %3761 = vmatprep.subr.mxu0 0.0
        %3762 = vmatpush1.msra.mxu0 0.0
        %3763 = vmatprep.subr.mxu0 0.0
        %3764 = vmatpush1.msra.mxu0 0.0
        %3765 = vmatprep.subr.mxu0 0.0
        %3766 = vmatpush1.msra.mxu0 0.0
        %3767 = vmatprep.subr.mxu0 0.0
        %3768 = vmatpush1.msra.mxu0 0.0
        %3769 = vmatprep.subr.mxu0 0.0
        %3770 = vmatpush1.msra.mxu0 0.0
        %3771 = vmatprep.subr.mxu0 0.0
        %3772 = vmatpush1.msra.mxu0 0.0
        %3773 = vmatprep.subr.mxu0 0.0
        %3774 = vmatpush1.msra.mxu0 0.0
        %3775 = vmatprep.subr.mxu0 0.0
        %3776 = vmatpush1.msra.mxu0 0.0
        %3777 = vmatprep.subr.mxu0 0.0
        %3778 = vmatpush1.msra.mxu0 0.0
        %3779 = vmatprep.subr.mxu0 0.0
        %3780 = vmatpush1.msra.mxu0 0.0
        %3781 = vmatprep.subr.mxu0 0.0
        %3782 = vmatpush1.msra.mxu0 0.0
        %3783 = vmatprep.mubr.f32.mxu0 0.0
        %3784 = vmatmul.mubr.f32.gmra.mrb[0].mxu0 %v3717
        %v3785 = vpop.f32.mrb[0].mxu0
        %v3786 = vadd.f32 0.0, %v3785
        %v3787 = vpop.f32.mrb[0].mxu0
        %3788 = vdwg.mxu0
        %v3789 = vadd.f32 %v3623, %v3786
        %v3790 = vlaneseq
        %v3791 = vshrl.u32 %v3790, 7
        %v3792 = vsub.s32 7, %v3791
        %v3793 = vrot.slane %v2210, %v3792
        %v3794 = vadd.f32 %v3789, %v3793
        %v3795 = vsel %vm624, %v3794, 0.0
        %3796 = vadd.xlane.f32.xlu0 %v3795
        %v3797 = vpop.xlane.xlu0 %3796
        %v3798 = vmul.f32 %v3797, %v628
        %v3799 = vsub.f32 %v3794, %v3798
        %v3800 = vmul.f32 %v3799, %v3799
        %v3801 = vsel %vm624, %v3800, 0.0
        %3802 = vadd.xlane.f32.xlu0 %v3801
        %v3803 = vpop.xlane.xlu0 %3802
        %v3804 = vmul.f32 %v3803, %v628
        %v3805 = vadd.f32 %v3804, 1e-05
        %v3806 = vrsqrt.pop %v3805
        %v3807 = vmul.f32 %v3799, %v3806
        %v3808 = vlaneseq
        %v3809 = vshrl.u32 %v3808, 7
        %v3810 = vsub.s32 1, %v3809
        %v3811 = vrot.slane %v540, %v3810
        %v3812 = vmul.f32 %v3807, %v3811
        %v3813 = vlaneseq
        %v3814 = vshrl.u32 %v3813, 7
        %v3815 = vsub.s32 2, %v3814
        %v3816 = vrot.slane %v540, %v3815
        %v3817 = vadd.f32 %v3812, %v3816
        %v3818 = vld [vmem:[%s7] sm:$0xff]
        %v3819 = vld [vmem:[%s7 + $0x8] sm:$0xff]
        %v3820 = vld [vmem:[%s7 + $0x10] sm:$0xff]
        %v3821 = vld [vmem:[%s7 + $0x18] sm:$0xff]
        %v3822 = vlaneseq
        %v3823 = vshrl.u32 %v3822, 7
        %v3824 = vsub.s32 3, %v3823
        %v3825 = vrot.slane %v540, %v3824
        %v3827 = vsel %vm624, %v3817, 0
        %3829 = vmatprep.subr.mxu0 0.0
        %3830 = vmatpush1.msra.mxu0 %v3818
        %3831 = vmatprep.subr.mxu0 0.0
        %3832 = vmatpush1.msra.mxu0 %v3819
        %3833 = vmatprep.subr.mxu0 0.0
        %3834 = vmatpush1.msra.mxu0 %v3820
        %3835 = vmatprep.subr.mxu0 0.0
        %3836 = vmatpush1.msra.mxu0 %v3821
        %3837 = vmatprep.subr.mxu0 0.0
        %3838 = vmatpush1.msra.mxu0 0.0
        %3839 = vmatprep.subr.mxu0 0.0
        %3840 = vmatpush1.msra.mxu0 0.0
        %3841 = vmatprep.subr.mxu0 0.0
        %3842 = vmatpush1.msra.mxu0 0.0
        %3843 = vmatprep.subr.mxu0 0.0
        %3844 = vmatpush1.msra.mxu0 0.0
        %3845 = vmatprep.subr.mxu0 0.0
        %3846 = vmatpush1.msra.mxu0 0.0
        %3847 = vmatprep.subr.mxu0 0.0
        %3848 = vmatpush1.msra.mxu0 0.0
        %3849 = vmatprep.subr.mxu0 0.0
        %3850 = vmatpush1.msra.mxu0 0.0
        %3851 = vmatprep.subr.mxu0 0.0
        %3852 = vmatpush1.msra.mxu0 0.0
        %3853 = vmatprep.subr.mxu0 0.0
        %3854 = vmatpush1.msra.mxu0 0.0
        %3855 = vmatprep.subr.mxu0 0.0
        %3856 = vmatpush1.msra.mxu0 0.0
        %3857 = vmatprep.subr.mxu0 0.0
        %3858 = vmatpush1.msra.mxu0 0.0
        %3859 = vmatprep.subr.mxu0 0.0
        %3860 = vmatpush1.msra.mxu0 0.0
        %3861 = vmatprep.subr.mxu0 0.0
        %3862 = vmatpush1.msra.mxu0 0.0
        %3863 = vmatprep.subr.mxu0 0.0
        %3864 = vmatpush1.msra.mxu0 0.0
        %3865 = vmatprep.subr.mxu0 0.0
        %3866 = vmatpush1.msra.mxu0 0.0
        %3867 = vmatprep.subr.mxu0 0.0
        %3868 = vmatpush1.msra.mxu0 0.0
        %3869 = vmatprep.subr.mxu0 0.0
        %3870 = vmatpush1.msra.mxu0 0.0
        %3871 = vmatprep.subr.mxu0 0.0
        %3872 = vmatpush1.msra.mxu0 0.0
        %3873 = vmatprep.subr.mxu0 0.0
        %3874 = vmatpush1.msra.mxu0 0.0
        %3875 = vmatprep.subr.mxu0 0.0
        %3876 = vmatpush1.msra.mxu0 0.0
        %3877 = vmatprep.subr.mxu0 0.0
        %3878 = vmatpush1.msra.mxu0 0.0
        %3879 = vmatprep.subr.mxu0 0.0
        %3880 = vmatpush1.msra.mxu0 0.0
        %3881 = vmatprep.subr.mxu0 0.0
        %3882 = vmatpush1.msra.mxu0 0.0
        %3883 = vmatprep.subr.mxu0 0.0
        %3884 = vmatpush1.msra.mxu0 0.0
        %3885 = vmatprep.subr.mxu0 0.0
        %3886 = vmatpush1.msra.mxu0 0.0
        %3887 = vmatprep.subr.mxu0 0.0
        %3888 = vmatpush1.msra.mxu0 0.0
        %3889 = vmatprep.subr.mxu0 0.0
        %3890 = vmatpush1.msra.mxu0 0.0
        %3891 = vmatprep.subr.mxu0 0.0
        %3892 = vmatpush1.msra.mxu0 0.0
        %3893 = vmatprep.mubr.f32.mxu0 0.0
        %3894 = vmatmul.mubr.f32.gmra.mrb[0].mxu0 %v3827
        %v3895 = vpop.f32.mrb[0].mxu0
        %v3896 = vadd.f32 %v3825, %v3895
        %v3897 = vpop.f32.mrb[0].mxu0
        %3898 = vdwg.mxu0
        %v3899 = vld [vmem:[#allocation8] sm:$0xff]
        %v3900 = vld [vmem:[#allocation8 + $0x8] sm:$0xff]
        %v3901 = vld [vmem:[#allocation8 + $0x10] sm:$0xff]
        %v3902 = vld [vmem:[#allocation8 + $0x18] sm:$0xff]
        %v3904 = vsel %vm624, 0.0, 0
        %3906 = vmatprep.subr.mxu0 0.0
        %3907 = vmatpush1.msra.mxu0 %v3899
        %3908 = vmatprep.subr.mxu0 0.0
        %3909 = vmatpush1.msra.mxu0 %v3900
        %3910 = vmatprep.subr.mxu0 0.0
        %3911 = vmatpush1.msra.mxu0 %v3901
        %3912 = vmatprep.subr.mxu0 0.0
        %3913 = vmatpush1.msra.mxu0 %v3902
        %3914 = vmatprep.subr.mxu0 0.0
        %3915 = vmatpush1.msra.mxu0 0.0
        %3916 = vmatprep.subr.mxu0 0.0
        %3917 = vmatpush1.msra.mxu0 0.0
        %3918 = vmatprep.subr.mxu0 0.0
        %3919 = vmatpush1.msra.mxu0 0.0
        %3920 = vmatprep.subr.mxu0 0.0
        %3921 = vmatpush1.msra.mxu0 0.0
        %3922 = vmatprep.subr.mxu0 0.0
        %3923 = vmatpush1.msra.mxu0 0.0
        %3924 = vmatprep.subr.mxu0 0.0
        %3925 = vmatpush1.msra.mxu0 0.0
        %3926 = vmatprep.subr.mxu0 0.0
        %3927 = vmatpush1.msra.mxu0 0.0
        %3928 = vmatprep.subr.mxu0 0.0
        %3929 = vmatpush1.msra.mxu0 0.0
        %3930 = vmatprep.subr.mxu0 0.0
        %3931 = vmatpush1.msra.mxu0 0.0
        %3932 = vmatprep.subr.mxu0 0.0
        %3933 = vmatpush1.msra.mxu0 0.0
        %3934 = vmatprep.subr.mxu0 0.0
        %3935 = vmatpush1.msra.mxu0 0.0
        %3936 = vmatprep.subr.mxu0 0.0
        %3937 = vmatpush1.msra.mxu0 0.0
        %3938 = vmatprep.subr.mxu0 0.0
        %3939 = vmatpush1.msra.mxu0 0.0
        %3940 = vmatprep.subr.mxu0 0.0
        %3941 = vmatpush1.msra.mxu0 0.0
        %3942 = vmatprep.subr.mxu0 0.0
        %3943 = vmatpush1.msra.mxu0 0.0
        %3944 = vmatprep.subr.mxu0 0.0
        %3945 = vmatpush1.msra.mxu0 0.0
        %3946 = vmatprep.subr.mxu0 0.0
        %3947 = vmatpush1.msra.mxu0 0.0
        %3948 = vmatprep.subr.mxu0 0.0
        %3949 = vmatpush1.msra.mxu0 0.0
        %3950 = vmatprep.subr.mxu0 0.0
        %3951 = vmatpush1.msra.mxu0 0.0
        %3952 = vmatprep.subr.mxu0 0.0
        %3953 = vmatpush1.msra.mxu0 0.0
        %3954 = vmatprep.subr.mxu0 0.0
        %3955 = vmatpush1.msra.mxu0 0.0
        %3956 = vmatprep.subr.mxu0 0.0
        %3957 = vmatpush1.msra.mxu0 0.0
        %3958 = vmatprep.subr.mxu0 0.0
        %3959 = vmatpush1.msra.mxu0 0.0
        %3960 = vmatprep.subr.mxu0 0.0
        %3961 = vmatpush1.msra.mxu0 0.0
        %3962 = vmatprep.subr.mxu0 0.0
        %3963 = vmatpush1.msra.mxu0 0.0
        %3964 = vmatprep.subr.mxu0 0.0
        %3965 = vmatpush1.msra.mxu0 0.0
        %3966 = vmatprep.subr.mxu0 0.0
        %3967 = vmatpush1.msra.mxu0 0.0
        %3968 = vmatprep.subr.mxu0 0.0
        %3969 = vmatpush1.msra.mxu0 0.0
        %3970 = vmatprep.mubr.f32.mxu0 0.0
        %3971 = vmatmul.mubr.f32.gmra.mrb[0].mxu0 %v3904
        %v3972 = vpop.f32.mrb[0].mxu0
        %v3973 = vadd.f32 0.0, %v3972
        %v3974 = vpop.f32.mrb[0].mxu0
        %3975 = vdwg.mxu0
        %v3976 = vadd.f32 %v3896, %v3973
        %v3977 = vxor.u32 %v3976, 2147483648
        %v3978 = vmul.f32 %v3977, 1.442695
        %v3979 = vpow.pop %v3978
        %v3980 = vadd.f32 %v3979, 1.0
        %v3981 = vrcp.pop %v3980
        %v3982 = vmul.f32 1.0, %v3981
        %v3983 = vtanh.pop %v3976
        %v3984 = vmul.f32 %v3982, 0.0
        %3986 = vrot.lane.b32.xlu0 %v3983, 64
        %v3987 = vpop.permute.xlu0 %3986
        %v3989 = vmul.f32 %v3982, %v3987
        %3991 = vrot.lane.b32.xlu0 %v3989, 32
        %v3992 = vpop.permute.xlu0 %3991
        %v3994 = vadd.f32 %v3984, %v3992
        %v3995 = vtanh.pop %v3994
        %3997 = vrot.lane.b32.xlu0 %v3995, 64
        %v3998 = vpop.permute.xlu0 %3997
        %v4000 = vmul.f32 %v3982, %v3998
        %4002 = vrot.lane.b32.xlu0 %v4000, 32
        %v4003 = vpop.permute.xlu0 %4002
        %v4004 = vsel %vm624, %v4003, 0
        %4006 = vmatprep.subr.mxu0 0.0
        %4007 = vmatpush1.msra.mxu0 %v3899
        %4008 = vmatprep.subr.mxu0 0.0
        %4009 = vmatpush1.msra.mxu0 %v3900
        %4010 = vmatprep.subr.mxu0 0.0
        %4011 = vmatpush1.msra.mxu0 %v3901
        %4012 = vmatprep.subr.mxu0 0.0
        %4013 = vmatpush1.msra.mxu0 %v3902
        %4014 = vmatprep.subr.mxu0 0.0
        %4015 = vmatpush1.msra.mxu0 0.0
        %4016 = vmatprep.subr.mxu0 0.0
        %4017 = vmatpush1.msra.mxu0 0.0
        %4018 = vmatprep.subr.mxu0 0.0
        %4019 = vmatpush1.msra.mxu0 0.0
        %4020 = vmatprep.subr.mxu0 0.0
        %4021 = vmatpush1.msra.mxu0 0.0
        %4022 = vmatprep.subr.mxu0 0.0
        %4023 = vmatpush1.msra.mxu0 0.0
        %4024 = vmatprep.subr.mxu0 0.0
        %4025 = vmatpush1.msra.mxu0 0.0
        %4026 = vmatprep.subr.mxu0 0.0
        %4027 = vmatpush1.msra.mxu0 0.0
        %4028 = vmatprep.subr.mxu0 0.0
        %4029 = vmatpush1.msra.mxu0 0.0
        %4030 = vmatprep.subr.mxu0 0.0
        %4031 = vmatpush1.msra.mxu0 0.0
        %4032 = vmatprep.subr.mxu0 0.0
        %4033 = vmatpush1.msra.mxu0 0.0
        %4034 = vmatprep.subr.mxu0 0.0
        %4035 = vmatpush1.msra.mxu0 0.0
        %4036 = vmatprep.subr.mxu0 0.0
        %4037 = vmatpush1.msra.mxu0 0.0
        %4038 = vmatprep.subr.mxu0 0.0
        %4039 = vmatpush1.msra.mxu0 0.0
        %4040 = vmatprep.subr.mxu0 0.0
        %4041 = vmatpush1.msra.mxu0 0.0
        %4042 = vmatprep.subr.mxu0 0.0
        %4043 = vmatpush1.msra.mxu0 0.0
        %4044 = vmatprep.subr.mxu0 0.0
        %4045 = vmatpush1.msra.mxu0 0.0
        %4046 = vmatprep.subr.mxu0 0.0
        %4047 = vmatpush1.msra.mxu0 0.0
        %4048 = vmatprep.subr.mxu0 0.0
        %4049 = vmatpush1.msra.mxu0 0.0
        %4050 = vmatprep.subr.mxu0 0.0
        %4051 = vmatpush1.msra.mxu0 0.0
        %4052 = vmatprep.subr.mxu0 0.0
        %4053 = vmatpush1.msra.mxu0 0.0
        %4054 = vmatprep.subr.mxu0 0.0
        %4055 = vmatpush1.msra.mxu0 0.0
        %4056 = vmatprep.subr.mxu0 0.0
        %4057 = vmatpush1.msra.mxu0 0.0
        %4058 = vmatprep.subr.mxu0 0.0
        %4059 = vmatpush1.msra.mxu0 0.0
        %4060 = vmatprep.subr.mxu0 0.0
        %4061 = vmatpush1.msra.mxu0 0.0
        %4062 = vmatprep.subr.mxu0 0.0
        %4063 = vmatpush1.msra.mxu0 0.0
        %4064 = vmatprep.subr.mxu0 0.0
        %4065 = vmatpush1.msra.mxu0 0.0
        %4066 = vmatprep.subr.mxu0 0.0
        %4067 = vmatpush1.msra.mxu0 0.0
        %4068 = vmatprep.subr.mxu0 0.0
        %4069 = vmatpush1.msra.mxu0 0.0
        %4070 = vmatprep.mubr.f32.mxu0 0.0
        %4071 = vmatmul.mubr.f32.gmra.mrb[0].mxu0 %v4004
        %v4072 = vpop.f32.mrb[0].mxu0
        %v4073 = vadd.f32 0.0, %v4072
        %v4074 = vpop.f32.mrb[0].mxu0
        %4075 = vdwg.mxu0
        %v4077 = vrot.slane %v4073, 7
        %v4079 = vadd.f32 %v3896, %v4077
        %v4080 = vxor.u32 %v4079, 2147483648
        %v4081 = vmul.f32 %v4080, 1.442695
        %v4082 = vpow.pop %v4081
        %v4083 = vadd.f32 %v4082, 1.0
        %v4084 = vrcp.pop %v4083
        %v4085 = vmul.f32 1.0, %v4084
        %v4086 = vtanh.pop %v4079
        %v4088 = vrot.slane %v3994, 7
        %v4090 = vmul.f32 %v4085, %v4088
        %4092 = vrot.lane.b32.xlu0 %v4086, 64
        %v4093 = vpop.permute.xlu0 %4092
        %v4095 = vmul.f32 %v4085, %v4093
        %4097 = vrot.lane.b32.xlu0 %v4095, 32
        %v4098 = vpop.permute.xlu0 %4097
        %v4100 = vadd.f32 %v4090, %v4098
        %v4101 = vtanh.pop %v4100
        %4103 = vrot.lane.b32.xlu0 %v4101, 64
        %v4104 = vpop.permute.xlu0 %4103
        %v4106 = vmul.f32 %v4085, %v4104
        %v4108 = vrot.slane %v4106, 1
        %4109 = vrot.lane.b32.xlu0 %v4108, 32
        %v4110 = vpop.permute.xlu0 %4109
        %v4111 = vsel %vm624, %v4110, 0
        %4113 = vmatprep.subr.mxu0 0.0
        %4114 = vmatpush1.msra.mxu0 %v3899
        %4115 = vmatprep.subr.mxu0 0.0
        %4116 = vmatpush1.msra.mxu0 %v3900
        %4117 = vmatprep.subr.mxu0 0.0
        %4118 = vmatpush1.msra.mxu0 %v3901
        %4119 = vmatprep.subr.mxu0 0.0
        %4120 = vmatpush1.msra.mxu0 %v3902
        %4121 = vmatprep.subr.mxu0 0.0
        %4122 = vmatpush1.msra.mxu0 0.0
        %4123 = vmatprep.subr.mxu0 0.0
        %4124 = vmatpush1.msra.mxu0 0.0
        %4125 = vmatprep.subr.mxu0 0.0
        %4126 = vmatpush1.msra.mxu0 0.0
        %4127 = vmatprep.subr.mxu0 0.0
        %4128 = vmatpush1.msra.mxu0 0.0
        %4129 = vmatprep.subr.mxu0 0.0
        %4130 = vmatpush1.msra.mxu0 0.0
        %4131 = vmatprep.subr.mxu0 0.0
        %4132 = vmatpush1.msra.mxu0 0.0
        %4133 = vmatprep.subr.mxu0 0.0
        %4134 = vmatpush1.msra.mxu0 0.0
        %4135 = vmatprep.subr.mxu0 0.0
        %4136 = vmatpush1.msra.mxu0 0.0
        %4137 = vmatprep.subr.mxu0 0.0
        %4138 = vmatpush1.msra.mxu0 0.0
        %4139 = vmatprep.subr.mxu0 0.0
        %4140 = vmatpush1.msra.mxu0 0.0
        %4141 = vmatprep.subr.mxu0 0.0
        %4142 = vmatpush1.msra.mxu0 0.0
        %4143 = vmatprep.subr.mxu0 0.0
        %4144 = vmatpush1.msra.mxu0 0.0
        %4145 = vmatprep.subr.mxu0 0.0
        %4146 = vmatpush1.msra.mxu0 0.0
        %4147 = vmatprep.subr.mxu0 0.0
        %4148 = vmatpush1.msra.mxu0 0.0
        %4149 = vmatprep.subr.mxu0 0.0
        %4150 = vmatpush1.msra.mxu0 0.0
        %4151 = vmatprep.subr.mxu0 0.0
        %4152 = vmatpush1.msra.mxu0 0.0
        %4153 = vmatprep.subr.mxu0 0.0
        %4154 = vmatpush1.msra.mxu0 0.0
        %4155 = vmatprep.subr.mxu0 0.0
        %4156 = vmatpush1.msra.mxu0 0.0
        %4157 = vmatprep.subr.mxu0 0.0
        %4158 = vmatpush1.msra.mxu0 0.0
        %4159 = vmatprep.subr.mxu0 0.0
        %4160 = vmatpush1.msra.mxu0 0.0
        %4161 = vmatprep.subr.mxu0 0.0
        %4162 = vmatpush1.msra.mxu0 0.0
        %4163 = vmatprep.subr.mxu0 0.0
        %4164 = vmatpush1.msra.mxu0 0.0
        %4165 = vmatprep.subr.mxu0 0.0
        %4166 = vmatpush1.msra.mxu0 0.0
        %4167 = vmatprep.subr.mxu0 0.0
        %4168 = vmatpush1.msra.mxu0 0.0
        %4169 = vmatprep.subr.mxu0 0.0
        %4170 = vmatpush1.msra.mxu0 0.0
        %4171 = vmatprep.subr.mxu0 0.0
        %4172 = vmatpush1.msra.mxu0 0.0
        %4173 = vmatprep.subr.mxu0 0.0
        %4174 = vmatpush1.msra.mxu0 0.0
        %4175 = vmatprep.subr.mxu0 0.0
        %4176 = vmatpush1.msra.mxu0 0.0
        %4177 = vmatprep.mubr.f32.mxu0 0.0
        %4178 = vmatmul.mubr.f32.gmra.mrb[0].mxu0 %v4111
        %v4179 = vpop.f32.mrb[0].mxu0
        %v4180 = vadd.f32 0.0, %v4179
        %v4181 = vpop.f32.mrb[0].mxu0
        %4182 = vdwg.mxu0
        %v4184 = vrot.slane %v4180, 6
        %v4186 = vadd.f32 %v3896, %v4184
        %v4187 = vxor.u32 %v4186, 2147483648
        %v4188 = vmul.f32 %v4187, 1.442695
        %v4189 = vpow.pop %v4188
        %v4190 = vadd.f32 %v4189, 1.0
        %v4191 = vrcp.pop %v4190
        %v4192 = vmul.f32 1.0, %v4191
        %v4193 = vtanh.pop %v4186
        %v4195 = vrot.slane %v4100, 7
        %v4197 = vmul.f32 %v4192, %v4195
        %4199 = vrot.lane.b32.xlu0 %v4193, 64
        %v4200 = vpop.permute.xlu0 %4199
        %v4202 = vmul.f32 %v4192, %v4200
        %4204 = vrot.lane.b32.xlu0 %v4202, 32
        %v4205 = vpop.permute.xlu0 %4204
        %v4207 = vadd.f32 %v4197, %v4205
        %v4208 = vtanh.pop %v4207
        %4210 = vrot.lane.b32.xlu0 %v4208, 64
        %v4211 = vpop.permute.xlu0 %4210
        %v4213 = vmul.f32 %v4192, %v4211
        %v4215 = vrot.slane %v4213, 2
        %4216 = vrot.lane.b32.xlu0 %v4215, 32
        %v4217 = vpop.permute.xlu0 %4216
        %v4218 = vsel %vm624, %v4217, 0
        %4220 = vmatprep.subr.mxu0 0.0
        %4221 = vmatpush1.msra.mxu0 %v3899
        %4222 = vmatprep.subr.mxu0 0.0
        %4223 = vmatpush1.msra.mxu0 %v3900
        %4224 = vmatprep.subr.mxu0 0.0
        %4225 = vmatpush1.msra.mxu0 %v3901
        %4226 = vmatprep.subr.mxu0 0.0
        %4227 = vmatpush1.msra.mxu0 %v3902
        %4228 = vmatprep.subr.mxu0 0.0
        %4229 = vmatpush1.msra.mxu0 0.0
        %4230 = vmatprep.subr.mxu0 0.0
        %4231 = vmatpush1.msra.mxu0 0.0
        %4232 = vmatprep.subr.mxu0 0.0
        %4233 = vmatpush1.msra.mxu0 0.0
        %4234 = vmatprep.subr.mxu0 0.0
        %4235 = vmatpush1.msra.mxu0 0.0
        %4236 = vmatprep.subr.mxu0 0.0
        %4237 = vmatpush1.msra.mxu0 0.0
        %4238 = vmatprep.subr.mxu0 0.0
        %4239 = vmatpush1.msra.mxu0 0.0
        %4240 = vmatprep.subr.mxu0 0.0
        %4241 = vmatpush1.msra.mxu0 0.0
        %4242 = vmatprep.subr.mxu0 0.0
        %4243 = vmatpush1.msra.mxu0 0.0
        %4244 = vmatprep.subr.mxu0 0.0
        %4245 = vmatpush1.msra.mxu0 0.0
        %4246 = vmatprep.subr.mxu0 0.0
        %4247 = vmatpush1.msra.mxu0 0.0
        %4248 = vmatprep.subr.mxu0 0.0
        %4249 = vmatpush1.msra.mxu0 0.0
        %4250 = vmatprep.subr.mxu0 0.0
        %4251 = vmatpush1.msra.mxu0 0.0
        %4252 = vmatprep.subr.mxu0 0.0
        %4253 = vmatpush1.msra.mxu0 0.0
        %4254 = vmatprep.subr.mxu0 0.0
        %4255 = vmatpush1.msra.mxu0 0.0
        %4256 = vmatprep.subr.mxu0 0.0
        %4257 = vmatpush1.msra.mxu0 0.0
        %4258 = vmatprep.subr.mxu0 0.0
        %4259 = vmatpush1.msra.mxu0 0.0
        %4260 = vmatprep.subr.mxu0 0.0
        %4261 = vmatpush1.msra.mxu0 0.0
        %4262 = vmatprep.subr.mxu0 0.0
        %4263 = vmatpush1.msra.mxu0 0.0
        %4264 = vmatprep.subr.mxu0 0.0
        %4265 = vmatpush1.msra.mxu0 0.0
        %4266 = vmatprep.subr.mxu0 0.0
        %4267 = vmatpush1.msra.mxu0 0.0
        %4268 = vmatprep.subr.mxu0 0.0
        %4269 = vmatpush1.msra.mxu0 0.0
        %4270 = vmatprep.subr.mxu0 0.0
        %4271 = vmatpush1.msra.mxu0 0.0
        %4272 = vmatprep.subr.mxu0 0.0
        %4273 = vmatpush1.msra.mxu0 0.0
        %4274 = vmatprep.subr.mxu0 0.0
        %4275 = vmatpush1.msra.mxu0 0.0
        %4276 = vmatprep.subr.mxu0 0.0
        %4277 = vmatpush1.msra.mxu0 0.0
        %4278 = vmatprep.subr.mxu0 0.0
        %4279 = vmatpush1.msra.mxu0 0.0
        %4280 = vmatprep.subr.mxu0 0.0
        %4281 = vmatpush1.msra.mxu0 0.0
        %4282 = vmatprep.subr.mxu0 0.0
        %4283 = vmatpush1.msra.mxu0 0.0
        %4284 = vmatprep.mubr.f32.mxu0 0.0
        %4285 = vmatmul.mubr.f32.gmra.mrb[0].mxu0 %v4218
        %v4286 = vpop.f32.mrb[0].mxu0
        %v4287 = vadd.f32 0.0, %v4286
        %v4288 = vpop.f32.mrb[0].mxu0
        %4289 = vdwg.mxu0
        %v4291 = vrot.slane %v4287, 5
        %v4293 = vadd.f32 %v3896, %v4291
        %v4294 = vxor.u32 %v4293, 2147483648
        %v4295 = vmul.f32 %v4294, 1.442695
        %v4296 = vpow.pop %v4295
        %v4297 = vadd.f32 %v4296, 1.0
        %v4298 = vrcp.pop %v4297
        %v4299 = vmul.f32 1.0, %v4298
        %v4300 = vtanh.pop %v4293
        %v4302 = vrot.slane %v4207, 7
        %v4304 = vmul.f32 %v4299, %v4302
        %4306 = vrot.lane.b32.xlu0 %v4300, 64
        %v4307 = vpop.permute.xlu0 %4306
        %v4309 = vmul.f32 %v4299, %v4307
        %4311 = vrot.lane.b32.xlu0 %v4309, 32
        %v4312 = vpop.permute.xlu0 %4311
        %v4314 = vadd.f32 %v4304, %v4312
        %v4315 = vtanh.pop %v4314
        %4317 = vrot.lane.b32.xlu0 %v4315, 64
        %v4318 = vpop.permute.xlu0 %4317
        %v4320 = vmul.f32 %v4299, %v4318
        %v4322 = vrot.slane %v4320, 3
        %4323 = vrot.lane.b32.xlu0 %v4322, 32
        %v4324 = vpop.permute.xlu0 %4323
        %v4325 = vsel %vm624, %v4324, 0
        %4327 = vmatprep.subr.mxu0 0.0
        %4328 = vmatpush1.msra.mxu0 %v3899
        %4329 = vmatprep.subr.mxu0 0.0
        %4330 = vmatpush1.msra.mxu0 %v3900
        %4331 = vmatprep.subr.mxu0 0.0
        %4332 = vmatpush1.msra.mxu0 %v3901
        %4333 = vmatprep.subr.mxu0 0.0
        %4334 = vmatpush1.msra.mxu0 %v3902
        %4335 = vmatprep.subr.mxu0 0.0
        %4336 = vmatpush1.msra.mxu0 0.0
        %4337 = vmatprep.subr.mxu0 0.0
        %4338 = vmatpush1.msra.mxu0 0.0
        %4339 = vmatprep.subr.mxu0 0.0
        %4340 = vmatpush1.msra.mxu0 0.0
        %4341 = vmatprep.subr.mxu0 0.0
        %4342 = vmatpush1.msra.mxu0 0.0
        %4343 = vmatprep.subr.mxu0 0.0
        %4344 = vmatpush1.msra.mxu0 0.0
        %4345 = vmatprep.subr.mxu0 0.0
        %4346 = vmatpush1.msra.mxu0 0.0
        %4347 = vmatprep.subr.mxu0 0.0
        %4348 = vmatpush1.msra.mxu0 0.0
        %4349 = vmatprep.subr.mxu0 0.0
        %4350 = vmatpush1.msra.mxu0 0.0
        %4351 = vmatprep.subr.mxu0 0.0
        %4352 = vmatpush1.msra.mxu0 0.0
        %4353 = vmatprep.subr.mxu0 0.0
        %4354 = vmatpush1.msra.mxu0 0.0
        %4355 = vmatprep.subr.mxu0 0.0
        %4356 = vmatpush1.msra.mxu0 0.0
        %4357 = vmatprep.subr.mxu0 0.0
        %4358 = vmatpush1.msra.mxu0 0.0
        %4359 = vmatprep.subr.mxu0 0.0
        %4360 = vmatpush1.msra.mxu0 0.0
        %4361 = vmatprep.subr.mxu0 0.0
        %4362 = vmatpush1.msra.mxu0 0.0
        %4363 = vmatprep.subr.mxu0 0.0
        %4364 = vmatpush1.msra.mxu0 0.0
        %4365 = vmatprep.subr.mxu0 0.0
        %4366 = vmatpush1.msra.mxu0 0.0
        %4367 = vmatprep.subr.mxu0 0.0
        %4368 = vmatpush1.msra.mxu0 0.0
        %4369 = vmatprep.subr.mxu0 0.0
        %4370 = vmatpush1.msra.mxu0 0.0
        %4371 = vmatprep.subr.mxu0 0.0
        %4372 = vmatpush1.msra.mxu0 0.0
        %4373 = vmatprep.subr.mxu0 0.0
        %4374 = vmatpush1.msra.mxu0 0.0
        %4375 = vmatprep.subr.mxu0 0.0
        %4376 = vmatpush1.msra.mxu0 0.0
        %4377 = vmatprep.subr.mxu0 0.0
        %4378 = vmatpush1.msra.mxu0 0.0
        %4379 = vmatprep.subr.mxu0 0.0
        %4380 = vmatpush1.msra.mxu0 0.0
        %4381 = vmatprep.subr.mxu0 0.0
        %4382 = vmatpush1.msra.mxu0 0.0
        %4383 = vmatprep.subr.mxu0 0.0
        %4384 = vmatpush1.msra.mxu0 0.0
        %4385 = vmatprep.subr.mxu0 0.0
        %4386 = vmatpush1.msra.mxu0 0.0
        %4387 = vmatprep.subr.mxu0 0.0
        %4388 = vmatpush1.msra.mxu0 0.0
        %4389 = vmatprep.subr.mxu0 0.0
        %4390 = vmatpush1.msra.mxu0 0.0
        %4391 = vmatprep.mubr.f32.mxu0 0.0
        %4392 = vmatmul.mubr.f32.gmra.mrb[0].mxu0 %v4325
        %v4393 = vpop.f32.mrb[0].mxu0
        %v4394 = vadd.f32 0.0, %v4393
        %v4395 = vpop.f32.mrb[0].mxu0
        %4396 = vdwg.mxu0
        %v4398 = vrot.slane %v4394, 4
        %v4400 = vadd.f32 %v3896, %v4398
        %v4401 = vxor.u32 %v4400, 2147483648
        %v4402 = vmul.f32 %v4401, 1.442695
        %v4403 = vpow.pop %v4402
        %v4404 = vadd.f32 %v4403, 1.0
        %v4405 = vrcp.pop %v4404
        %v4406 = vmul.f32 1.0, %v4405
        %v4407 = vtanh.pop %v4400
        %v4409 = vrot.slane %v4314, 7
        %v4411 = vmul.f32 %v4406, %v4409
        %4413 = vrot.lane.b32.xlu0 %v4407, 64
        %v4414 = vpop.permute.xlu0 %4413
        %v4416 = vmul.f32 %v4406, %v4414
        %4418 = vrot.lane.b32.xlu0 %v4416, 32
        %v4419 = vpop.permute.xlu0 %4418
        %v4421 = vadd.f32 %v4411, %v4419
        %v4422 = vtanh.pop %v4421
        %4424 = vrot.lane.b32.xlu0 %v4422, 64
        %v4425 = vpop.permute.xlu0 %4424
        %v4427 = vmul.f32 %v4406, %v4425
        %v4429 = vrot.slane %v4427, 4
        %4430 = vrot.lane.b32.xlu0 %v4429, 32
        %v4431 = vpop.permute.xlu0 %4430
        %v4432 = vsel %vm624, %v4431, 0
        %4434 = vmatprep.subr.mxu0 0.0
        %4435 = vmatpush1.msra.mxu0 %v3899
        %4436 = vmatprep.subr.mxu0 0.0
        %4437 = vmatpush1.msra.mxu0 %v3900
        %4438 = vmatprep.subr.mxu0 0.0
        %4439 = vmatpush1.msra.mxu0 %v3901
        %4440 = vmatprep.subr.mxu0 0.0
        %4441 = vmatpush1.msra.mxu0 %v3902
        %4442 = vmatprep.subr.mxu0 0.0
        %4443 = vmatpush1.msra.mxu0 0.0
        %4444 = vmatprep.subr.mxu0 0.0
        %4445 = vmatpush1.msra.mxu0 0.0
        %4446 = vmatprep.subr.mxu0 0.0
        %4447 = vmatpush1.msra.mxu0 0.0
        %4448 = vmatprep.subr.mxu0 0.0
        %4449 = vmatpush1.msra.mxu0 0.0
        %4450 = vmatprep.subr.mxu0 0.0
        %4451 = vmatpush1.msra.mxu0 0.0
        %4452 = vmatprep.subr.mxu0 0.0
        %4453 = vmatpush1.msra.mxu0 0.0
        %4454 = vmatprep.subr.mxu0 0.0
        %4455 = vmatpush1.msra.mxu0 0.0
        %4456 = vmatprep.subr.mxu0 0.0
        %4457 = vmatpush1.msra.mxu0 0.0
        %4458 = vmatprep.subr.mxu0 0.0
        %4459 = vmatpush1.msra.mxu0 0.0
        %4460 = vmatprep.subr.mxu0 0.0
        %4461 = vmatpush1.msra.mxu0 0.0
        %4462 = vmatprep.subr.mxu0 0.0
        %4463 = vmatpush1.msra.mxu0 0.0
        %4464 = vmatprep.subr.mxu0 0.0
        %4465 = vmatpush1.msra.mxu0 0.0
        %4466 = vmatprep.subr.mxu0 0.0
        %4467 = vmatpush1.msra.mxu0 0.0
        %4468 = vmatprep.subr.mxu0 0.0
        %4469 = vmatpush1.msra.mxu0 0.0
        %4470 = vmatprep.subr.mxu0 0.0
        %4471 = vmatpush1.msra.mxu0 0.0
        %4472 = vmatprep.subr.mxu0 0.0
        %4473 = vmatpush1.msra.mxu0 0.0
        %4474 = vmatprep.subr.mxu0 0.0
        %4475 = vmatpush1.msra.mxu0 0.0
        %4476 = vmatprep.subr.mxu0 0.0
        %4477 = vmatpush1.msra.mxu0 0.0
        %4478 = vmatprep.subr.mxu0 0.0
        %4479 = vmatpush1.msra.mxu0 0.0
        %4480 = vmatprep.subr.mxu0 0.0
        %4481 = vmatpush1.msra.mxu0 0.0
        %4482 = vmatprep.subr.mxu0 0.0
        %4483 = vmatpush1.msra.mxu0 0.0
        %4484 = vmatprep.subr.mxu0 0.0
        %4485 = vmatpush1.msra.mxu0 0.0
        %4486 = vmatprep.subr.mxu0 0.0
        %4487 = vmatpush1.msra.mxu0 0.0
        %4488 = vmatprep.subr.mxu0 0.0
        %4489 = vmatpush1.msra.mxu0 0.0
        %4490 = vmatprep.subr.mxu0 0.0
        %4491 = vmatpush1.msra.mxu0 0.0
        %4492 = vmatprep.subr.mxu0 0.0
        %4493 = vmatpush1.msra.mxu0 0.0
        %4494 = vmatprep.subr.mxu0 0.0
        %4495 = vmatpush1.msra.mxu0 0.0
        %4496 = vmatprep.subr.mxu0 0.0
        %4497 = vmatpush1.msra.mxu0 0.0
        %4498 = vmatprep.mubr.f32.mxu0 0.0
        %4499 = vmatmul.mubr.f32.gmra.mrb[0].mxu0 %v4432
        %v4500 = vpop.f32.mrb[0].mxu0
        %v4501 = vadd.f32 0.0, %v4500
        %v4502 = vpop.f32.mrb[0].mxu0
        %4503 = vdwg.mxu0
        %v4505 = vrot.slane %v4501, 3
        %v4507 = vadd.f32 %v3896, %v4505
        %v4508 = vxor.u32 %v4507, 2147483648
        %v4509 = vmul.f32 %v4508, 1.442695
        %v4510 = vpow.pop %v4509
        %v4511 = vadd.f32 %v4510, 1.0
        %v4512 = vrcp.pop %v4511
        %v4513 = vmul.f32 1.0, %v4512
        %v4514 = vtanh.pop %v4507
        %v4516 = vrot.slane %v4421, 7
        %v4518 = vmul.f32 %v4513, %v4516
        %4520 = vrot.lane.b32.xlu0 %v4514, 64
        %v4521 = vpop.permute.xlu0 %4520
        %v4523 = vmul.f32 %v4513, %v4521
        %4525 = vrot.lane.b32.xlu0 %v4523, 32
        %v4526 = vpop.permute.xlu0 %4525
        %v4528 = vadd.f32 %v4518, %v4526
        %v4529 = vtanh.pop %v4528
        %4531 = vrot.lane.b32.xlu0 %v4529, 64
        %v4532 = vpop.permute.xlu0 %4531
        %v4534 = vmul.f32 %v4513, %v4532
        %v4536 = vrot.slane %v4534, 5
        %4537 = vrot.lane.b32.xlu0 %v4536, 32
        %v4538 = vpop.permute.xlu0 %4537
        %v4539 = vsel %vm624, %v4538, 0
        %4541 = vmatprep.subr.mxu0 0.0
        %4542 = vmatpush1.msra.mxu0 %v3899
        %4543 = vmatprep.subr.mxu0 0.0
        %4544 = vmatpush1.msra.mxu0 %v3900
        %4545 = vmatprep.subr.mxu0 0.0
        %4546 = vmatpush1.msra.mxu0 %v3901
        %4547 = vmatprep.subr.mxu0 0.0
        %4548 = vmatpush1.msra.mxu0 %v3902
        %4549 = vmatprep.subr.mxu0 0.0
        %4550 = vmatpush1.msra.mxu0 0.0
        %4551 = vmatprep.subr.mxu0 0.0
        %4552 = vmatpush1.msra.mxu0 0.0
        %4553 = vmatprep.subr.mxu0 0.0
        %4554 = vmatpush1.msra.mxu0 0.0
        %4555 = vmatprep.subr.mxu0 0.0
        %4556 = vmatpush1.msra.mxu0 0.0
        %4557 = vmatprep.subr.mxu0 0.0
        %4558 = vmatpush1.msra.mxu0 0.0
        %4559 = vmatprep.subr.mxu0 0.0
        %4560 = vmatpush1.msra.mxu0 0.0
        %4561 = vmatprep.subr.mxu0 0.0
        %4562 = vmatpush1.msra.mxu0 0.0
        %4563 = vmatprep.subr.mxu0 0.0
        %4564 = vmatpush1.msra.mxu0 0.0
        %4565 = vmatprep.subr.mxu0 0.0
        %4566 = vmatpush1.msra.mxu0 0.0
        %4567 = vmatprep.subr.mxu0 0.0
        %4568 = vmatpush1.msra.mxu0 0.0
        %4569 = vmatprep.subr.mxu0 0.0
        %4570 = vmatpush1.msra.mxu0 0.0
        %4571 = vmatprep.subr.mxu0 0.0
        %4572 = vmatpush1.msra.mxu0 0.0
        %4573 = vmatprep.subr.mxu0 0.0
        %4574 = vmatpush1.msra.mxu0 0.0
        %4575 = vmatprep.subr.mxu0 0.0
        %4576 = vmatpush1.msra.mxu0 0.0
        %4577 = vmatprep.subr.mxu0 0.0
        %4578 = vmatpush1.msra.mxu0 0.0
        %4579 = vmatprep.subr.mxu0 0.0
        %4580 = vmatpush1.msra.mxu0 0.0
        %4581 = vmatprep.subr.mxu0 0.0
        %4582 = vmatpush1.msra.mxu0 0.0
        %4583 = vmatprep.subr.mxu0 0.0
        %4584 = vmatpush1.msra.mxu0 0.0
        %4585 = vmatprep.subr.mxu0 0.0
        %4586 = vmatpush1.msra.mxu0 0.0
        %4587 = vmatprep.subr.mxu0 0.0
        %4588 = vmatpush1.msra.mxu0 0.0
        %4589 = vmatprep.subr.mxu0 0.0
        %4590 = vmatpush1.msra.mxu0 0.0
        %4591 = vmatprep.subr.mxu0 0.0
        %4592 = vmatpush1.msra.mxu0 0.0
        %4593 = vmatprep.subr.mxu0 0.0
        %4594 = vmatpush1.msra.mxu0 0.0
        %4595 = vmatprep.subr.mxu0 0.0
        %4596 = vmatpush1.msra.mxu0 0.0
        %4597 = vmatprep.subr.mxu0 0.0
        %4598 = vmatpush1.msra.mxu0 0.0
        %4599 = vmatprep.subr.mxu0 0.0
        %4600 = vmatpush1.msra.mxu0 0.0
        %4601 = vmatprep.subr.mxu0 0.0
        %4602 = vmatpush1.msra.mxu0 0.0
        %4603 = vmatprep.subr.mxu0 0.0
        %4604 = vmatpush1.msra.mxu0 0.0
        %4605 = vmatprep.mubr.f32.mxu0 0.0
        %4606 = vmatmul.mubr.f32.gmra.mrb[0].mxu0 %v4539
        %v4607 = vpop.f32.mrb[0].mxu0
        %v4608 = vadd.f32 0.0, %v4607
        %v4609 = vpop.f32.mrb[0].mxu0
        %4610 = vdwg.mxu0
        %v4612 = vrot.slane %v4608, 2
        %v4614 = vadd.f32 %v3896, %v4612
        %v4615 = vxor.u32 %v4614, 2147483648
        %v4616 = vmul.f32 %v4615, 1.442695
        %v4617 = vpow.pop %v4616
        %v4618 = vadd.f32 %v4617, 1.0
        %v4619 = vrcp.pop %v4618
        %v4620 = vmul.f32 1.0, %v4619
        %v4621 = vtanh.pop %v4614
        %v4623 = vrot.slane %v4528, 7
        %v4625 = vmul.f32 %v4620, %v4623
        %4627 = vrot.lane.b32.xlu0 %v4621, 64
        %v4628 = vpop.permute.xlu0 %4627
        %v4630 = vmul.f32 %v4620, %v4628
        %4632 = vrot.lane.b32.xlu0 %v4630, 32
        %v4633 = vpop.permute.xlu0 %4632
        %v4635 = vadd.f32 %v4625, %v4633
        %v4636 = vtanh.pop %v4635
        %4638 = vrot.lane.b32.xlu0 %v4636, 64
        %v4639 = vpop.permute.xlu0 %4638
        %v4641 = vmul.f32 %v4620, %v4639
        %v4643 = vrot.slane %v4641, 6
        %4644 = vrot.lane.b32.xlu0 %v4643, 32
        %v4645 = vpop.permute.xlu0 %4644
        %v4646 = vsel %vm624, %v4645, 0
        %4648 = vmatprep.subr.mxu0 0.0
        %4649 = vmatpush1.msra.mxu0 %v3899
        %4650 = vmatprep.subr.mxu0 0.0
        %4651 = vmatpush1.msra.mxu0 %v3900
        %4652 = vmatprep.subr.mxu0 0.0
        %4653 = vmatpush1.msra.mxu0 %v3901
        %4654 = vmatprep.subr.mxu0 0.0
        %4655 = vmatpush1.msra.mxu0 %v3902
        %4656 = vmatprep.subr.mxu0 0.0
        %4657 = vmatpush1.msra.mxu0 0.0
        %4658 = vmatprep.subr.mxu0 0.0
        %4659 = vmatpush1.msra.mxu0 0.0
        %4660 = vmatprep.subr.mxu0 0.0
        %4661 = vmatpush1.msra.mxu0 0.0
        %4662 = vmatprep.subr.mxu0 0.0
        %4663 = vmatpush1.msra.mxu0 0.0
        %4664 = vmatprep.subr.mxu0 0.0
        %4665 = vmatpush1.msra.mxu0 0.0
        %4666 = vmatprep.subr.mxu0 0.0
        %4667 = vmatpush1.msra.mxu0 0.0
        %4668 = vmatprep.subr.mxu0 0.0
        %4669 = vmatpush1.msra.mxu0 0.0
        %4670 = vmatprep.subr.mxu0 0.0
        %4671 = vmatpush1.msra.mxu0 0.0
        %4672 = vmatprep.subr.mxu0 0.0
        %4673 = vmatpush1.msra.mxu0 0.0
        %4674 = vmatprep.subr.mxu0 0.0
        %4675 = vmatpush1.msra.mxu0 0.0
        %4676 = vmatprep.subr.mxu0 0.0
        %4677 = vmatpush1.msra.mxu0 0.0
        %4678 = vmatprep.subr.mxu0 0.0
        %4679 = vmatpush1.msra.mxu0 0.0
        %4680 = vmatprep.subr.mxu0 0.0
        %4681 = vmatpush1.msra.mxu0 0.0
        %4682 = vmatprep.subr.mxu0 0.0
        %4683 = vmatpush1.msra.mxu0 0.0
        %4684 = vmatprep.subr.mxu0 0.0
        %4685 = vmatpush1.msra.mxu0 0.0
        %4686 = vmatprep.subr.mxu0 0.0
        %4687 = vmatpush1.msra.mxu0 0.0
        %4688 = vmatprep.subr.mxu0 0.0
        %4689 = vmatpush1.msra.mxu0 0.0
        %4690 = vmatprep.subr.mxu0 0.0
        %4691 = vmatpush1.msra.mxu0 0.0
        %4692 = vmatprep.subr.mxu0 0.0
        %4693 = vmatpush1.msra.mxu0 0.0
        %4694 = vmatprep.subr.mxu0 0.0
        %4695 = vmatpush1.msra.mxu0 0.0
        %4696 = vmatprep.subr.mxu0 0.0
        %4697 = vmatpush1.msra.mxu0 0.0
        %4698 = vmatprep.subr.mxu0 0.0
        %4699 = vmatpush1.msra.mxu0 0.0
        %4700 = vmatprep.subr.mxu0 0.0
        %4701 = vmatpush1.msra.mxu0 0.0
        %4702 = vmatprep.subr.mxu0 0.0
        %4703 = vmatpush1.msra.mxu0 0.0
        %4704 = vmatprep.subr.mxu0 0.0
        %4705 = vmatpush1.msra.mxu0 0.0
        %4706 = vmatprep.subr.mxu0 0.0
        %4707 = vmatpush1.msra.mxu0 0.0
        %4708 = vmatprep.subr.mxu0 0.0
        %4709 = vmatpush1.msra.mxu0 0.0
        %4710 = vmatprep.subr.mxu0 0.0
        %4711 = vmatpush1.msra.mxu0 0.0
        %4712 = vmatprep.mubr.f32.mxu0 0.0
        %4713 = vmatmul.mubr.f32.gmra.mrb[0].mxu0 %v4646
        %v4714 = vpop.f32.mrb[0].mxu0
        %v4715 = vadd.f32 0.0, %v4714
        %v4716 = vpop.f32.mrb[0].mxu0
        %4717 = vdwg.mxu0
        %v4719 = vrot.slane %v4715, 1
        %v4721 = vadd.f32 %v3896, %v4719
        %v4722 = vxor.u32 %v4721, 2147483648
        %v4723 = vmul.f32 %v4722, 1.442695
        %v4724 = vpow.pop %v4723
        %v4725 = vadd.f32 %v4724, 1.0
        %v4726 = vrcp.pop %v4725
        %v4727 = vmul.f32 1.0, %v4726
        %v4728 = vtanh.pop %v4721
        %v4730 = vrot.slane %v4635, 7
        %v4732 = vmul.f32 %v4727, %v4730
        %4734 = vrot.lane.b32.xlu0 %v4728, 64
        %v4735 = vpop.permute.xlu0 %4734
        %v4737 = vmul.f32 %v4727, %v4735
        %4739 = vrot.lane.b32.xlu0 %v4737, 32
        %v4740 = vpop.permute.xlu0 %4739
        %v4742 = vadd.f32 %v4732, %v4740
        %v4743 = vtanh.pop %v4742
        %4745 = vrot.lane.b32.xlu0 %v4743, 64
        %v4746 = vpop.permute.xlu0 %4745
        %v4748 = vmul.f32 %v4727, %v4746
        %v4749 = vld [vmem:[#allocation10] sm:$0xff]
        %v4750 = vld [vmem:[#allocation10 + $0x8] sm:$0xff]
        %v4751 = vld [vmem:[#allocation10 + $0x10] sm:$0xff]
        %v4752 = vld [vmem:[#allocation10 + $0x18] sm:$0xff]
        %v4754 = vrot.slane %v4748, 7
        %4755 = vrot.lane.b32.xlu0 %v4754, 32
        %v4756 = vpop.permute.xlu0 %4755
        %v4758 = vrot.slane %v540, 4
        %v4760 = vsel %vm624, %v4756, 0
        %4762 = vmatprep.subr.mxu0 0.0
        %4763 = vmatpush1.msra.mxu0 %v4749
        %4764 = vmatprep.subr.mxu0 0.0
        %4765 = vmatpush1.msra.mxu0 %v4750
        %4766 = vmatprep.subr.mxu0 0.0
        %4767 = vmatpush1.msra.mxu0 %v4751
        %4768 = vmatprep.subr.mxu0 0.0
        %4769 = vmatpush1.msra.mxu0 %v4752
        %4770 = vmatprep.subr.mxu0 0.0
        %4771 = vmatpush1.msra.mxu0 0.0
        %4772 = vmatprep.subr.mxu0 0.0
        %4773 = vmatpush1.msra.mxu0 0.0
        %4774 = vmatprep.subr.mxu0 0.0
        %4775 = vmatpush1.msra.mxu0 0.0
        %4776 = vmatprep.subr.mxu0 0.0
        %4777 = vmatpush1.msra.mxu0 0.0
        %4778 = vmatprep.subr.mxu0 0.0
        %4779 = vmatpush1.msra.mxu0 0.0
        %4780 = vmatprep.subr.mxu0 0.0
        %4781 = vmatpush1.msra.mxu0 0.0
        %4782 = vmatprep.subr.mxu0 0.0
        %4783 = vmatpush1.msra.mxu0 0.0
        %4784 = vmatprep.subr.mxu0 0.0
        %4785 = vmatpush1.msra.mxu0 0.0
        %4786 = vmatprep.subr.mxu0 0.0
        %4787 = vmatpush1.msra.mxu0 0.0
        %4788 = vmatprep.subr.mxu0 0.0
        %4789 = vmatpush1.msra.mxu0 0.0
        %4790 = vmatprep.subr.mxu0 0.0
        %4791 = vmatpush1.msra.mxu0 0.0
        %4792 = vmatprep.subr.mxu0 0.0
        %4793 = vmatpush1.msra.mxu0 0.0
        %4794 = vmatprep.subr.mxu0 0.0
        %4795 = vmatpush1.msra.mxu0 0.0
        %4796 = vmatprep.subr.mxu0 0.0
        %4797 = vmatpush1.msra.mxu0 0.0
        %4798 = vmatprep.subr.mxu0 0.0
        %4799 = vmatpush1.msra.mxu0 0.0
        %4800 = vmatprep.subr.mxu0 0.0
        %4801 = vmatpush1.msra.mxu0 0.0
        %4802 = vmatprep.subr.mxu0 0.0
        %4803 = vmatpush1.msra.mxu0 0.0
        %4804 = vmatprep.subr.mxu0 0.0
        %4805 = vmatpush1.msra.mxu0 0.0
        %4806 = vmatprep.subr.mxu0 0.0
        %4807 = vmatpush1.msra.mxu0 0.0
        %4808 = vmatprep.subr.mxu0 0.0
        %4809 = vmatpush1.msra.mxu0 0.0
        %4810 = vmatprep.subr.mxu0 0.0
        %4811 = vmatpush1.msra.mxu0 0.0
        %4812 = vmatprep.subr.mxu0 0.0
        %4813 = vmatpush1.msra.mxu0 0.0
        %4814 = vmatprep.subr.mxu0 0.0
        %4815 = vmatpush1.msra.mxu0 0.0
        %4816 = vmatprep.subr.mxu0 0.0
        %4817 = vmatpush1.msra.mxu0 0.0
        %4818 = vmatprep.subr.mxu0 0.0
        %4819 = vmatpush1.msra.mxu0 0.0
        %4820 = vmatprep.subr.mxu0 0.0
        %4821 = vmatpush1.msra.mxu0 0.0
        %4822 = vmatprep.subr.mxu0 0.0
        %4823 = vmatpush1.msra.mxu0 0.0
        %4824 = vmatprep.subr.mxu0 0.0
        %4825 = vmatpush1.msra.mxu0 0.0
        %4826 = vmatprep.mubr.f32.mxu0 0.0
        %4827 = vmatmul.mubr.f32.gmra.mrb[0].mxu0 %v4760
        %v4828 = vpop.f32.mrb[0].mxu0
        %v4829 = vadd.f32 %v4758, %v4828
        %v4830 = vpop.f32.mrb[0].mxu0
        %4831 = vdwg.mxu0
        %v4832 = vxor.u32 %v4829, 2147483648
        %v4833 = vmul.f32 %v4832, 1.442695
        %v4834 = vpow.pop %v4833
        %v4835 = vadd.f32 %v4834, 1.0
        %v4836 = vrcp.pop %v4835
        %v4837 = vmul.f32 1.0, %v4836
        %v4838 = vtanh.pop %v4829
        %v4840 = vrot.slane %v4742, 7
        %v4842 = vmul.f32 %v4837, %v4840
        %4844 = vrot.lane.b32.xlu0 %v4838, 64
        %v4845 = vpop.permute.xlu0 %4844
        %v4847 = vmul.f32 %v4837, %v4845
        %4849 = vrot.lane.b32.xlu0 %v4847, 32
        %v4850 = vpop.permute.xlu0 %4849
        %v4852 = vadd.f32 %v4842, %v4850
        %v4853 = vtanh.pop %v4852
        %4855 = vrot.lane.b32.xlu0 %v4853, 64
        %v4856 = vpop.permute.xlu0 %4855
        %v4858 = vmul.f32 %v4837, %v4856
        %4860 = vrot.lane.b32.xlu0 %v4858, 32
        %v4861 = vpop.permute.xlu0 %4860
        %v4862 = vsel %vm624, %v4861, 0
        %4864 = vmatprep.subr.mxu0 0.0
        %4865 = vmatpush1.msra.mxu0 %v4749
        %4866 = vmatprep.subr.mxu0 0.0
        %4867 = vmatpush1.msra.mxu0 %v4750
        %4868 = vmatprep.subr.mxu0 0.0
        %4869 = vmatpush1.msra.mxu0 %v4751
        %4870 = vmatprep.subr.mxu0 0.0
        %4871 = vmatpush1.msra.mxu0 %v4752
        %4872 = vmatprep.subr.mxu0 0.0
        %4873 = vmatpush1.msra.mxu0 0.0
        %4874 = vmatprep.subr.mxu0 0.0
        %4875 = vmatpush1.msra.mxu0 0.0
        %4876 = vmatprep.subr.mxu0 0.0
        %4877 = vmatpush1.msra.mxu0 0.0
        %4878 = vmatprep.subr.mxu0 0.0
        %4879 = vmatpush1.msra.mxu0 0.0
        %4880 = vmatprep.subr.mxu0 0.0
        %4881 = vmatpush1.msra.mxu0 0.0
        %4882 = vmatprep.subr.mxu0 0.0
        %4883 = vmatpush1.msra.mxu0 0.0
        %4884 = vmatprep.subr.mxu0 0.0
        %4885 = vmatpush1.msra.mxu0 0.0
        %4886 = vmatprep.subr.mxu0 0.0
        %4887 = vmatpush1.msra.mxu0 0.0
        %4888 = vmatprep.subr.mxu0 0.0
        %4889 = vmatpush1.msra.mxu0 0.0
        %4890 = vmatprep.subr.mxu0 0.0
        %4891 = vmatpush1.msra.mxu0 0.0
        %4892 = vmatprep.subr.mxu0 0.0
        %4893 = vmatpush1.msra.mxu0 0.0
        %4894 = vmatprep.subr.mxu0 0.0
        %4895 = vmatpush1.msra.mxu0 0.0
        %4896 = vmatprep.subr.mxu0 0.0
        %4897 = vmatpush1.msra.mxu0 0.0
        %4898 = vmatprep.subr.mxu0 0.0
        %4899 = vmatpush1.msra.mxu0 0.0
        %4900 = vmatprep.subr.mxu0 0.0
        %4901 = vmatpush1.msra.mxu0 0.0
        %4902 = vmatprep.subr.mxu0 0.0
        %4903 = vmatpush1.msra.mxu0 0.0
        %4904 = vmatprep.subr.mxu0 0.0
        %4905 = vmatpush1.msra.mxu0 0.0
        %4906 = vmatprep.subr.mxu0 0.0
        %4907 = vmatpush1.msra.mxu0 0.0
        %4908 = vmatprep.subr.mxu0 0.0
        %4909 = vmatpush1.msra.mxu0 0.0
        %4910 = vmatprep.subr.mxu0 0.0
        %4911 = vmatpush1.msra.mxu0 0.0
        %4912 = vmatprep.subr.mxu0 0.0
        %4913 = vmatpush1.msra.mxu0 0.0
        %4914 = vmatprep.subr.mxu0 0.0
        %4915 = vmatpush1.msra.mxu0 0.0
        %4916 = vmatprep.subr.mxu0 0.0
        %4917 = vmatpush1.msra.mxu0 0.0
        %4918 = vmatprep.subr.mxu0 0.0
        %4919 = vmatpush1.msra.mxu0 0.0
        %4920 = vmatprep.subr.mxu0 0.0
        %4921 = vmatpush1.msra.mxu0 0.0
        %4922 = vmatprep.subr.mxu0 0.0
        %4923 = vmatpush1.msra.mxu0 0.0
        %4924 = vmatprep.subr.mxu0 0.0
        %4925 = vmatpush1.msra.mxu0 0.0
        %4926 = vmatprep.subr.mxu0 0.0
        %4927 = vmatpush1.msra.mxu0 0.0
        %4928 = vmatprep.mubr.f32.mxu0 0.0
        %4929 = vmatmul.mubr.f32.gmra.mrb[0].mxu0 %v4862
        %v4930 = vpop.f32.mrb[0].mxu0
        %v4931 = vadd.f32 %v4758, %v4930
        %v4932 = vpop.f32.mrb[0].mxu0
        %4933 = vdwg.mxu0
        %v4934 = vxor.u32 %v4931, 2147483648
        %v4935 = vmul.f32 %v4934, 1.442695
        %v4936 = vpow.pop %v4935
        %v4937 = vadd.f32 %v4936, 1.0
        %v4938 = vrcp.pop %v4937
        %v4939 = vmul.f32 1.0, %v4938
        %v4940 = vtanh.pop %v4931
        %v4941 = vmul.f32 %v4939, %v4852
        %4943 = vrot.lane.b32.xlu0 %v4940, 64
        %v4944 = vpop.permute.xlu0 %4943
        %v4946 = vmul.f32 %v4939, %v4944
        %4948 = vrot.lane.b32.xlu0 %v4946, 32
        %v4949 = vpop.permute.xlu0 %4948
        %v4951 = vadd.f32 %v4941, %v4949
        %v4952 = vtanh.pop %v4951
        %4954 = vrot.lane.b32.xlu0 %v4952, 64
        %v4955 = vpop.permute.xlu0 %4954
        %v4957 = vmul.f32 %v4939, %v4955
        %4959 = vrot.lane.b32.xlu0 %v4957, 32
        %v4960 = vpop.permute.xlu0 %4959
        %v4961 = vsel %vm624, %v4960, 0
        %4963 = vmatprep.subr.mxu0 0.0
        %4964 = vmatpush1.msra.mxu0 %v4749
        %4965 = vmatprep.subr.mxu0 0.0
        %4966 = vmatpush1.msra.mxu0 %v4750
        %4967 = vmatprep.subr.mxu0 0.0
        %4968 = vmatpush1.msra.mxu0 %v4751
        %4969 = vmatprep.subr.mxu0 0.0
        %4970 = vmatpush1.msra.mxu0 %v4752
        %4971 = vmatprep.subr.mxu0 0.0
        %4972 = vmatpush1.msra.mxu0 0.0
        %4973 = vmatprep.subr.mxu0 0.0
        %4974 = vmatpush1.msra.mxu0 0.0
        %4975 = vmatprep.subr.mxu0 0.0
        %4976 = vmatpush1.msra.mxu0 0.0
        %4977 = vmatprep.subr.mxu0 0.0
        %4978 = vmatpush1.msra.mxu0 0.0
        %4979 = vmatprep.subr.mxu0 0.0
        %4980 = vmatpush1.msra.mxu0 0.0
        %4981 = vmatprep.subr.mxu0 0.0
        %4982 = vmatpush1.msra.mxu0 0.0
        %4983 = vmatprep.subr.mxu0 0.0
        %4984 = vmatpush1.msra.mxu0 0.0
        %4985 = vmatprep.subr.mxu0 0.0
        %4986 = vmatpush1.msra.mxu0 0.0
        %4987 = vmatprep.subr.mxu0 0.0
        %4988 = vmatpush1.msra.mxu0 0.0
        %4989 = vmatprep.subr.mxu0 0.0
        %4990 = vmatpush1.msra.mxu0 0.0
        %4991 = vmatprep.subr.mxu0 0.0
        %4992 = vmatpush1.msra.mxu0 0.0
        %4993 = vmatprep.subr.mxu0 0.0
        %4994 = vmatpush1.msra.mxu0 0.0
        %4995 = vmatprep.subr.mxu0 0.0
        %4996 = vmatpush1.msra.mxu0 0.0
        %4997 = vmatprep.subr.mxu0 0.0
        %4998 = vmatpush1.msra.mxu0 0.0
        %4999 = vmatprep.subr.mxu0 0.0
        %5000 = vmatpush1.msra.mxu0 0.0
        %5001 = vmatprep.subr.mxu0 0.0
        %5002 = vmatpush1.msra.mxu0 0.0
        %5003 = vmatprep.subr.mxu0 0.0
        %5004 = vmatpush1.msra.mxu0 0.0
        %5005 = vmatprep.subr.mxu0 0.0
        %5006 = vmatpush1.msra.mxu0 0.0
        %5007 = vmatprep.subr.mxu0 0.0
        %5008 = vmatpush1.msra.mxu0 0.0
        %5009 = vmatprep.subr.mxu0 0.0
        %5010 = vmatpush1.msra.mxu0 0.0
        %5011 = vmatprep.subr.mxu0 0.0
        %5012 = vmatpush1.msra.mxu0 0.0
        %5013 = vmatprep.subr.mxu0 0.0
        %5014 = vmatpush1.msra.mxu0 0.0
        %5015 = vmatprep.subr.mxu0 0.0
        %5016 = vmatpush1.msra.mxu0 0.0
        %5017 = vmatprep.subr.mxu0 0.0
        %5018 = vmatpush1.msra.mxu0 0.0
        %5019 = vmatprep.subr.mxu0 0.0
        %5020 = vmatpush1.msra.mxu0 0.0
        %5021 = vmatprep.subr.mxu0 0.0
        %5022 = vmatpush1.msra.mxu0 0.0
        %5023 = vmatprep.subr.mxu0 0.0
        %5024 = vmatpush1.msra.mxu0 0.0
        %5025 = vmatprep.subr.mxu0 0.0
        %5026 = vmatpush1.msra.mxu0 0.0
        %5027 = vmatprep.mubr.f32.mxu0 0.0
        %5028 = vmatmul.mubr.f32.gmra.mrb[0].mxu0 %v4961
        %v5029 = vpop.f32.mrb[0].mxu0
        %v5030 = vadd.f32 %v4758, %v5029
        %v5031 = vpop.f32.mrb[0].mxu0
        %5032 = vdwg.mxu0
        %v5033 = vxor.u32 %v5030, 2147483648
        %v5034 = vmul.f32 %v5033, 1.442695
        %v5035 = vpow.pop %v5034
        %v5036 = vadd.f32 %v5035, 1.0
        %v5037 = vrcp.pop %v5036
        %v5038 = vmul.f32 1.0, %v5037
        %v5039 = vtanh.pop %v5030
        %v5040 = vmul.f32 %v5038, %v4951
        %5042 = vrot.lane.b32.xlu0 %v5039, 64
        %v5043 = vpop.permute.xlu0 %5042
        %v5045 = vmul.f32 %v5038, %v5043
        %5047 = vrot.lane.b32.xlu0 %v5045, 32
        %v5048 = vpop.permute.xlu0 %5047
        %v5050 = vadd.f32 %v5040, %v5048
        %v5051 = vtanh.pop %v5050
        %5053 = vrot.lane.b32.xlu0 %v5051, 64
        %v5054 = vpop.permute.xlu0 %5053
        %v5056 = vmul.f32 %v5038, %v5054
        %5058 = vrot.lane.b32.xlu0 %v5056, 32
        %v5059 = vpop.permute.xlu0 %5058
        %v5060 = vsel %vm624, %v5059, 0
        %5062 = vmatprep.subr.mxu0 0.0
        %5063 = vmatpush1.msra.mxu0 %v4749
        %5064 = vmatprep.subr.mxu0 0.0
        %5065 = vmatpush1.msra.mxu0 %v4750
        %5066 = vmatprep.subr.mxu0 0.0
        %5067 = vmatpush1.msra.mxu0 %v4751
        %5068 = vmatprep.subr.mxu0 0.0
        %5069 = vmatpush1.msra.mxu0 %v4752
        %5070 = vmatprep.subr.mxu0 0.0
        %5071 = vmatpush1.msra.mxu0 0.0
        %5072 = vmatprep.subr.mxu0 0.0
        %5073 = vmatpush1.msra.mxu0 0.0
        %5074 = vmatprep.subr.mxu0 0.0
        %5075 = vmatpush1.msra.mxu0 0.0
        %5076 = vmatprep.subr.mxu0 0.0
        %5077 = vmatpush1.msra.mxu0 0.0
        %5078 = vmatprep.subr.mxu0 0.0
        %5079 = vmatpush1.msra.mxu0 0.0
        %5080 = vmatprep.subr.mxu0 0.0
        %5081 = vmatpush1.msra.mxu0 0.0
        %5082 = vmatprep.subr.mxu0 0.0
        %5083 = vmatpush1.msra.mxu0 0.0
        %5084 = vmatprep.subr.mxu0 0.0
        %5085 = vmatpush1.msra.mxu0 0.0
        %5086 = vmatprep.subr.mxu0 0.0
        %5087 = vmatpush1.msra.mxu0 0.0
        %5088 = vmatprep.subr.mxu0 0.0
        %5089 = vmatpush1.msra.mxu0 0.0
        %5090 = vmatprep.subr.mxu0 0.0
        %5091 = vmatpush1.msra.mxu0 0.0
        %5092 = vmatprep.subr.mxu0 0.0
        %5093 = vmatpush1.msra.mxu0 0.0
        %5094 = vmatprep.subr.mxu0 0.0
        %5095 = vmatpush1.msra.mxu0 0.0
        %5096 = vmatprep.subr.mxu0 0.0
        %5097 = vmatpush1.msra.mxu0 0.0
        %5098 = vmatprep.subr.mxu0 0.0
        %5099 = vmatpush1.msra.mxu0 0.0
        %5100 = vmatprep.subr.mxu0 0.0
        %5101 = vmatpush1.msra.mxu0 0.0
        %5102 = vmatprep.subr.mxu0 0.0
        %5103 = vmatpush1.msra.mxu0 0.0
        %5104 = vmatprep.subr.mxu0 0.0
        %5105 = vmatpush1.msra.mxu0 0.0
        %5106 = vmatprep.subr.mxu0 0.0
        %5107 = vmatpush1.msra.mxu0 0.0
        %5108 = vmatprep.subr.mxu0 0.0
        %5109 = vmatpush1.msra.mxu0 0.0
        %5110 = vmatprep.subr.mxu0 0.0
        %5111 = vmatpush1.msra.mxu0 0.0
        %5112 = vmatprep.subr.mxu0 0.0
        %5113 = vmatpush1.msra.mxu0 0.0
        %5114 = vmatprep.subr.mxu0 0.0
        %5115 = vmatpush1.msra.mxu0 0.0
        %5116 = vmatprep.subr.mxu0 0.0
        %5117 = vmatpush1.msra.mxu0 0.0
        %5118 = vmatprep.subr.mxu0 0.0
        %5119 = vmatpush1.msra.mxu0 0.0
        %5120 = vmatprep.subr.mxu0 0.0
        %5121 = vmatpush1.msra.mxu0 0.0
        %5122 = vmatprep.subr.mxu0 0.0
        %5123 = vmatpush1.msra.mxu0 0.0
        %5124 = vmatprep.subr.mxu0 0.0
        %5125 = vmatpush1.msra.mxu0 0.0
        %5126 = vmatprep.mubr.f32.mxu0 0.0
        %5127 = vmatmul.mubr.f32.gmra.mrb[0].mxu0 %v5060
        %v5128 = vpop.f32.mrb[0].mxu0
        %v5129 = vadd.f32 %v4758, %v5128
        %v5130 = vpop.f32.mrb[0].mxu0
        %5131 = vdwg.mxu0
        %v5132 = vxor.u32 %v5129, 2147483648
        %v5133 = vmul.f32 %v5132, 1.442695
        %v5134 = vpow.pop %v5133
        %v5135 = vadd.f32 %v5134, 1.0
        %v5136 = vrcp.pop %v5135
        %v5137 = vmul.f32 1.0, %v5136
        %v5138 = vtanh.pop %v5129
        %v5139 = vmul.f32 %v5137, %v5050
        %5141 = vrot.lane.b32.xlu0 %v5138, 64
        %v5142 = vpop.permute.xlu0 %5141
        %v5144 = vmul.f32 %v5137, %v5142
        %5146 = vrot.lane.b32.xlu0 %v5144, 32
        %v5147 = vpop.permute.xlu0 %5146
        %v5149 = vadd.f32 %v5139, %v5147
        %v5150 = vtanh.pop %v5149
        %5152 = vrot.lane.b32.xlu0 %v5150, 64
        %v5153 = vpop.permute.xlu0 %5152
        %v5155 = vmul.f32 %v5137, %v5153
        %v5156 = vrot.slane %v4957, 7
        %v5158 = vrot.slane %v5056, 6
        %v5161 = vrot.slane %v5155, 5
        %vm5163 = vcmask 1040384
        %v5164 = vsel %vm5163, %v4858, %v5156
        %vm5165 = vcmask 1041408
        %v5166 = vsel %vm5165, %v5164, %v5158
        %vm5167 = vcmask 1042432
        %v5168 = vsel %vm5167, %v5166, %v5161
        %v5169 = vlaneseq
        %v5170 = vshrl.u32 %v5169, 7
        %v5171 = vsub.s32 5, %v5170
        %v5172 = vrot.slane %v540, %v5171
        %5174 = vrot.lane.b32.xlu0 %v5172, 96
        %v5175 = vpop.permute.xlu0 %5174
        %v5177 = vmul.f32 %v5168, %v5175
        %5179 = vrot.lane.b32.xlu0 %v5177, 32
        %v5180 = vpop.permute.xlu0 %5179
        %vm5182 = vcmask 257024
        %v5183 = vsel %vm5182, %v5180, 0.0
        %5184 = vadd.xlane.f32.xlu0 %v5183
        %v5185 = vpop.xlane.xlu0 %5184
        %v5186 = vlaneseq
        %v5187 = vshrl.u32 %v5186, 7
        %v5188 = vsub.s32 6, %v5187
        %v5189 = vrot.slane %v540, %v5188
        %v5190 = vadd.f32 %v5185, %v5189
        %v5191 = vld [vmem:[%s536] sm:$0xf]
        %v5192 = vmax.f32 %v5190, 0.0
        %v5193 = vmul.f32 %v5190, %v5191
        %v5194 = vsub.f32 %v5192, %v5193
        %v5195 = vand.u32 2147483647, %v5190
        %v5196 = vsub.f32 0.0, %v5195
        %v5197 = vmul.f32 %v5196, 1.442695
        %v5198 = vpow.pop %v5197
        %v5199 = vadd.f32 %v5198, 1.0
        %v5200 = vlog2.pop %v5199
        %v5201 = vmul.f32 %v5200, 0.6931472
        %v5202 = vadd.f32 %v5194, %v5201
        %vm5203 = vcmask 3072
        %v5204 = vsel %vm5203, %v5202, 0.0
        %5205 = vadd.xlane.f32.xlu0 %v5204
        %v5206 = vpop.xlane.xlu0 %5205
        %v5207 = vrot.slane %v5206, 4
        %v5208 = vadd.f32 %v5206, %v5207
        %v5209 = vrot.slane %v5208, 2
        %v5210 = vadd.f32 %v5208, %v5209
        %v5211 = vrot.slane %v5210, 1
        %v5212 = vadd.f32 %v5210, %v5211
        %s5213 = vtos %v5212
        %v5214 = vrcp.pop 4.0
        %s5215 = vtos %v5214
        %s5216 = smul.f32 %s5213, %s5215
        %v5217 = vstv %s5216
        %vm5218 = vcmask 0
        %5219 = vst.msk [vmem:[%s539] sm:$0x1] %vm5218, %v5217
        %v5220 = vsel %vm5167, %v5166, 0.0
        %5222 = vrot.lane.b32.xlu0 %v5220, 32
        %v5223 = vpop.permute.xlu0 %5222
        %5224 = vrot.lane.b32.xlu0 0.0, 32
        %v5225 = vpop.permute.xlu0 %5224
        %v5226 = vsel %vm624, %v5223, 0
        %v5228 = vsel %vm624, %v5225, 0
        %5230 = vmatprep.subr.mxu0 0.0
        %5231 = vmatpush1.xpose.msra.mxu0 %v5226
        %5232 = vmatprep.subr.mxu0 0.0
        %5233 = vmatpush1.xpose.msra.mxu0 %v5228
        %5234 = vmatprep.subr.mxu0 0.0
        %5235 = vmatpush1.xpose.msra.mxu0 %v5228
        %5236 = vmatprep.subr.mxu0 0.0
        %5237 = vmatpush1.xpose.msra.mxu0 %v5228
        %5238 = vmatprep.subr.mxu0 0.0
        %5239 = vmatpush1.xpose.msra.mxu0 %v5228
        %5240 = vmatprep.subr.mxu0 0.0
        %5241 = vmatpush1.xpose.msra.mxu0 %v5228
        %5242 = vmatprep.subr.mxu0 0.0
        %5243 = vmatpush1.xpose.msra.mxu0 %v5228
        %5244 = vmatprep.subr.mxu0 0.0
        %5245 = vmatpush1.xpose.msra.mxu0 %v5228
        %5246 = vmatprep.subr.mxu0 0.0
        %5247 = vmatpush1.xpose.msra.mxu0 %v5228
        %5248 = vmatprep.subr.mxu0 0.0
        %5249 = vmatpush1.xpose.msra.mxu0 %v5228
        %5250 = vmatprep.subr.mxu0 0.0
        %5251 = vmatpush1.xpose.msra.mxu0 %v5228
        %5252 = vmatprep.subr.mxu0 0.0
        %5253 = vmatpush1.xpose.msra.mxu0 %v5228
        %5254 = vmatprep.subr.mxu0 0.0
        %5255 = vmatpush1.xpose.msra.mxu0 %v5228
        %5256 = vmatprep.subr.mxu0 0.0
        %5257 = vmatpush1.xpose.msra.mxu0 %v5228
        %5258 = vmatprep.subr.mxu0 0.0
        %5259 = vmatpush1.xpose.msra.mxu0 %v5228
        %5260 = vmatprep.subr.mxu0 0.0
        %5261 = vmatpush1.xpose.msra.mxu0 %v5228
        %5262 = vmatprep.subr.mxu0 0.0
        %5263 = vmatpush1.xpose.msra.mxu0 0.0
        %5264 = vmatprep.subr.mxu0 0.0
        %5265 = vmatpush1.xpose.msra.mxu0 0.0
        %5266 = vmatprep.subr.mxu0 0.0
        %5267 = vmatpush1.xpose.msra.mxu0 0.0
        %5268 = vmatprep.subr.mxu0 0.0
        %5269 = vmatpush1.xpose.msra.mxu0 0.0
        %5270 = vmatprep.subr.mxu0 0.0
        %5271 = vmatpush1.xpose.msra.mxu0 0.0
        %5272 = vmatprep.subr.mxu0 0.0
        %5273 = vmatpush1.xpose.msra.mxu0 0.0
        %5274 = vmatprep.subr.mxu0 0.0
        %5275 = vmatpush1.xpose.msra.mxu0 0.0
        %5276 = vmatprep.subr.mxu0 0.0
        %5277 = vmatpush1.xpose.msra.mxu0 0.0
        %5278 = vmatprep.subr.mxu0 0.0
        %5279 = vmatpush1.xpose.msra.mxu0 0.0
        %5280 = vmatprep.subr.mxu0 0.0
        %5281 = vmatpush1.xpose.msra.mxu0 0.0
        %5282 = vmatprep.subr.mxu0 0.0
        %5283 = vmatpush1.xpose.msra.mxu0 0.0
        %5284 = vmatprep.subr.mxu0 0.0
        %5285 = vmatpush1.xpose.msra.mxu0 0.0
        %5286 = vmatprep.subr.mxu0 0.0
        %5287 = vmatpush1.xpose.msra.mxu0 0.0
        %5288 = vmatprep.subr.mxu0 0.0
        %5289 = vmatpush1.xpose.msra.mxu0 0.0
        %5290 = vmatprep.subr.mxu0 0.0
        %5291 = vmatpush1.xpose.msra.mxu0 0.0
        %5292 = vmatprep.subr.mxu0 0.0
        %5293 = vmatpush1.xpose.msra.mxu0 0.0
        %5294 = vmatprep.mubr.f32.mxu0 0.0
        %5295 = vmatmul.mubr.f32.gmra.mrb[0].mxu0 %v3827
        %v5296 = vpop.f32.mrb[0].mxu0
        %v5297 = vadd.f32 0.0, %v5296
        %v5298 = vpop.f32.mrb[0].mxu0
        %5299 = vdwg.mxu0
        %5300 = vst [vmem:[%s527] sm:$0xff] %v5297
        %s5301 = sand.u32 %s303, 1
        %s5302 = scalar_lea.sflag [#allocation4], %s5301
        %s5303 = sand.u32 %s303, 1
        %s5304 = smul.addr %s5303, 8
        %s5305 = scalar_lea.vmem [#allocation11], %s5304
        %p5306 = scmp.lt.s32.totalorder %s33, 1
        %s5307 = scalar_select %p5306, %s33, 1
        %s5308 = scalar_lea.vmem %s13, %s5307
        // Predicated region
        $region89: #{tpu_custom_call.1} parent=67 // pred_check
          %p5309 = pneg %p313
        $region90: #{tpu_custom_call.1} parent=67 // pred_check_branch
          %5311 = sbr.rel (%p5309) target = $region92
        $region91: #{tpu_custom_call.1} parent=67 // pred_region
          %s5313 = ssub.s32 128, 128
          %5314 = vsyncadd %s5302, %s5313
          %s5315 = smul.addr %s33, 128
          %s5316 = scalar_lea.hbm %s12, %s5315
          %s5318 = sshll.u32 %s5305, 4
          %s5319 = int_to_ptr.vmem [resolvable:$true] %s5318
          %5321 = dma.vmem_to_hbm [thread:$0]  %s5319, 128, %s5316, %s5302
        $region92: #{tpu_custom_call.1} parent=67 // pred_fallthru
          _
        // Predicated region
        $region93: #{tpu_custom_call.1} parent=67 // pred_check
          %p5322 = pneg %p339
        $region94: #{tpu_custom_call.1} parent=67 // pred_check_branch
          %5324 = sbr.rel (%p5322) target = $region96
        $region95: #{tpu_custom_call.1} parent=67 // pred_region
          _
        $region96: #{tpu_custom_call.1} parent=67 // pred_fallthru
          _
      $region68: #{tpu_custom_call.1} parent=5 // pred_fallthru
        _
      %p5325 = scmp.le.s32.totalorder 2, %s28
      // Predicated region
      $region97: #{tpu_custom_call.1} parent=5 // pred_check
        %p5326 = pneg %p5325
      $region98: #{tpu_custom_call.1} parent=5 // pred_check_branch
        %5328 = sbr.rel (%p5326) target = $region100
      $region99: #{tpu_custom_call.1} parent=5 // pred_region
        %s5329 = ssub.s32 %s28, 2
        // Predicated region
        $region101: #{tpu_custom_call.1} parent=99 // pred_check
          %p5330 = pneg %p319
        $region102: #{tpu_custom_call.1} parent=99 // pred_check_branch
          %5332 = sbr.rel (%p5330) target = $region104
        $region103: #{tpu_custom_call.1} parent=99 // pred_region
          %s5333 = sand.u32 %s304, 1
          %s5334 = scalar_lea.sflag [#allocation4], %s5333
          %s5335 = sand.u32 %s304, 1
          %s5336 = smul.addr %s5335, 8
          %s5337 = scalar_lea.vmem [#allocation11], %s5336
          %5338 = dma.done %s5334, 128
        $region104: #{tpu_custom_call.1} parent=99 // pred_fallthru
          _
        // Predicated region
        $region105: #{tpu_custom_call.1} parent=99 // pred_check
          %p5339 = pneg %p345
        $region106: #{tpu_custom_call.1} parent=99 // pred_check_branch
          %5341 = sbr.rel (%p5339) target = $region108
        $region107: #{tpu_custom_call.1} parent=99 // pred_region
          %p5342 = scmp.lt.s32.totalorder %s34, 1
          %s5343 = scalar_select %p5342, %s34, 1
          %s5344 = scalar_lea.vmem %s13, %s5343
        $region108: #{tpu_custom_call.1} parent=99 // pred_fallthru
          _
      $region100: #{tpu_custom_call.1} parent=5 // pred_fallthru
        _
    $region6: #{tpu_custom_call.1} parent=1 // loop_footer
      %s32 = sadd.s32 1, %s28
    $region7: #{tpu_custom_call.1} parent=1 // loop_footer_branch
      %27 = sbr.rel target = $region3
    $region8: #{tpu_custom_call.1} parent=1 // loop_exit
      _
    %5345 = vsyncpa [#allocation3], 1
    %s5346 = scalar_lea.sflag [#allocation3], 1
    %5347 = vsyncpa %s5346, 1
    %5348 = vsyncpa [#allocation6], 1
    %5349 = vsyncpa [#allocation9], 1
    %5350 = vsyncpa [#allocation4], 1
    %s5351 = scalar_lea.sflag [#allocation4], 1
    %5352 = vsyncpa %s5351, 1

</llo_original>
